<compile_context>
chip_gen: v7x
topology: tpu7x:2x2x1
jax: 0.10.0
libtpu: 0.0.40
codegen_flags: <defaults>
</compile_context>

<pallas_src>
import functools

import jax
import jax.numpy as jnp
import numpy as np
from jax.experimental import pallas as pl
from jax.experimental.pallas import tpu as pltpu

LANES = 128


# ----------------------------- fused Pallas kernel ----------------------------- #

def _netto_kernel(xt_ref, w1k_ref, b1_ref, b2_ref, bf1_ref, bf2_ref, bf3_ref,
                  w2m_hbm, wf1_hbm, wf2_hbm, wf3_hbm,
                  out_ref,
                  w2m_buf, wf1_buf, wf2_buf, wf3_buf, sem):
    """Whole Netto forward on VMEM-resident data (single grid step).

    xt_ref : (28*B8, 32)   input rows (h, b) [b minor], lanes = input col w (28 valid).
    w1k_ref: (5, 32, 256)  conv1 per-kh banded weights, cols t1*128 + x*8 + c.
    w2m_*  : (6, 128, 256) conv2 merged-phase weights, rows x*8 + ci, cols (s2, t2, x2, oc).
    wf1_*  : (4, 64, 128)  fc1 per-y2 weights (NCHW flatten permutation folded in).
    wf2/3_*: (128, 128)    fc2/fc3 pre-transposed, zero-padded weights.
    out_ref: (B8, 128)     lane-dense logits (valid cols 0..9, sliced by the wrapper).
    """
    B8 = out_ref.shape[0]
    bf16 = jnp.bfloat16
    dot = functools.partial(jnp.dot, preferred_element_type=jnp.float32)

    # Kick off the conv2/fc weight DMAs right away so they overlap conv1 compute.
    cp_w2 = pltpu.make_async_copy(w2m_hbm, w2m_buf, sem.at[0]); cp_w2.start()
    cp_f1 = pltpu.make_async_copy(wf1_hbm, wf1_buf, sem.at[1]); cp_f1.start()
    cp_f2 = pltpu.make_async_copy(wf2_hbm, wf2_buf, sem.at[2]); cp_f2.start()
    cp_f3 = pltpu.make_async_copy(wf3_hbm, wf3_buf, sem.at[3]); cp_f3.start()

    # ---- conv1: 5 per-kh banded GEMMs on contiguous 8-aligned row slices of xt ----------
    # Output rows (u, b): row = u*B8 + b, u in [0,24); cols t1*128 + x*8 + c, so
    # conv1[b, c, u, 2x+t1] = h1[u*B8 + b, t1*128 + x*8 + c].
    xt = xt_ref[...]                                             # (28*B8, 32) f32
    acc1 = None
    for kh in range(5):
        a = xt[kh * B8:(kh + 24) * B8, :].astype(bf16)           # rows h = u + kh
        t = dot(a, w1k_ref[kh])                                  # (24*B8, 256) f32 acc
        acc1 = t if acc1 is None else acc1 + t
    h1 = acc1 + b1_ref[...]

    # pool1 (2x2) + ReLU: row phase s1 = tile-pair max, col phase t1 = 128-lane split.
    h1r = h1.reshape(12, 2 * B8, 256)                            # (y, s1*B8 + b, col)
    pu = jnp.maximum(h1r[:, :B8, :], h1r[:, B8:, :]).reshape(12 * B8, 256)
    p1 = jnp.maximum(jnp.maximum(pu[:, :128], pu[:, 128:]), 0.0)  # (12*B8, 128), rows (y, b)

    # ---- conv2: 6 merged-phase GEMMs over row offsets d = s2 + kh, pool2 + ReLU fused ----
    cp_w2.wait()
    p1_4 = p1.reshape(6, 2 * B8, 128)                            # (i, rho*B8 + b, x*8 + ci)
    acc2 = None
    for d in range(6):
        q, r = divmod(d, 2)                                      # p1 row y = 2*y2 + d
        lhs = p1_4[q:q + 4, r * B8:(r + 1) * B8, :].reshape(4 * B8, 128).astype(bf16)
        t = dot(lhs, w2m_buf[d])                                 # (4*B8, 256) f32 acc
        acc2 = t if acc2 is None else acc2 + t
    acc2 = acc2 + b2_ref[...]                                    # rows (y2, b), cols (s2,t2,x2,oc)
    m = jnp.maximum(jnp.maximum(acc2[:, :128], acc2[:, 128:]), 0.0)   # max over s2, ReLU
    p2 = jnp.maximum(m[:, :64], m[:, 64:128])                    # max over t2 -> (4*B8, 64)

    # ---- fc1: 4 per-y2 accumulating GEMMs (flatten permutation folded into wf1) ----------
    cp_f1.wait()
    acc3 = None
    for y2 in range(4):
        lhs = p2[y2 * B8:(y2 + 1) * B8, :].astype(bf16)          # (B8, 64), rows b
        t = dot(lhs, wf1_buf[y2])                                # (B8, 128) f32 acc
        acc3 = t if acc3 is None else acc3 + t
    h = jnp.maximum(acc3 + bf1_ref[...], 0.0)                    # 120 valid lanes

    # ---- fc2 (+ReLU) and fc3, lane-dense 128-wide GEMMs ----------------------------------
    cp_f2.wait()
    h = jnp.maximum(dot(h.astype(bf16), wf2_buf[...]) + bf2_ref[...], 0.0)   # 84 valid
    cp_f3.wait()
    out_ref[...] = dot(h.astype(bf16), wf3_buf[...]) + bf3_ref[...]          # 10 valid


# ------------------------------- parameter prep -------------------------------- #

def prepare_params(params):
    """One-time re-pack of the PyTorch-shaped parameters into bf16 GEMM-friendly form."""
    cw1 = np.asarray(params["conv1_w"], np.float32)   # (6, 1, 5, 5)
    cb1 = np.asarray(params["conv1_b"], np.float32)   # (6,)
    cw2 = np.asarray(params["conv2_w"], np.float32)   # (16, 6, 5, 5)
    cb2 = np.asarray(params["conv2_b"], np.float32)   # (16,)
    fw1 = np.asarray(params["fc1_w"], np.float32)     # (120, 256)
    fb1 = np.asarray(params["fc1_b"], np.float32)
    fw2 = np.asarray(params["fc2_w"], np.float32)     # (84, 120)
    fb2 = np.asarray(params["fc2_b"], np.float32)
    fw3 = np.asarray(params["fc3_w"], np.float32)     # (10, 84)
    fb3 = np.asarray(params["fc3_b"], np.float32)

    # conv1 per-kh banded weights: (5, 32, 256); row = input col w (28 valid),
    # col = t1*128 + x*8 + c (output col v = 2x + t1, channel c: 6 valid of 8).
    w1k = np.zeros((5, 32, 256), np.float32)
    b1r = np.zeros((1, 256), np.float32)
    for t1 in range(2):
        for xx in range(12):
            v = 2 * xx + t1
            for c in range(6):
                col = t1 * 128 + xx * 8 + c
                b1r[0, col] = cb1[c]
                for kh in range(5):
                    for kw in range(5):
                        w1k[kh, v + kw, col] = cw1[c, 0, kh, kw]

    # conv2 merged-phase weights: (6, 128, 256); row = x*8 + ci (96 valid),
    # col = s2*128 + t2*64 + x2*16 + oc; uses kh = d - s2 when 0 <= kh < 5.
    w2m = np.zeros((6, 128, 256), np.float32)
    b2r = np.zeros((1, 256), np.float32)
    for s2 in range(2):
        for t2 in range(2):
            for x2 in range(4):
                v2 = 2 * x2 + t2
                for oc in range(16):
                    col = s2 * 128 + t2 * 64 + x2 * 16 + oc
                    b2r[0, col] = cb2[oc]
                    for d in range(6):
                        kh = d - s2
                        if 0 <= kh < 5:
                            for kw in range(5):
                                for ci in range(6):
                                    w2m[d, (v2 + kw) * 8 + ci, col] = cw2[oc, ci, kh, kw]

    # fc1 per-y2 blocks: rows (x2, oc) [64], cols o (120 valid of 128); folds the PyTorch
    # NCHW flatten permutation f = oc*16 + y2*4 + x2 of .view(-1, 256).
    wf1 = np.zeros((4, 64, 128), np.float32)
    for y2 in range(4):
        for x2 in range(4):
            for oc in range(16):
                wf1[y2, x2 * 16 + oc, :120] = fw1[:, oc * 16 + y2 * 4 + x2]
    bf1 = np.zeros((1, 128), np.float32); bf1[0, :120] = fb1

    # fc2/fc3: pre-transposed, zero-padded to (128, 128)
    wf2 = np.zeros((128, 128), np.float32); wf2[:120, :84] = fw2.T
    bf2 = np.zeros((1, 128), np.float32);   bf2[0, :84] = fb2
    wf3 = np.zeros((128, 128), np.float32); wf3[:84, :10] = fw3.T
    bf3 = np.zeros((1, 128), np.float32);   bf3[0, :10] = fb3

    return {
        "w1k": jnp.asarray(w1k, jnp.bfloat16),
        "b1r": jnp.asarray(b1r),
        "w2m": jnp.asarray(w2m, jnp.bfloat16),
        "b2r": jnp.asarray(b2r),
        "wf1": jnp.asarray(wf1, jnp.bfloat16),
        "bf1": jnp.asarray(bf1),
        "wf2": jnp.asarray(wf2, jnp.bfloat16),
        "bf2": jnp.asarray(bf2),
        "wf3": jnp.asarray(wf3, jnp.bfloat16),
        "bf3": jnp.asarray(bf3),
    }


# --------------------------------- the model ----------------------------------- #

def init_params(key):
    """Deterministic synthetic parameters matching Netto.__init__ shapes."""
    ks = jax.random.split(key, 10)
    u = lambda k, shape, fan_in: jax.random.uniform(
        k, shape, jnp.float32, -1.0, 1.0) / jnp.sqrt(jnp.float32(fan_in))
    return {
        "conv1_w": u(ks[0], (6, 1, 5, 5), 1 * 5 * 5),
        "conv1_b": u(ks[1], (6,), 1 * 5 * 5),
        "conv2_w": u(ks[2], (16, 6, 5, 5), 6 * 5 * 5),
        "conv2_b": u(ks[3], (16,), 6 * 5 * 5),
        "fc1_w": u(ks[4], (120, 256), 256),
        "fc1_b": u(ks[5], (120,), 256),
        "fc2_w": u(ks[6], (84, 120), 120),
        "fc2_b": u(ks[7], (84,), 120),
        "fc3_w": u(ks[8], (10, 84), 84),
        "fc3_b": u(ks[9], (10,), 84),
    }


def netto_forward(prep, x):
    """x: (B, 1, 28, 28) float32 NCHW -> logits (B, 10)."""
    B = x.shape[0]
    B8 = ((B + 7) // 8) * 8                              # pad batch to a full sublane tile
    xs = x.reshape(B, 28, 28)
    if B8 != B:
        xs = jnp.pad(xs, ((0, B8 - B), (0, 0), (0, 0)))
    # Only per-call XLA glue: transpose to (h, b, w) row order + pad lanes 28 -> 32 (~25 KB).
    xt = jnp.pad(jnp.transpose(xs, (1, 0, 2)), ((0, 0), (0, 0), (0, 4))).reshape(28 * B8, 32)

    vmem = pl.BlockSpec(memory_space=pltpu.MemorySpace.VMEM)
    hbm = pl.BlockSpec(memory_space=pl.ANY)              # stays in HBM, DMA'd manually
    out = pl.pallas_call(
        _netto_kernel,
        out_shape=jax.ShapeDtypeStruct((B8, LANES), jnp.float32),
        in_specs=[vmem] * 7 + [hbm] * 4,
        out_specs=vmem,
        scratch_shapes=[
            pltpu.VMEM((6, 128, 256), jnp.bfloat16),     # conv2 merged weights
            pltpu.VMEM((4, 64, 128), jnp.bfloat16),      # fc1 weights
            pltpu.VMEM((128, 128), jnp.bfloat16),        # fc2 weights
            pltpu.VMEM((128, 128), jnp.bfloat16),        # fc3 weights
            pltpu.SemaphoreType.DMA((4,)),
        ],
    )(xt, prep["w1k"], prep["b1r"], prep["b2r"], prep["bf1"], prep["bf2"], prep["bf3"],
      prep["w2m"], prep["wf1"], prep["wf2"], prep["wf3"])
    return out[:B, :10]                                  # drop batch/lane padding


def netto_reference(params, x):
    """Pure-JAX/XLA reference of the PyTorch module (for in-script validation)."""
    dn = ("NCHW", "OIHW", "NCHW")
    y = jax.lax.conv_general_dilated(x, params["conv1_w"], (1, 1), "VALID",
                                     dimension_numbers=dn)
    y = jnp.maximum(y + params["conv1_b"][None, :, None, None], 0.0)
    y = jax.lax.reduce_window(y, -jnp.inf, jax.lax.max, (1, 1, 2, 2), (1, 1, 2, 2), "VALID")
    y = jax.lax.conv_general_dilated(y, params["conv2_w"], (1, 1), "VALID",
                                     dimension_numbers=dn)
    y = jnp.maximum(y + params["conv2_b"][None, :, None, None], 0.0)
    y = jax.lax.reduce_window(y, -jnp.inf, jax.lax.max, (1, 1, 2, 2), (1, 1, 2, 2), "VALID")
    y = y.reshape(y.shape[0], -1)
    y = jnp.maximum(y @ params["fc1_w"].T + params["fc1_b"], 0.0)
    y = jnp.maximum(y @ params["fc2_w"].T + params["fc2_b"], 0.0)
    return y @ params["fc3_w"].T + params["fc3_b"]


if __name__ == "__main__":
    key = jax.random.PRNGKey(0)
    pkey, xkey = jax.random.split(key)
    params = init_params(pkey)
    prep = prepare_params(params)           # one-time bf16 weight re-pack (not per call)
    # Input shape implied by fc1 = Linear(16*4*4, 120): 28x28 single-channel images.
    x = jax.random.normal(xkey, (2, 1, 28, 28), dtype=jnp.float32)

    fwd = jax.jit(netto_forward)
    logits = fwd(prep, x)
    jax.block_until_ready(logits)
    assert logits.shape == (2, 10), logits.shape

    # Validate the fused bf16-weight kernel against a plain f32 XLA implementation.
    ref = jax.jit(netto_reference)(params, x)
    np.testing.assert_allclose(np.asarray(logits), np.asarray(ref), rtol=3e-2, atol=3e-2)

    print("KERNEL_OK")
</pallas_src>

<mosaic_0001>
module attributes {stable_mosaic.version = 11 : i64} {
  func.func @_netto_kernel(%arg0: memref<224x32xf32, #tpu.memory_space<vmem>>, %arg1: memref<5x32x256xbf16, #tpu.memory_space<vmem>>, %arg2: memref<1x256xf32, #tpu.memory_space<vmem>>, %arg3: memref<1x256xf32, #tpu.memory_space<vmem>>, %arg4: memref<1x128xf32, #tpu.memory_space<vmem>>, %arg5: memref<1x128xf32, #tpu.memory_space<vmem>>, %arg6: memref<1x128xf32, #tpu.memory_space<vmem>>, %arg7: memref<6x128x256xbf16, #tpu.memory_space<any>>, %arg8: memref<4x64x128xbf16, #tpu.memory_space<any>>, %arg9: memref<128x128xbf16, #tpu.memory_space<any>>, %arg10: memref<128x128xbf16, #tpu.memory_space<any>>, %arg11: memref<8x128xf32, #tpu.memory_space<vmem>>, %arg12: memref<6x128x256xbf16, #tpu.memory_space<vmem>>, %arg13: memref<4x64x128xbf16, #tpu.memory_space<vmem>>, %arg14: memref<128x128xbf16, #tpu.memory_space<vmem>>, %arg15: memref<128x128xbf16, #tpu.memory_space<vmem>>, %arg16: memref<4x!tpu.dma_semaphore, #tpu.memory_space<semaphore_mem>>) attributes {dimension_semantics = [], scalar_prefetch = 0 : i64, scratch_operands = 5 : i64, tpu.core_type = #tpu.core_type<tc>} {
    %c0_i32 = arith.constant 0 : i32
    %0 = tpu.memref_slice %arg16[%c0_i32] : memref<4x!tpu.dma_semaphore, #tpu.memory_space<semaphore_mem>> -> memref<1x!tpu.dma_semaphore, #tpu.memory_space<semaphore_mem>>
    %1 = tpu.memref_squeeze %0 : memref<1x!tpu.dma_semaphore, #tpu.memory_space<semaphore_mem>> -> memref<!tpu.dma_semaphore, #tpu.memory_space<semaphore_mem>>
    tpu.enqueue_dma source(%arg7 : memref<6x128x256xbf16, #tpu.memory_space<any>>) target(%arg12 : memref<6x128x256xbf16, #tpu.memory_space<vmem>>) target_semaphore(%1 : memref<!tpu.dma_semaphore, #tpu.memory_space<semaphore_mem>>)
    %c1_i32 = arith.constant 1 : i32
    %2 = tpu.memref_slice %arg16[%c1_i32] : memref<4x!tpu.dma_semaphore, #tpu.memory_space<semaphore_mem>> -> memref<1x!tpu.dma_semaphore, #tpu.memory_space<semaphore_mem>>
    %3 = tpu.memref_squeeze %2 : memref<1x!tpu.dma_semaphore, #tpu.memory_space<semaphore_mem>> -> memref<!tpu.dma_semaphore, #tpu.memory_space<semaphore_mem>>
    tpu.enqueue_dma source(%arg8 : memref<4x64x128xbf16, #tpu.memory_space<any>>) target(%arg13 : memref<4x64x128xbf16, #tpu.memory_space<vmem>>) target_semaphore(%3 : memref<!tpu.dma_semaphore, #tpu.memory_space<semaphore_mem>>)
    %c2_i32 = arith.constant 2 : i32
    %4 = tpu.memref_slice %arg16[%c2_i32] : memref<4x!tpu.dma_semaphore, #tpu.memory_space<semaphore_mem>> -> memref<1x!tpu.dma_semaphore, #tpu.memory_space<semaphore_mem>>
    %5 = tpu.memref_squeeze %4 : memref<1x!tpu.dma_semaphore, #tpu.memory_space<semaphore_mem>> -> memref<!tpu.dma_semaphore, #tpu.memory_space<semaphore_mem>>
    tpu.enqueue_dma source(%arg9 : memref<128x128xbf16, #tpu.memory_space<any>>) target(%arg14 : memref<128x128xbf16, #tpu.memory_space<vmem>>) target_semaphore(%5 : memref<!tpu.dma_semaphore, #tpu.memory_space<semaphore_mem>>)
    %c3_i32 = arith.constant 3 : i32
    %6 = tpu.memref_slice %arg16[%c3_i32] : memref<4x!tpu.dma_semaphore, #tpu.memory_space<semaphore_mem>> -> memref<1x!tpu.dma_semaphore, #tpu.memory_space<semaphore_mem>>
    %7 = tpu.memref_squeeze %6 : memref<1x!tpu.dma_semaphore, #tpu.memory_space<semaphore_mem>> -> memref<!tpu.dma_semaphore, #tpu.memory_space<semaphore_mem>>
    tpu.enqueue_dma source(%arg10 : memref<128x128xbf16, #tpu.memory_space<any>>) target(%arg15 : memref<128x128xbf16, #tpu.memory_space<vmem>>) target_semaphore(%7 : memref<!tpu.dma_semaphore, #tpu.memory_space<semaphore_mem>>)
    %c0 = arith.constant 0 : index
    %c0_0 = arith.constant 0 : index
    %8 = vector.load %arg0[%c0, %c0_0] : memref<224x32xf32, #tpu.memory_space<vmem>>, vector<224x32xf32>
    %9 = vector.extract_strided_slice %8 {offsets = [0, 0], sizes = [192, 32], strides = [1, 1]} : vector<224x32xf32> to vector<192x32xf32>
    %10 = arith.truncf %9 : vector<192x32xf32> to vector<192x32xbf16>
    %c0_1 = arith.constant 0 : index
    %c0_2 = arith.constant 0 : index
    %c0_3 = arith.constant 0 : index
    %11 = vector.load %arg1[%c0_1, %c0_2, %c0_3] : memref<5x32x256xbf16, #tpu.memory_space<vmem>>, vector<1x32x256xbf16>
    %12 = vector.shape_cast %11 : vector<1x32x256xbf16> to vector<32x256xbf16>
    %cst = arith.constant dense<0.000000e+00> : vector<192x256xf32>
    %13 = tpu.matmul %10, %12, %cst {dimension_numbers = #tpu.dot_dimension_numbers<[1], [0], [0], [1], [0, 0, 1, 1], [], []>} : vector<192x32xbf16>, vector<32x256xbf16>, vector<192x256xf32> -> vector<192x256xf32>
    %14 = vector.extract_strided_slice %8 {offsets = [8, 0], sizes = [192, 32], strides = [1, 1]} : vector<224x32xf32> to vector<192x32xf32>
    %15 = arith.truncf %14 : vector<192x32xf32> to vector<192x32xbf16>
    %c1 = arith.constant 1 : index
    %c0_4 = arith.constant 0 : index
    %c0_5 = arith.constant 0 : index
    %16 = vector.load %arg1[%c1, %c0_4, %c0_5] : memref<5x32x256xbf16, #tpu.memory_space<vmem>>, vector<1x32x256xbf16>
    %17 = vector.shape_cast %16 : vector<1x32x256xbf16> to vector<32x256xbf16>
    %cst_6 = arith.constant dense<0.000000e+00> : vector<192x256xf32>
    %18 = tpu.matmul %15, %17, %cst_6 {dimension_numbers = #tpu.dot_dimension_numbers<[1], [0], [0], [1], [0, 0, 1, 1], [], []>} : vector<192x32xbf16>, vector<32x256xbf16>, vector<192x256xf32> -> vector<192x256xf32>
    %19 = arith.addf %13, %18 : vector<192x256xf32>
    %20 = vector.extract_strided_slice %8 {offsets = [16, 0], sizes = [192, 32], strides = [1, 1]} : vector<224x32xf32> to vector<192x32xf32>
    %21 = arith.truncf %20 : vector<192x32xf32> to vector<192x32xbf16>
    %c2 = arith.constant 2 : index
    %c0_7 = arith.constant 0 : index
    %c0_8 = arith.constant 0 : index
    %22 = vector.load %arg1[%c2, %c0_7, %c0_8] : memref<5x32x256xbf16, #tpu.memory_space<vmem>>, vector<1x32x256xbf16>
    %23 = vector.shape_cast %22 : vector<1x32x256xbf16> to vector<32x256xbf16>
    %cst_9 = arith.constant dense<0.000000e+00> : vector<192x256xf32>
    %24 = tpu.matmul %21, %23, %cst_9 {dimension_numbers = #tpu.dot_dimension_numbers<[1], [0], [0], [1], [0, 0, 1, 1], [], []>} : vector<192x32xbf16>, vector<32x256xbf16>, vector<192x256xf32> -> vector<192x256xf32>
    %25 = arith.addf %19, %24 : vector<192x256xf32>
    %26 = vector.extract_strided_slice %8 {offsets = [24, 0], sizes = [192, 32], strides = [1, 1]} : vector<224x32xf32> to vector<192x32xf32>
    %27 = arith.truncf %26 : vector<192x32xf32> to vector<192x32xbf16>
    %c3 = arith.constant 3 : index
    %c0_10 = arith.constant 0 : index
    %c0_11 = arith.constant 0 : index
    %28 = vector.load %arg1[%c3, %c0_10, %c0_11] : memref<5x32x256xbf16, #tpu.memory_space<vmem>>, vector<1x32x256xbf16>
    %29 = vector.shape_cast %28 : vector<1x32x256xbf16> to vector<32x256xbf16>
    %cst_12 = arith.constant dense<0.000000e+00> : vector<192x256xf32>
    %30 = tpu.matmul %27, %29, %cst_12 {dimension_numbers = #tpu.dot_dimension_numbers<[1], [0], [0], [1], [0, 0, 1, 1], [], []>} : vector<192x32xbf16>, vector<32x256xbf16>, vector<192x256xf32> -> vector<192x256xf32>
    %31 = arith.addf %25, %30 : vector<192x256xf32>
    %32 = vector.extract_strided_slice %8 {offsets = [32, 0], sizes = [192, 32], strides = [1, 1]} : vector<224x32xf32> to vector<192x32xf32>
    %33 = arith.truncf %32 : vector<192x32xf32> to vector<192x32xbf16>
    %c4 = arith.constant 4 : index
    %c0_13 = arith.constant 0 : index
    %c0_14 = arith.constant 0 : index
    %34 = vector.load %arg1[%c4, %c0_13, %c0_14] : memref<5x32x256xbf16, #tpu.memory_space<vmem>>, vector<1x32x256xbf16>
    %35 = vector.shape_cast %34 : vector<1x32x256xbf16> to vector<32x256xbf16>
    %cst_15 = arith.constant dense<0.000000e+00> : vector<192x256xf32>
    %36 = tpu.matmul %33, %35, %cst_15 {dimension_numbers = #tpu.dot_dimension_numbers<[1], [0], [0], [1], [0, 0, 1, 1], [], []>} : vector<192x32xbf16>, vector<32x256xbf16>, vector<192x256xf32> -> vector<192x256xf32>
    %37 = arith.addf %31, %36 : vector<192x256xf32>
    %c0_16 = arith.constant 0 : index
    %c0_17 = arith.constant 0 : index
    %38 = vector.load %arg2[%c0_16, %c0_17] : memref<1x256xf32, #tpu.memory_space<vmem>>, vector<1x256xf32>
    %39 = vector.broadcast %38 : vector<1x256xf32> to vector<192x256xf32>
    %40 = arith.addf %37, %39 : vector<192x256xf32>
    %41 = vector.shape_cast %40 : vector<192x256xf32> to vector<12x16x256xf32>
    %42 = vector.extract_strided_slice %41 {offsets = [0, 0, 0], sizes = [12, 8, 256], strides = [1, 1, 1]} : vector<12x16x256xf32> to vector<12x8x256xf32>
    %43 = vector.extract_strided_slice %41 {offsets = [0, 8, 0], sizes = [12, 8, 256], strides = [1, 1, 1]} : vector<12x16x256xf32> to vector<12x8x256xf32>
    %44 = arith.maximumf %42, %43 : vector<12x8x256xf32>
    %45 = vector.shape_cast %44 : vector<12x8x256xf32> to vector<96x256xf32>
    %46 = vector.extract_strided_slice %45 {offsets = [0, 0], sizes = [96, 128], strides = [1, 1]} : vector<96x256xf32> to vector<96x128xf32>
    %47 = vector.extract_strided_slice %45 {offsets = [0, 128], sizes = [96, 128], strides = [1, 1]} : vector<96x256xf32> to vector<96x128xf32>
    %48 = arith.maximumf %46, %47 : vector<96x128xf32>
    %cst_18 = arith.constant 0.000000e+00 : f32
    %49 = vector.broadcast %cst_18 : f32 to vector<96x128xf32>
    %50 = arith.maximumf %48, %49 : vector<96x128xf32>
    %c0_i32_19 = arith.constant 0 : i32
    %51 = tpu.memref_slice %arg16[%c0_i32_19] : memref<4x!tpu.dma_semaphore, #tpu.memory_space<semaphore_mem>> -> memref<1x!tpu.dma_semaphore, #tpu.memory_space<semaphore_mem>>
    %52 = tpu.memref_squeeze %51 : memref<1x!tpu.dma_semaphore, #tpu.memory_space<semaphore_mem>> -> memref<!tpu.dma_semaphore, #tpu.memory_space<semaphore_mem>>
    tpu.wait_dma2 semaphore(%52 : memref<!tpu.dma_semaphore, #tpu.memory_space<semaphore_mem>>) src(%arg7 : memref<6x128x256xbf16, #tpu.memory_space<any>>) dst(%arg12 : memref<6x128x256xbf16, #tpu.memory_space<vmem>>)
    %53 = vector.shape_cast %50 : vector<96x128xf32> to vector<6x16x128xf32>
    %54 = vector.extract_strided_slice %53 {offsets = [0, 0, 0], sizes = [4, 8, 128], strides = [1, 1, 1]} : vector<6x16x128xf32> to vector<4x8x128xf32>
    %55 = vector.shape_cast %54 : vector<4x8x128xf32> to vector<32x128xf32>
    %56 = arith.truncf %55 : vector<32x128xf32> to vector<32x128xbf16>
    %c0_20 = arith.constant 0 : index
    %c0_21 = arith.constant 0 : index
    %c0_22 = arith.constant 0 : index
    %57 = vector.load %arg12[%c0_20, %c0_21, %c0_22] : memref<6x128x256xbf16, #tpu.memory_space<vmem>>, vector<1x128x256xbf16>
    %58 = vector.shape_cast %57 : vector<1x128x256xbf16> to vector<128x256xbf16>
    %cst_23 = arith.constant dense<0.000000e+00> : vector<32x256xf32>
    %59 = tpu.matmul %56, %58, %cst_23 {dimension_numbers = #tpu.dot_dimension_numbers<[1], [0], [0], [1], [0, 0, 1, 1], [], []>} : vector<32x128xbf16>, vector<128x256xbf16>, vector<32x256xf32> -> vector<32x256xf32>
    %60 = vector.extract_strided_slice %53 {offsets = [0, 8, 0], sizes = [4, 8, 128], strides = [1, 1, 1]} : vector<6x16x128xf32> to vector<4x8x128xf32>
    %61 = vector.shape_cast %60 : vector<4x8x128xf32> to vector<32x128xf32>
    %62 = arith.truncf %61 : vector<32x128xf32> to vector<32x128xbf16>
    %c1_24 = arith.constant 1 : index
    %c0_25 = arith.constant 0 : index
    %c0_26 = arith.constant 0 : index
    %63 = vector.load %arg12[%c1_24, %c0_25, %c0_26] : memref<6x128x256xbf16, #tpu.memory_space<vmem>>, vector<1x128x256xbf16>
    %64 = vector.shape_cast %63 : vector<1x128x256xbf16> to vector<128x256xbf16>
    %cst_27 = arith.constant dense<0.000000e+00> : vector<32x256xf32>
    %65 = tpu.matmul %62, %64, %cst_27 {dimension_numbers = #tpu.dot_dimension_numbers<[1], [0], [0], [1], [0, 0, 1, 1], [], []>} : vector<32x128xbf16>, vector<128x256xbf16>, vector<32x256xf32> -> vector<32x256xf32>
    %66 = arith.addf %59, %65 : vector<32x256xf32>
    %67 = vector.extract_strided_slice %53 {offsets = [1, 0, 0], sizes = [4, 8, 128], strides = [1, 1, 1]} : vector<6x16x128xf32> to vector<4x8x128xf32>
    %68 = vector.shape_cast %67 : vector<4x8x128xf32> to vector<32x128xf32>
    %69 = arith.truncf %68 : vector<32x128xf32> to vector<32x128xbf16>
    %c2_28 = arith.constant 2 : index
    %c0_29 = arith.constant 0 : index
    %c0_30 = arith.constant 0 : index
    %70 = vector.load %arg12[%c2_28, %c0_29, %c0_30] : memref<6x128x256xbf16, #tpu.memory_space<vmem>>, vector<1x128x256xbf16>
    %71 = vector.shape_cast %70 : vector<1x128x256xbf16> to vector<128x256xbf16>
    %cst_31 = arith.constant dense<0.000000e+00> : vector<32x256xf32>
    %72 = tpu.matmul %69, %71, %cst_31 {dimension_numbers = #tpu.dot_dimension_numbers<[1], [0], [0], [1], [0, 0, 1, 1], [], []>} : vector<32x128xbf16>, vector<128x256xbf16>, vector<32x256xf32> -> vector<32x256xf32>
    %73 = arith.addf %66, %72 : vector<32x256xf32>
    %74 = vector.extract_strided_slice %53 {offsets = [1, 8, 0], sizes = [4, 8, 128], strides = [1, 1, 1]} : vector<6x16x128xf32> to vector<4x8x128xf32>
    %75 = vector.shape_cast %74 : vector<4x8x128xf32> to vector<32x128xf32>
    %76 = arith.truncf %75 : vector<32x128xf32> to vector<32x128xbf16>
    %c3_32 = arith.constant 3 : index
    %c0_33 = arith.constant 0 : index
    %c0_34 = arith.constant 0 : index
    %77 = vector.load %arg12[%c3_32, %c0_33, %c0_34] : memref<6x128x256xbf16, #tpu.memory_space<vmem>>, vector<1x128x256xbf16>
    %78 = vector.shape_cast %77 : vector<1x128x256xbf16> to vector<128x256xbf16>
    %cst_35 = arith.constant dense<0.000000e+00> : vector<32x256xf32>
    %79 = tpu.matmul %76, %78, %cst_35 {dimension_numbers = #tpu.dot_dimension_numbers<[1], [0], [0], [1], [0, 0, 1, 1], [], []>} : vector<32x128xbf16>, vector<128x256xbf16>, vector<32x256xf32> -> vector<32x256xf32>
    %80 = arith.addf %73, %79 : vector<32x256xf32>
    %81 = vector.extract_strided_slice %53 {offsets = [2, 0, 0], sizes = [4, 8, 128], strides = [1, 1, 1]} : vector<6x16x128xf32> to vector<4x8x128xf32>
    %82 = vector.shape_cast %81 : vector<4x8x128xf32> to vector<32x128xf32>
    %83 = arith.truncf %82 : vector<32x128xf32> to vector<32x128xbf16>
    %c4_36 = arith.constant 4 : index
    %c0_37 = arith.constant 0 : index
    %c0_38 = arith.constant 0 : index
    %84 = vector.load %arg12[%c4_36, %c0_37, %c0_38] : memref<6x128x256xbf16, #tpu.memory_space<vmem>>, vector<1x128x256xbf16>
    %85 = vector.shape_cast %84 : vector<1x128x256xbf16> to vector<128x256xbf16>
    %cst_39 = arith.constant dense<0.000000e+00> : vector<32x256xf32>
    %86 = tpu.matmul %83, %85, %cst_39 {dimension_numbers = #tpu.dot_dimension_numbers<[1], [0], [0], [1], [0, 0, 1, 1], [], []>} : vector<32x128xbf16>, vector<128x256xbf16>, vector<32x256xf32> -> vector<32x256xf32>
    %87 = arith.addf %80, %86 : vector<32x256xf32>
    %88 = vector.extract_strided_slice %53 {offsets = [2, 8, 0], sizes = [4, 8, 128], strides = [1, 1, 1]} : vector<6x16x128xf32> to vector<4x8x128xf32>
    %89 = vector.shape_cast %88 : vector<4x8x128xf32> to vector<32x128xf32>
    %90 = arith.truncf %89 : vector<32x128xf32> to vector<32x128xbf16>
    %c5 = arith.constant 5 : index
    %c0_40 = arith.constant 0 : index
    %c0_41 = arith.constant 0 : index
    %91 = vector.load %arg12[%c5, %c0_40, %c0_41] : memref<6x128x256xbf16, #tpu.memory_space<vmem>>, vector<1x128x256xbf16>
    %92 = vector.shape_cast %91 : vector<1x128x256xbf16> to vector<128x256xbf16>
    %cst_42 = arith.constant dense<0.000000e+00> : vector<32x256xf32>
    %93 = tpu.matmul %90, %92, %cst_42 {dimension_numbers = #tpu.dot_dimension_numbers<[1], [0], [0], [1], [0, 0, 1, 1], [], []>} : vector<32x128xbf16>, vector<128x256xbf16>, vector<32x256xf32> -> vector<32x256xf32>
    %94 = arith.addf %87, %93 : vector<32x256xf32>
    %c0_43 = arith.constant 0 : index
    %c0_44 = arith.constant 0 : index
    %95 = vector.load %arg3[%c0_43, %c0_44] : memref<1x256xf32, #tpu.memory_space<vmem>>, vector<1x256xf32>
    %96 = vector.broadcast %95 : vector<1x256xf32> to vector<32x256xf32>
    %97 = arith.addf %94, %96 : vector<32x256xf32>
    %98 = vector.extract_strided_slice %97 {offsets = [0, 0], sizes = [32, 128], strides = [1, 1]} : vector<32x256xf32> to vector<32x128xf32>
    %99 = vector.extract_strided_slice %97 {offsets = [0, 128], sizes = [32, 128], strides = [1, 1]} : vector<32x256xf32> to vector<32x128xf32>
    %100 = arith.maximumf %98, %99 : vector<32x128xf32>
    %cst_45 = arith.constant 0.000000e+00 : f32
    %101 = vector.broadcast %cst_45 : f32 to vector<32x128xf32>
    %102 = arith.maximumf %100, %101 : vector<32x128xf32>
    %103 = vector.extract_strided_slice %102 {offsets = [0, 0], sizes = [32, 64], strides = [1, 1]} : vector<32x128xf32> to vector<32x64xf32>
    %104 = vector.extract_strided_slice %102 {offsets = [0, 64], sizes = [32, 64], strides = [1, 1]} : vector<32x128xf32> to vector<32x64xf32>
    %105 = arith.maximumf %103, %104 : vector<32x64xf32>
    %c1_i32_46 = arith.constant 1 : i32
    %106 = tpu.memref_slice %arg16[%c1_i32_46] : memref<4x!tpu.dma_semaphore, #tpu.memory_space<semaphore_mem>> -> memref<1x!tpu.dma_semaphore, #tpu.memory_space<semaphore_mem>>
    %107 = tpu.memref_squeeze %106 : memref<1x!tpu.dma_semaphore, #tpu.memory_space<semaphore_mem>> -> memref<!tpu.dma_semaphore, #tpu.memory_space<semaphore_mem>>
    tpu.wait_dma2 semaphore(%107 : memref<!tpu.dma_semaphore, #tpu.memory_space<semaphore_mem>>) src(%arg8 : memref<4x64x128xbf16, #tpu.memory_space<any>>) dst(%arg13 : memref<4x64x128xbf16, #tpu.memory_space<vmem>>)
    %108 = vector.extract_strided_slice %105 {offsets = [0, 0], sizes = [8, 64], strides = [1, 1]} : vector<32x64xf32> to vector<8x64xf32>
    %109 = arith.truncf %108 : vector<8x64xf32> to vector<8x64xbf16>
    %c0_47 = arith.constant 0 : index
    %c0_48 = arith.constant 0 : index
    %c0_49 = arith.constant 0 : index
    %110 = vector.load %arg13[%c0_47, %c0_48, %c0_49] : memref<4x64x128xbf16, #tpu.memory_space<vmem>>, vector<1x64x128xbf16>
    %111 = vector.shape_cast %110 : vector<1x64x128xbf16> to vector<64x128xbf16>
    %cst_50 = arith.constant dense<0.000000e+00> : vector<8x128xf32>
    %112 = tpu.matmul %109, %111, %cst_50 {dimension_numbers = #tpu.dot_dimension_numbers<[1], [0], [0], [1], [0, 0, 1, 1], [], []>} : vector<8x64xbf16>, vector<64x128xbf16>, vector<8x128xf32> -> vector<8x128xf32>
    %113 = vector.extract_strided_slice %105 {offsets = [8, 0], sizes = [8, 64], strides = [1, 1]} : vector<32x64xf32> to vector<8x64xf32>
    %114 = arith.truncf %113 : vector<8x64xf32> to vector<8x64xbf16>
    %c1_51 = arith.constant 1 : index
    %c0_52 = arith.constant 0 : index
    %c0_53 = arith.constant 0 : index
    %115 = vector.load %arg13[%c1_51, %c0_52, %c0_53] : memref<4x64x128xbf16, #tpu.memory_space<vmem>>, vector<1x64x128xbf16>
    %116 = vector.shape_cast %115 : vector<1x64x128xbf16> to vector<64x128xbf16>
    %cst_54 = arith.constant dense<0.000000e+00> : vector<8x128xf32>
    %117 = tpu.matmul %114, %116, %cst_54 {dimension_numbers = #tpu.dot_dimension_numbers<[1], [0], [0], [1], [0, 0, 1, 1], [], []>} : vector<8x64xbf16>, vector<64x128xbf16>, vector<8x128xf32> -> vector<8x128xf32>
    %118 = arith.addf %112, %117 : vector<8x128xf32>
    %119 = vector.extract_strided_slice %105 {offsets = [16, 0], sizes = [8, 64], strides = [1, 1]} : vector<32x64xf32> to vector<8x64xf32>
    %120 = arith.truncf %119 : vector<8x64xf32> to vector<8x64xbf16>
    %c2_55 = arith.constant 2 : index
    %c0_56 = arith.constant 0 : index
    %c0_57 = arith.constant 0 : index
    %121 = vector.load %arg13[%c2_55, %c0_56, %c0_57] : memref<4x64x128xbf16, #tpu.memory_space<vmem>>, vector<1x64x128xbf16>
    %122 = vector.shape_cast %121 : vector<1x64x128xbf16> to vector<64x128xbf16>
    %cst_58 = arith.constant dense<0.000000e+00> : vector<8x128xf32>
    %123 = tpu.matmul %120, %122, %cst_58 {dimension_numbers = #tpu.dot_dimension_numbers<[1], [0], [0], [1], [0, 0, 1, 1], [], []>} : vector<8x64xbf16>, vector<64x128xbf16>, vector<8x128xf32> -> vector<8x128xf32>
    %124 = arith.addf %118, %123 : vector<8x128xf32>
    %125 = vector.extract_strided_slice %105 {offsets = [24, 0], sizes = [8, 64], strides = [1, 1]} : vector<32x64xf32> to vector<8x64xf32>
    %126 = arith.truncf %125 : vector<8x64xf32> to vector<8x64xbf16>
    %c3_59 = arith.constant 3 : index
    %c0_60 = arith.constant 0 : index
    %c0_61 = arith.constant 0 : index
    %127 = vector.load %arg13[%c3_59, %c0_60, %c0_61] : memref<4x64x128xbf16, #tpu.memory_space<vmem>>, vector<1x64x128xbf16>
    %128 = vector.shape_cast %127 : vector<1x64x128xbf16> to vector<64x128xbf16>
    %cst_62 = arith.constant dense<0.000000e+00> : vector<8x128xf32>
    %129 = tpu.matmul %126, %128, %cst_62 {dimension_numbers = #tpu.dot_dimension_numbers<[1], [0], [0], [1], [0, 0, 1, 1], [], []>} : vector<8x64xbf16>, vector<64x128xbf16>, vector<8x128xf32> -> vector<8x128xf32>
    %130 = arith.addf %124, %129 : vector<8x128xf32>
    %c0_63 = arith.constant 0 : index
    %c0_64 = arith.constant 0 : index
    %131 = vector.load %arg4[%c0_63, %c0_64] : memref<1x128xf32, #tpu.memory_space<vmem>>, vector<1x128xf32>
    %132 = vector.broadcast %131 : vector<1x128xf32> to vector<8x128xf32>
    %133 = arith.addf %130, %132 : vector<8x128xf32>
    %cst_65 = arith.constant 0.000000e+00 : f32
    %134 = vector.broadcast %cst_65 : f32 to vector<8x128xf32>
    %135 = arith.maximumf %133, %134 : vector<8x128xf32>
    %c2_i32_66 = arith.constant 2 : i32
    %136 = tpu.memref_slice %arg16[%c2_i32_66] : memref<4x!tpu.dma_semaphore, #tpu.memory_space<semaphore_mem>> -> memref<1x!tpu.dma_semaphore, #tpu.memory_space<semaphore_mem>>
    %137 = tpu.memref_squeeze %136 : memref<1x!tpu.dma_semaphore, #tpu.memory_space<semaphore_mem>> -> memref<!tpu.dma_semaphore, #tpu.memory_space<semaphore_mem>>
    tpu.wait_dma2 semaphore(%137 : memref<!tpu.dma_semaphore, #tpu.memory_space<semaphore_mem>>) src(%arg9 : memref<128x128xbf16, #tpu.memory_space<any>>) dst(%arg14 : memref<128x128xbf16, #tpu.memory_space<vmem>>)
    %138 = arith.truncf %135 : vector<8x128xf32> to vector<8x128xbf16>
    %c0_67 = arith.constant 0 : index
    %c0_68 = arith.constant 0 : index
    %139 = vector.load %arg14[%c0_67, %c0_68] : memref<128x128xbf16, #tpu.memory_space<vmem>>, vector<128x128xbf16>
    %cst_69 = arith.constant dense<0.000000e+00> : vector<8x128xf32>
    %140 = tpu.matmul %138, %139, %cst_69 {dimension_numbers = #tpu.dot_dimension_numbers<[1], [0], [0], [1], [0, 0, 1, 1], [], []>} : vector<8x128xbf16>, vector<128x128xbf16>, vector<8x128xf32> -> vector<8x128xf32>
    %c0_70 = arith.constant 0 : index
    %c0_71 = arith.constant 0 : index
    %141 = vector.load %arg5[%c0_70, %c0_71] : memref<1x128xf32, #tpu.memory_space<vmem>>, vector<1x128xf32>
    %142 = vector.broadcast %141 : vector<1x128xf32> to vector<8x128xf32>
    %143 = arith.addf %140, %142 : vector<8x128xf32>
    %cst_72 = arith.constant 0.000000e+00 : f32
    %144 = vector.broadcast %cst_72 : f32 to vector<8x128xf32>
    %145 = arith.maximumf %143, %144 : vector<8x128xf32>
    %c3_i32_73 = arith.constant 3 : i32
    %146 = tpu.memref_slice %arg16[%c3_i32_73] : memref<4x!tpu.dma_semaphore, #tpu.memory_space<semaphore_mem>> -> memref<1x!tpu.dma_semaphore, #tpu.memory_space<semaphore_mem>>
    %147 = tpu.memref_squeeze %146 : memref<1x!tpu.dma_semaphore, #tpu.memory_space<semaphore_mem>> -> memref<!tpu.dma_semaphore, #tpu.memory_space<semaphore_mem>>
    tpu.wait_dma2 semaphore(%147 : memref<!tpu.dma_semaphore, #tpu.memory_space<semaphore_mem>>) src(%arg10 : memref<128x128xbf16, #tpu.memory_space<any>>) dst(%arg15 : memref<128x128xbf16, #tpu.memory_space<vmem>>)
    %148 = arith.truncf %145 : vector<8x128xf32> to vector<8x128xbf16>
    %c0_74 = arith.constant 0 : index
    %c0_75 = arith.constant 0 : index
    %149 = vector.load %arg15[%c0_74, %c0_75] : memref<128x128xbf16, #tpu.memory_space<vmem>>, vector<128x128xbf16>
    %cst_76 = arith.constant dense<0.000000e+00> : vector<8x128xf32>
    %150 = tpu.matmul %148, %149, %cst_76 {dimension_numbers = #tpu.dot_dimension_numbers<[1], [0], [0], [1], [0, 0, 1, 1], [], []>} : vector<8x128xbf16>, vector<128x128xbf16>, vector<8x128xf32> -> vector<8x128xf32>
    %c0_77 = arith.constant 0 : index
    %c0_78 = arith.constant 0 : index
    %151 = vector.load %arg6[%c0_77, %c0_78] : memref<1x128xf32, #tpu.memory_space<vmem>>, vector<1x128xf32>
    %152 = vector.broadcast %151 : vector<1x128xf32> to vector<8x128xf32>
    %153 = arith.addf %150, %152 : vector<8x128xf32>
    %c0_79 = arith.constant 0 : index
    %c0_80 = arith.constant 0 : index
    %154 = vector.load %arg11[%c0_79, %c0_80] : memref<8x128xf32, #tpu.memory_space<vmem>>, vector<8x128xf32>
    tpu.vector_store %arg11[%c0_79, %c0_80], %153 {strides = array<i32>} : memref<8x128xf32, #tpu.memory_space<vmem>>, vector<8x128xf32>,
    return
  }
}

</mosaic_0001>

<llo_original>
// kernel: netto_forward.1
$region0: #{netto_forward.1}
  #allocation0 [shape = 'u32[]', space=smem, size = 0x4, offset = 0x4, fixed_abs, tag = 'smem constant byte address 0x4 - core index']
  #allocation1 [shape = 'u32[144,128]{1,0:T(1,128)}', space=vmem, size = 0x12000, scoped, tag = 'internal scratch']
  #allocation2 [shape = 'bf16[6,128,256]{2,1,0:T(16,128)(2,1)}', space=vmem, size = 0x60000, scoped, tag = 'scratch operand']
  #allocation3 [shape = 'bf16[4,64,128]{2,1,0:T(16,128)(2,1)}', space=vmem, size = 0x10000, scoped, tag = 'scratch operand']
  #allocation4 [shape = 'bf16[128,128]{1,0:T(16,128)(2,1)}', space=vmem, size = 0x8000, scoped, tag = 'scratch operand']
  #allocation5 [shape = 'bf16[128,128]{1,0:T(16,128)(2,1)}', space=vmem, size = 0x8000, scoped, tag = 'scratch operand']
  #allocation6 [shape = 's32[4]{0}', space=sflag, size = 0x10, scoped, tag = 'scratch operand']
  #allocation9 [shape = 's32[]', space=sflag, size = 0x4, offset = 0, fixed_abs, tag = 'sflag constant byte address 0x0 - dummy sync flag']
  #allocation10 [shape = 's32[]', space=sflag, size = 0x4, offset = 0, fixed_abs, tag = 'sflag constant byte address 0x0 - dummy sync flag']
  #allocation11 [shape = 's32[]', space=sflag, size = 0x4, offset = 0, fixed_abs, tag = 'sflag constant byte address 0x0 - dummy sync flag']
  #allocation12 [shape = 'u32[]', space=smem, size = 0x4, offset = 0x44, fixed_abs, tag = 'smem constant byte address 0x44 - assertion arg 0']
  #allocation13 [shape = 'u32[]', space=smem, size = 0x4, offset = 0x48, fixed_abs, tag = 'smem constant byte address 0x48 - assertion arg 1']
  #allocation14 [shape = 's32[]', space=sflag, size = 0x4, offset = 0, fixed_abs, tag = 'sflag constant byte address 0x0 - dummy sync flag']
  #allocation15 [shape = 's32[]', space=sflag, size = 0x4, offset = 0, fixed_abs, tag = 'sflag constant byte address 0x0 - dummy sync flag']
  #allocation16 [shape = 's32[]', space=sflag, size = 0x4, offset = 0, fixed_abs, tag = 'sflag constant byte address 0x0 - dummy sync flag']
  %s0 = inlined_call_operand.vmem [shape: f32[224,32], index: 0, kind: input, shape index: {}]
  %s1 = inlined_call_operand.hbm [shape: bf16[5,32,256], index: 1, kind: input, shape index: {}]
  %s2 = inlined_call_operand.vmem [shape: f32[1,256], index: 2, kind: input, shape index: {}]
  %s3 = inlined_call_operand.vmem [shape: f32[1,256], index: 3, kind: input, shape index: {}]
  %s4 = inlined_call_operand.vmem [shape: f32[1,128], index: 4, kind: input, shape index: {}]
  %s5 = inlined_call_operand.vmem [shape: f32[1,128], index: 5, kind: input, shape index: {}]
  %s6 = inlined_call_operand.vmem [shape: f32[1,128], index: 6, kind: input, shape index: {}]
  %s7 = inlined_call_operand.vmem [shape: bf16[6,128,256], index: 7, kind: input, shape index: {}]
  %s8 = inlined_call_operand.hbm [shape: bf16[4,64,128], index: 8, kind: input, shape index: {}]
  %s9 = inlined_call_operand.vmem [shape: bf16[128,128], index: 9, kind: input, shape index: {}]
  %s10 = inlined_call_operand.hbm [shape: bf16[128,128], index: 10, kind: input, shape index: {}]
  %s11 = inlined_call_operand.vmem [shape: f32[8,128], index: 11, kind: output, shape index: {}]
  %s12 = sld [smem:[#allocation0]]
  $region121: #{netto_forward.1} parent=0
    _
  %s14 = ssub.s32 1, %s12
  %s15 = scalar_select 0, %s14, %s12
  $region1: #{netto_forward.1} parent=0
    #allocation7 [shape = 'u8[81920]{0}', space=vmem, size = 0x14000, scoped, tag = 'input window, operand 1, single buffered']
    #allocation8 [shape = 's32[1]{0}', space=sflag, size = 0x4, scoped, tag = 'scoped memory for netto_forward.1']
    %16 = vsyncpa [#allocation8], 0
    // Predicated region
    $region2: #{netto_forward.1} parent=1 // pred_check
      _
    $region3: #{netto_forward.1} parent=1 // pred_check_branch
      %18 = sbr.rel (0) target = $region5
    $region4: #{netto_forward.1} parent=1 // pred_region
      _
    $region5: #{netto_forward.1} parent=1 // pred_fallthru
      _
    // Predicated region
    $region6: #{netto_forward.1} parent=1 // pred_check
      _
    $region7: #{netto_forward.1} parent=1 // pred_check_branch
      %20 = sbr.rel (0) target = $region9
    $region8: #{netto_forward.1} parent=1 // pred_region
      %s22 = ssub.s32 2560, 2560
      %23 = vsyncadd [#allocation8], %s22
      %s24 = sshll.u32 [#allocation7], 4
      %s25 = int_to_ptr.vmem [resolvable:$true] %s24
      %30 = dma.hbm_to_vmem [thread:$0]  %s1, 2560, %s25, [#allocation8], 128, 128, 8
    $region9: #{netto_forward.1} parent=1 // pred_fallthru
      _
    // Predicated region
    $region10: #{netto_forward.1} parent=1 // pred_check
      _
    $region11: #{netto_forward.1} parent=1 // pred_check_branch
      %32 = sbr.rel (0) target = $region13
    $region12: #{netto_forward.1} parent=1 // pred_region
      _
    $region13: #{netto_forward.1} parent=1 // pred_fallthru
      _
    // Predicated region
    $region14: #{netto_forward.1} parent=1 // pred_check
      _
    $region15: #{netto_forward.1} parent=1 // pred_check_branch
      %34 = sbr.rel (0) target = $region17
    $region16: #{netto_forward.1} parent=1 // pred_region
      _
    $region17: #{netto_forward.1} parent=1 // pred_fallthru
      _
    // Predicated region
    $region18: #{netto_forward.1} parent=1 // pred_check
      _
    $region19: #{netto_forward.1} parent=1 // pred_check_branch
      %36 = sbr.rel (0) target = $region21
    $region20: #{netto_forward.1} parent=1 // pred_region
      _
    $region21: #{netto_forward.1} parent=1 // pred_fallthru
      _
    // Predicated region
    $region22: #{netto_forward.1} parent=1 // pred_check
      _
    $region23: #{netto_forward.1} parent=1 // pred_check_branch
      %38 = sbr.rel (0) target = $region25
    $region24: #{netto_forward.1} parent=1 // pred_region
      _
    $region25: #{netto_forward.1} parent=1 // pred_fallthru
      _
    // Predicated region
    $region26: #{netto_forward.1} parent=1 // pred_check
      _
    $region27: #{netto_forward.1} parent=1 // pred_check_branch
      %40 = sbr.rel (0) target = $region29
    $region28: #{netto_forward.1} parent=1 // pred_region
      _
    $region29: #{netto_forward.1} parent=1 // pred_fallthru
      _
    // Predicated region
    $region30: #{netto_forward.1} parent=1 // pred_check
      _
    $region31: #{netto_forward.1} parent=1 // pred_check_branch
      %42 = sbr.rel (0) target = $region33
    $region32: #{netto_forward.1} parent=1 // pred_region
      %43 = dma.done [#allocation8], 2560
    $region33: #{netto_forward.1} parent=1 // pred_fallthru
      _
    %p46 = scmp.lt.u32.totalorder 4, 8
    %p47 = pneg %p46
    // Predicated region
    $region34: #{netto_forward.1} parent=1 // pred_check
      _
    $region35: #{netto_forward.1} parent=1 // pred_check_branch
      %49 = sbr.rel (%p46) target = $region37
    $region36: #{netto_forward.1} parent=1 // pred_region
      %s446 = sand.u32 4, 7
      %p447 = scmp.eq.s32.totalorder %s446, 0
      %p448 = pneg %p447
      // Predicated region
      $region49: #{netto_forward.1} parent=36 // pred_check
        _
      $region50: #{netto_forward.1} parent=36 // pred_check_branch
        %450 = sbr.rel (%p447) target = $region52
      $region51: #{netto_forward.1} parent=36 // pred_region
        %s451 = sand.u32 4, 7
        %s452 = ssub.s32 4, %s451
        %s453 = scalar_lea.vmem %s7, %s452
        %s454 = ssub.s32 4, %s451
        %s455 = scalar_lea.vmem [#allocation2], %s454
        loop: start=0, step=1, limit=1
        $region53: #{netto_forward.1} parent=51 // loop_pre_header
          _
        $region54: #{netto_forward.1} parent=51 // loop_header
          %s457 = sphi 0, %s461
          %p458 = scmp.ge.s32.totalorder %s457, 1
          %s462 = sphi %s7, %s7
          %s463 = sphi [#allocation2], [#allocation2]
        $region55: #{netto_forward.1} parent=51 // loop_header_branch
          %460 = sbr.rel (%p458) target = $region59
        $region56: #{netto_forward.1} parent=51 // loop_body
          _
        $region57: #{netto_forward.1} parent=51 // loop_footer
          %s461 = sadd.s32 1, %s457
        $region58: #{netto_forward.1} parent=51 // loop_footer_branch
          %456 = sbr.rel target = $region54
        $region59: #{netto_forward.1} parent=51 // loop_exit
          _
        %s464 = sshllo.u32 0, %s451
        loop: start=0, step=1, limit=1
        $region60: #{netto_forward.1} parent=51 // loop_pre_header
          _
        $region61: #{netto_forward.1} parent=51 // loop_header
          %s466 = sphi 0, %s470
          %p467 = scmp.ge.s32.totalorder %s466, 1
          %s471 = sphi %s453, %s453
          %s472 = sphi %s455, %s455
        $region62: #{netto_forward.1} parent=51 // loop_header_branch
          %469 = sbr.rel (%p467) target = $region66
        $region63: #{netto_forward.1} parent=51 // loop_body
          %v473 = vld [vmem:[%s471] sm:%s464]
          %474 = vst [vmem:[%s472] sm:%s464] %v473
          %v475 = vld [vmem:[%s471 + $0x8] sm:%s464]
          %476 = vst [vmem:[%s472 + $0x4] sm:%s464] %v475
          %v477 = vld [vmem:[%s471 + $0x4] sm:%s464]
          %478 = vst [vmem:[%s472 + $0x8] sm:%s464] %v477
          %v479 = vld [vmem:[%s471 + $0xc] sm:%s464]
          %480 = vst [vmem:[%s472 + $0xc] sm:%s464] %v479
          %v481 = vld [vmem:[%s471 + $0x10] sm:%s464]
          %482 = vst [vmem:[%s472 + $0x10] sm:%s464] %v481
          %v483 = vld [vmem:[%s471 + $0x18] sm:%s464]
          %484 = vst [vmem:[%s472 + $0x14] sm:%s464] %v483
          %v485 = vld [vmem:[%s471 + $0x14] sm:%s464]
          %486 = vst [vmem:[%s472 + $0x18] sm:%s464] %v485
          %v487 = vld [vmem:[%s471 + $0x1c] sm:%s464]
          %488 = vst [vmem:[%s472 + $0x1c] sm:%s464] %v487
          %v489 = vld [vmem:[%s471 + $0x20] sm:%s464]
          %490 = vst [vmem:[%s472 + $0x20] sm:%s464] %v489
          %v491 = vld [vmem:[%s471 + $0x28] sm:%s464]
          %492 = vst [vmem:[%s472 + $0x24] sm:%s464] %v491
          %v493 = vld [vmem:[%s471 + $0x24] sm:%s464]
          %494 = vst [vmem:[%s472 + $0x28] sm:%s464] %v493
          %v495 = vld [vmem:[%s471 + $0x2c] sm:%s464]
          %496 = vst [vmem:[%s472 + $0x2c] sm:%s464] %v495
          %v497 = vld [vmem:[%s471 + $0x30] sm:%s464]
          %498 = vst [vmem:[%s472 + $0x30] sm:%s464] %v497
          %v499 = vld [vmem:[%s471 + $0x38] sm:%s464]
          %500 = vst [vmem:[%s472 + $0x34] sm:%s464] %v499
          %v501 = vld [vmem:[%s471 + $0x34] sm:%s464]
          %502 = vst [vmem:[%s472 + $0x38] sm:%s464] %v501
          %v503 = vld [vmem:[%s471 + $0x3c] sm:%s464]
          %504 = vst [vmem:[%s472 + $0x3c] sm:%s464] %v503
          %v505 = vld [vmem:[%s471 + $0x40] sm:%s464]
          %506 = vst [vmem:[%s472 + $0x40] sm:%s464] %v505
          %v507 = vld [vmem:[%s471 + $0x48] sm:%s464]
          %508 = vst [vmem:[%s472 + $0x44] sm:%s464] %v507
          %v509 = vld [vmem:[%s471 + $0x44] sm:%s464]
          %510 = vst [vmem:[%s472 + $0x48] sm:%s464] %v509
          %v511 = vld [vmem:[%s471 + $0x4c] sm:%s464]
          %512 = vst [vmem:[%s472 + $0x4c] sm:%s464] %v511
          %v513 = vld [vmem:[%s471 + $0x50] sm:%s464]
          %514 = vst [vmem:[%s472 + $0x50] sm:%s464] %v513
          %v515 = vld [vmem:[%s471 + $0x58] sm:%s464]
          %516 = vst [vmem:[%s472 + $0x54] sm:%s464] %v515
          %v517 = vld [vmem:[%s471 + $0x54] sm:%s464]
          %518 = vst [vmem:[%s472 + $0x58] sm:%s464] %v517
          %v519 = vld [vmem:[%s471 + $0x5c] sm:%s464]
          %520 = vst [vmem:[%s472 + $0x5c] sm:%s464] %v519
          %v521 = vld [vmem:[%s471 + $0x60] sm:%s464]
          %522 = vst [vmem:[%s472 + $0x60] sm:%s464] %v521
          %v523 = vld [vmem:[%s471 + $0x68] sm:%s464]
          %524 = vst [vmem:[%s472 + $0x64] sm:%s464] %v523
          %v525 = vld [vmem:[%s471 + $0x64] sm:%s464]
          %526 = vst [vmem:[%s472 + $0x68] sm:%s464] %v525
          %v527 = vld [vmem:[%s471 + $0x6c] sm:%s464]
          %528 = vst [vmem:[%s472 + $0x6c] sm:%s464] %v527
          %v529 = vld [vmem:[%s471 + $0x70] sm:%s464]
          %530 = vst [vmem:[%s472 + $0x70] sm:%s464] %v529
          %v531 = vld [vmem:[%s471 + $0x78] sm:%s464]
          %532 = vst [vmem:[%s472 + $0x74] sm:%s464] %v531
          %v533 = vld [vmem:[%s471 + $0x74] sm:%s464]
          %534 = vst [vmem:[%s472 + $0x78] sm:%s464] %v533
          %v535 = vld [vmem:[%s471 + $0x7c] sm:%s464]
          %536 = vst [vmem:[%s472 + $0x7c] sm:%s464] %v535
          %v537 = vld [vmem:[%s471 + $0x80] sm:%s464]
          %538 = vst [vmem:[%s472 + $0x80] sm:%s464] %v537
          %v539 = vld [vmem:[%s471 + $0x88] sm:%s464]
          %540 = vst [vmem:[%s472 + $0x84] sm:%s464] %v539
          %v541 = vld [vmem:[%s471 + $0x84] sm:%s464]
          %542 = vst [vmem:[%s472 + $0x88] sm:%s464] %v541
          %v543 = vld [vmem:[%s471 + $0x8c] sm:%s464]
          %544 = vst [vmem:[%s472 + $0x8c] sm:%s464] %v543
          %v545 = vld [vmem:[%s471 + $0x90] sm:%s464]
          %546 = vst [vmem:[%s472 + $0x90] sm:%s464] %v545
          %v547 = vld [vmem:[%s471 + $0x98] sm:%s464]
          %548 = vst [vmem:[%s472 + $0x94] sm:%s464] %v547
          %v549 = vld [vmem:[%s471 + $0x94] sm:%s464]
          %550 = vst [vmem:[%s472 + $0x98] sm:%s464] %v549
          %v551 = vld [vmem:[%s471 + $0x9c] sm:%s464]
          %552 = vst [vmem:[%s472 + $0x9c] sm:%s464] %v551
          %v553 = vld [vmem:[%s471 + $0xa0] sm:%s464]
          %554 = vst [vmem:[%s472 + $0xa0] sm:%s464] %v553
          %v555 = vld [vmem:[%s471 + $0xa8] sm:%s464]
          %556 = vst [vmem:[%s472 + $0xa4] sm:%s464] %v555
          %v557 = vld [vmem:[%s471 + $0xa4] sm:%s464]
          %558 = vst [vmem:[%s472 + $0xa8] sm:%s464] %v557
          %v559 = vld [vmem:[%s471 + $0xac] sm:%s464]
          %560 = vst [vmem:[%s472 + $0xac] sm:%s464] %v559
          %v561 = vld [vmem:[%s471 + $0xb0] sm:%s464]
          %562 = vst [vmem:[%s472 + $0xb0] sm:%s464] %v561
          %v563 = vld [vmem:[%s471 + $0xb8] sm:%s464]
          %564 = vst [vmem:[%s472 + $0xb4] sm:%s464] %v563
          %v565 = vld [vmem:[%s471 + $0xb4] sm:%s464]
          %566 = vst [vmem:[%s472 + $0xb8] sm:%s464] %v565
          %v567 = vld [vmem:[%s471 + $0xbc] sm:%s464]
          %568 = vst [vmem:[%s472 + $0xbc] sm:%s464] %v567
          %v569 = vld [vmem:[%s471 + $0xc0] sm:%s464]
          %570 = vst [vmem:[%s472 + $0xc0] sm:%s464] %v569
          %v571 = vld [vmem:[%s471 + $0xc8] sm:%s464]
          %572 = vst [vmem:[%s472 + $0xc4] sm:%s464] %v571
          %v573 = vld [vmem:[%s471 + $0xc4] sm:%s464]
          %574 = vst [vmem:[%s472 + $0xc8] sm:%s464] %v573
          %v575 = vld [vmem:[%s471 + $0xcc] sm:%s464]
          %576 = vst [vmem:[%s472 + $0xcc] sm:%s464] %v575
          %v577 = vld [vmem:[%s471 + $0xd0] sm:%s464]
          %578 = vst [vmem:[%s472 + $0xd0] sm:%s464] %v577
          %v579 = vld [vmem:[%s471 + $0xd8] sm:%s464]
          %580 = vst [vmem:[%s472 + $0xd4] sm:%s464] %v579
          %v581 = vld [vmem:[%s471 + $0xd4] sm:%s464]
          %582 = vst [vmem:[%s472 + $0xd8] sm:%s464] %v581
          %v583 = vld [vmem:[%s471 + $0xdc] sm:%s464]
          %584 = vst [vmem:[%s472 + $0xdc] sm:%s464] %v583
          %v585 = vld [vmem:[%s471 + $0xe0] sm:%s464]
          %586 = vst [vmem:[%s472 + $0xe0] sm:%s464] %v585
          %v587 = vld [vmem:[%s471 + $0xe8] sm:%s464]
          %588 = vst [vmem:[%s472 + $0xe4] sm:%s464] %v587
          %v589 = vld [vmem:[%s471 + $0xe4] sm:%s464]
          %590 = vst [vmem:[%s472 + $0xe8] sm:%s464] %v589
          %v591 = vld [vmem:[%s471 + $0xec] sm:%s464]
          %592 = vst [vmem:[%s472 + $0xec] sm:%s464] %v591
          %v593 = vld [vmem:[%s471 + $0xf0] sm:%s464]
          %594 = vst [vmem:[%s472 + $0xf0] sm:%s464] %v593
          %v595 = vld [vmem:[%s471 + $0xf8] sm:%s464]
          %596 = vst [vmem:[%s472 + $0xf4] sm:%s464] %v595
          %v597 = vld [vmem:[%s471 + $0xf4] sm:%s464]
          %598 = vst [vmem:[%s472 + $0xf8] sm:%s464] %v597
          %v599 = vld [vmem:[%s471 + $0xfc] sm:%s464]
          %600 = vst [vmem:[%s472 + $0xfc] sm:%s464] %v599
          %v601 = vld [vmem:[%s471 + $0x100] sm:%s464]
          %602 = vst [vmem:[%s472 + $0x100] sm:%s464] %v601
          %v603 = vld [vmem:[%s471 + $0x108] sm:%s464]
          %604 = vst [vmem:[%s472 + $0x104] sm:%s464] %v603
          %v605 = vld [vmem:[%s471 + $0x104] sm:%s464]
          %606 = vst [vmem:[%s472 + $0x108] sm:%s464] %v605
          %v607 = vld [vmem:[%s471 + $0x10c] sm:%s464]
          %608 = vst [vmem:[%s472 + $0x10c] sm:%s464] %v607
          %v609 = vld [vmem:[%s471 + $0x110] sm:%s464]
          %610 = vst [vmem:[%s472 + $0x110] sm:%s464] %v609
          %v611 = vld [vmem:[%s471 + $0x118] sm:%s464]
          %612 = vst [vmem:[%s472 + $0x114] sm:%s464] %v611
          %v613 = vld [vmem:[%s471 + $0x114] sm:%s464]
          %614 = vst [vmem:[%s472 + $0x118] sm:%s464] %v613
          %v615 = vld [vmem:[%s471 + $0x11c] sm:%s464]
          %616 = vst [vmem:[%s472 + $0x11c] sm:%s464] %v615
          %v617 = vld [vmem:[%s471 + $0x120] sm:%s464]
          %618 = vst [vmem:[%s472 + $0x120] sm:%s464] %v617
          %v619 = vld [vmem:[%s471 + $0x128] sm:%s464]
          %620 = vst [vmem:[%s472 + $0x124] sm:%s464] %v619
          %v621 = vld [vmem:[%s471 + $0x124] sm:%s464]
          %622 = vst [vmem:[%s472 + $0x128] sm:%s464] %v621
          %v623 = vld [vmem:[%s471 + $0x12c] sm:%s464]
          %624 = vst [vmem:[%s472 + $0x12c] sm:%s464] %v623
          %v625 = vld [vmem:[%s471 + $0x130] sm:%s464]
          %626 = vst [vmem:[%s472 + $0x130] sm:%s464] %v625
          %v627 = vld [vmem:[%s471 + $0x138] sm:%s464]
          %628 = vst [vmem:[%s472 + $0x134] sm:%s464] %v627
          %v629 = vld [vmem:[%s471 + $0x134] sm:%s464]
          %630 = vst [vmem:[%s472 + $0x138] sm:%s464] %v629
          %v631 = vld [vmem:[%s471 + $0x13c] sm:%s464]
          %632 = vst [vmem:[%s472 + $0x13c] sm:%s464] %v631
          %v633 = vld [vmem:[%s471 + $0x140] sm:%s464]
          %634 = vst [vmem:[%s472 + $0x140] sm:%s464] %v633
          %v635 = vld [vmem:[%s471 + $0x148] sm:%s464]
          %636 = vst [vmem:[%s472 + $0x144] sm:%s464] %v635
          %v637 = vld [vmem:[%s471 + $0x144] sm:%s464]
          %638 = vst [vmem:[%s472 + $0x148] sm:%s464] %v637
          %v639 = vld [vmem:[%s471 + $0x14c] sm:%s464]
          %640 = vst [vmem:[%s472 + $0x14c] sm:%s464] %v639
          %v641 = vld [vmem:[%s471 + $0x150] sm:%s464]
          %642 = vst [vmem:[%s472 + $0x150] sm:%s464] %v641
          %v643 = vld [vmem:[%s471 + $0x158] sm:%s464]
          %644 = vst [vmem:[%s472 + $0x154] sm:%s464] %v643
          %v645 = vld [vmem:[%s471 + $0x154] sm:%s464]
          %646 = vst [vmem:[%s472 + $0x158] sm:%s464] %v645
          %v647 = vld [vmem:[%s471 + $0x15c] sm:%s464]
          %648 = vst [vmem:[%s472 + $0x15c] sm:%s464] %v647
          %v649 = vld [vmem:[%s471 + $0x160] sm:%s464]
          %650 = vst [vmem:[%s472 + $0x160] sm:%s464] %v649
          %v651 = vld [vmem:[%s471 + $0x168] sm:%s464]
          %652 = vst [vmem:[%s472 + $0x164] sm:%s464] %v651
          %v653 = vld [vmem:[%s471 + $0x164] sm:%s464]
          %654 = vst [vmem:[%s472 + $0x168] sm:%s464] %v653
          %v655 = vld [vmem:[%s471 + $0x16c] sm:%s464]
          %656 = vst [vmem:[%s472 + $0x16c] sm:%s464] %v655
          %v657 = vld [vmem:[%s471 + $0x170] sm:%s464]
          %658 = vst [vmem:[%s472 + $0x170] sm:%s464] %v657
          %v659 = vld [vmem:[%s471 + $0x178] sm:%s464]
          %660 = vst [vmem:[%s472 + $0x174] sm:%s464] %v659
          %v661 = vld [vmem:[%s471 + $0x174] sm:%s464]
          %662 = vst [vmem:[%s472 + $0x178] sm:%s464] %v661
          %v663 = vld [vmem:[%s471 + $0x17c] sm:%s464]
          %664 = vst [vmem:[%s472 + $0x17c] sm:%s464] %v663
          %v665 = vld [vmem:[%s471 + $0x180] sm:%s464]
          %666 = vst [vmem:[%s472 + $0x180] sm:%s464] %v665
          %v667 = vld [vmem:[%s471 + $0x188] sm:%s464]
          %668 = vst [vmem:[%s472 + $0x184] sm:%s464] %v667
          %v669 = vld [vmem:[%s471 + $0x184] sm:%s464]
          %670 = vst [vmem:[%s472 + $0x188] sm:%s464] %v669
          %v671 = vld [vmem:[%s471 + $0x18c] sm:%s464]
          %672 = vst [vmem:[%s472 + $0x18c] sm:%s464] %v671
          %v673 = vld [vmem:[%s471 + $0x190] sm:%s464]
          %674 = vst [vmem:[%s472 + $0x190] sm:%s464] %v673
          %v675 = vld [vmem:[%s471 + $0x198] sm:%s464]
          %676 = vst [vmem:[%s472 + $0x194] sm:%s464] %v675
          %v677 = vld [vmem:[%s471 + $0x194] sm:%s464]
          %678 = vst [vmem:[%s472 + $0x198] sm:%s464] %v677
          %v679 = vld [vmem:[%s471 + $0x19c] sm:%s464]
          %680 = vst [vmem:[%s472 + $0x19c] sm:%s464] %v679
          %v681 = vld [vmem:[%s471 + $0x1a0] sm:%s464]
          %682 = vst [vmem:[%s472 + $0x1a0] sm:%s464] %v681
          %v683 = vld [vmem:[%s471 + $0x1a8] sm:%s464]
          %684 = vst [vmem:[%s472 + $0x1a4] sm:%s464] %v683
          %v685 = vld [vmem:[%s471 + $0x1a4] sm:%s464]
          %686 = vst [vmem:[%s472 + $0x1a8] sm:%s464] %v685
          %v687 = vld [vmem:[%s471 + $0x1ac] sm:%s464]
          %688 = vst [vmem:[%s472 + $0x1ac] sm:%s464] %v687
          %v689 = vld [vmem:[%s471 + $0x1b0] sm:%s464]
          %690 = vst [vmem:[%s472 + $0x1b0] sm:%s464] %v689
          %v691 = vld [vmem:[%s471 + $0x1b8] sm:%s464]
          %692 = vst [vmem:[%s472 + $0x1b4] sm:%s464] %v691
          %v693 = vld [vmem:[%s471 + $0x1b4] sm:%s464]
          %694 = vst [vmem:[%s472 + $0x1b8] sm:%s464] %v693
          %v695 = vld [vmem:[%s471 + $0x1bc] sm:%s464]
          %696 = vst [vmem:[%s472 + $0x1bc] sm:%s464] %v695
          %v697 = vld [vmem:[%s471 + $0x1c0] sm:%s464]
          %698 = vst [vmem:[%s472 + $0x1c0] sm:%s464] %v697
          %v699 = vld [vmem:[%s471 + $0x1c8] sm:%s464]
          %700 = vst [vmem:[%s472 + $0x1c4] sm:%s464] %v699
          %v701 = vld [vmem:[%s471 + $0x1c4] sm:%s464]
          %702 = vst [vmem:[%s472 + $0x1c8] sm:%s464] %v701
          %v703 = vld [vmem:[%s471 + $0x1cc] sm:%s464]
          %704 = vst [vmem:[%s472 + $0x1cc] sm:%s464] %v703
          %v705 = vld [vmem:[%s471 + $0x1d0] sm:%s464]
          %706 = vst [vmem:[%s472 + $0x1d0] sm:%s464] %v705
          %v707 = vld [vmem:[%s471 + $0x1d8] sm:%s464]
          %708 = vst [vmem:[%s472 + $0x1d4] sm:%s464] %v707
          %v709 = vld [vmem:[%s471 + $0x1d4] sm:%s464]
          %710 = vst [vmem:[%s472 + $0x1d8] sm:%s464] %v709
          %v711 = vld [vmem:[%s471 + $0x1dc] sm:%s464]
          %712 = vst [vmem:[%s472 + $0x1dc] sm:%s464] %v711
          %v713 = vld [vmem:[%s471 + $0x1e0] sm:%s464]
          %714 = vst [vmem:[%s472 + $0x1e0] sm:%s464] %v713
          %v715 = vld [vmem:[%s471 + $0x1e8] sm:%s464]
          %716 = vst [vmem:[%s472 + $0x1e4] sm:%s464] %v715
          %v717 = vld [vmem:[%s471 + $0x1e4] sm:%s464]
          %718 = vst [vmem:[%s472 + $0x1e8] sm:%s464] %v717
          %v719 = vld [vmem:[%s471 + $0x1ec] sm:%s464]
          %720 = vst [vmem:[%s472 + $0x1ec] sm:%s464] %v719
          %v721 = vld [vmem:[%s471 + $0x1f0] sm:%s464]
          %722 = vst [vmem:[%s472 + $0x1f0] sm:%s464] %v721
          %v723 = vld [vmem:[%s471 + $0x1f8] sm:%s464]
          %724 = vst [vmem:[%s472 + $0x1f4] sm:%s464] %v723
          %v725 = vld [vmem:[%s471 + $0x1f4] sm:%s464]
          %726 = vst [vmem:[%s472 + $0x1f8] sm:%s464] %v725
          %v727 = vld [vmem:[%s471 + $0x1fc] sm:%s464]
          %728 = vst [vmem:[%s472 + $0x1fc] sm:%s464] %v727
          %v729 = vld [vmem:[%s471 + $0x200] sm:%s464]
          %730 = vst [vmem:[%s472 + $0x200] sm:%s464] %v729
          %v731 = vld [vmem:[%s471 + $0x208] sm:%s464]
          %732 = vst [vmem:[%s472 + $0x204] sm:%s464] %v731
          %v733 = vld [vmem:[%s471 + $0x204] sm:%s464]
          %734 = vst [vmem:[%s472 + $0x208] sm:%s464] %v733
          %v735 = vld [vmem:[%s471 + $0x20c] sm:%s464]
          %736 = vst [vmem:[%s472 + $0x20c] sm:%s464] %v735
          %v737 = vld [vmem:[%s471 + $0x210] sm:%s464]
          %738 = vst [vmem:[%s472 + $0x210] sm:%s464] %v737
          %v739 = vld [vmem:[%s471 + $0x218] sm:%s464]
          %740 = vst [vmem:[%s472 + $0x214] sm:%s464] %v739
          %v741 = vld [vmem:[%s471 + $0x214] sm:%s464]
          %742 = vst [vmem:[%s472 + $0x218] sm:%s464] %v741
          %v743 = vld [vmem:[%s471 + $0x21c] sm:%s464]
          %744 = vst [vmem:[%s472 + $0x21c] sm:%s464] %v743
          %v745 = vld [vmem:[%s471 + $0x220] sm:%s464]
          %746 = vst [vmem:[%s472 + $0x220] sm:%s464] %v745
          %v747 = vld [vmem:[%s471 + $0x228] sm:%s464]
          %748 = vst [vmem:[%s472 + $0x224] sm:%s464] %v747
          %v749 = vld [vmem:[%s471 + $0x224] sm:%s464]
          %750 = vst [vmem:[%s472 + $0x228] sm:%s464] %v749
          %v751 = vld [vmem:[%s471 + $0x22c] sm:%s464]
          %752 = vst [vmem:[%s472 + $0x22c] sm:%s464] %v751
          %v753 = vld [vmem:[%s471 + $0x230] sm:%s464]
          %754 = vst [vmem:[%s472 + $0x230] sm:%s464] %v753
          %v755 = vld [vmem:[%s471 + $0x238] sm:%s464]
          %756 = vst [vmem:[%s472 + $0x234] sm:%s464] %v755
          %v757 = vld [vmem:[%s471 + $0x234] sm:%s464]
          %758 = vst [vmem:[%s472 + $0x238] sm:%s464] %v757
          %v759 = vld [vmem:[%s471 + $0x23c] sm:%s464]
          %760 = vst [vmem:[%s472 + $0x23c] sm:%s464] %v759
          %v761 = vld [vmem:[%s471 + $0x240] sm:%s464]
          %762 = vst [vmem:[%s472 + $0x240] sm:%s464] %v761
          %v763 = vld [vmem:[%s471 + $0x248] sm:%s464]
          %764 = vst [vmem:[%s472 + $0x244] sm:%s464] %v763
          %v765 = vld [vmem:[%s471 + $0x244] sm:%s464]
          %766 = vst [vmem:[%s472 + $0x248] sm:%s464] %v765
          %v767 = vld [vmem:[%s471 + $0x24c] sm:%s464]
          %768 = vst [vmem:[%s472 + $0x24c] sm:%s464] %v767
          %v769 = vld [vmem:[%s471 + $0x250] sm:%s464]
          %770 = vst [vmem:[%s472 + $0x250] sm:%s464] %v769
          %v771 = vld [vmem:[%s471 + $0x258] sm:%s464]
          %772 = vst [vmem:[%s472 + $0x254] sm:%s464] %v771
          %v773 = vld [vmem:[%s471 + $0x254] sm:%s464]
          %774 = vst [vmem:[%s472 + $0x258] sm:%s464] %v773
          %v775 = vld [vmem:[%s471 + $0x25c] sm:%s464]
          %776 = vst [vmem:[%s472 + $0x25c] sm:%s464] %v775
          %v777 = vld [vmem:[%s471 + $0x260] sm:%s464]
          %778 = vst [vmem:[%s472 + $0x260] sm:%s464] %v777
          %v779 = vld [vmem:[%s471 + $0x268] sm:%s464]
          %780 = vst [vmem:[%s472 + $0x264] sm:%s464] %v779
          %v781 = vld [vmem:[%s471 + $0x264] sm:%s464]
          %782 = vst [vmem:[%s472 + $0x268] sm:%s464] %v781
          %v783 = vld [vmem:[%s471 + $0x26c] sm:%s464]
          %784 = vst [vmem:[%s472 + $0x26c] sm:%s464] %v783
          %v785 = vld [vmem:[%s471 + $0x270] sm:%s464]
          %786 = vst [vmem:[%s472 + $0x270] sm:%s464] %v785
          %v787 = vld [vmem:[%s471 + $0x278] sm:%s464]
          %788 = vst [vmem:[%s472 + $0x274] sm:%s464] %v787
          %v789 = vld [vmem:[%s471 + $0x274] sm:%s464]
          %790 = vst [vmem:[%s472 + $0x278] sm:%s464] %v789
          %v791 = vld [vmem:[%s471 + $0x27c] sm:%s464]
          %792 = vst [vmem:[%s472 + $0x27c] sm:%s464] %v791
          %v793 = vld [vmem:[%s471 + $0x280] sm:%s464]
          %794 = vst [vmem:[%s472 + $0x280] sm:%s464] %v793
          %v795 = vld [vmem:[%s471 + $0x288] sm:%s464]
          %796 = vst [vmem:[%s472 + $0x284] sm:%s464] %v795
          %v797 = vld [vmem:[%s471 + $0x284] sm:%s464]
          %798 = vst [vmem:[%s472 + $0x288] sm:%s464] %v797
          %v799 = vld [vmem:[%s471 + $0x28c] sm:%s464]
          %800 = vst [vmem:[%s472 + $0x28c] sm:%s464] %v799
          %v801 = vld [vmem:[%s471 + $0x290] sm:%s464]
          %802 = vst [vmem:[%s472 + $0x290] sm:%s464] %v801
          %v803 = vld [vmem:[%s471 + $0x298] sm:%s464]
          %804 = vst [vmem:[%s472 + $0x294] sm:%s464] %v803
          %v805 = vld [vmem:[%s471 + $0x294] sm:%s464]
          %806 = vst [vmem:[%s472 + $0x298] sm:%s464] %v805
          %v807 = vld [vmem:[%s471 + $0x29c] sm:%s464]
          %808 = vst [vmem:[%s472 + $0x29c] sm:%s464] %v807
          %v809 = vld [vmem:[%s471 + $0x2a0] sm:%s464]
          %810 = vst [vmem:[%s472 + $0x2a0] sm:%s464] %v809
          %v811 = vld [vmem:[%s471 + $0x2a8] sm:%s464]
          %812 = vst [vmem:[%s472 + $0x2a4] sm:%s464] %v811
          %v813 = vld [vmem:[%s471 + $0x2a4] sm:%s464]
          %814 = vst [vmem:[%s472 + $0x2a8] sm:%s464] %v813
          %v815 = vld [vmem:[%s471 + $0x2ac] sm:%s464]
          %816 = vst [vmem:[%s472 + $0x2ac] sm:%s464] %v815
          %v817 = vld [vmem:[%s471 + $0x2b0] sm:%s464]
          %818 = vst [vmem:[%s472 + $0x2b0] sm:%s464] %v817
          %v819 = vld [vmem:[%s471 + $0x2b8] sm:%s464]
          %820 = vst [vmem:[%s472 + $0x2b4] sm:%s464] %v819
          %v821 = vld [vmem:[%s471 + $0x2b4] sm:%s464]
          %822 = vst [vmem:[%s472 + $0x2b8] sm:%s464] %v821
          %v823 = vld [vmem:[%s471 + $0x2bc] sm:%s464]
          %824 = vst [vmem:[%s472 + $0x2bc] sm:%s464] %v823
          %v825 = vld [vmem:[%s471 + $0x2c0] sm:%s464]
          %826 = vst [vmem:[%s472 + $0x2c0] sm:%s464] %v825
          %v827 = vld [vmem:[%s471 + $0x2c8] sm:%s464]
          %828 = vst [vmem:[%s472 + $0x2c4] sm:%s464] %v827
          %v829 = vld [vmem:[%s471 + $0x2c4] sm:%s464]
          %830 = vst [vmem:[%s472 + $0x2c8] sm:%s464] %v829
          %v831 = vld [vmem:[%s471 + $0x2cc] sm:%s464]
          %832 = vst [vmem:[%s472 + $0x2cc] sm:%s464] %v831
          %v833 = vld [vmem:[%s471 + $0x2d0] sm:%s464]
          %834 = vst [vmem:[%s472 + $0x2d0] sm:%s464] %v833
          %v835 = vld [vmem:[%s471 + $0x2d8] sm:%s464]
          %836 = vst [vmem:[%s472 + $0x2d4] sm:%s464] %v835
          %v837 = vld [vmem:[%s471 + $0x2d4] sm:%s464]
          %838 = vst [vmem:[%s472 + $0x2d8] sm:%s464] %v837
          %v839 = vld [vmem:[%s471 + $0x2dc] sm:%s464]
          %840 = vst [vmem:[%s472 + $0x2dc] sm:%s464] %v839
          %v841 = vld [vmem:[%s471 + $0x2e0] sm:%s464]
          %842 = vst [vmem:[%s472 + $0x2e0] sm:%s464] %v841
          %v843 = vld [vmem:[%s471 + $0x2e8] sm:%s464]
          %844 = vst [vmem:[%s472 + $0x2e4] sm:%s464] %v843
          %v845 = vld [vmem:[%s471 + $0x2e4] sm:%s464]
          %846 = vst [vmem:[%s472 + $0x2e8] sm:%s464] %v845
          %v847 = vld [vmem:[%s471 + $0x2ec] sm:%s464]
          %848 = vst [vmem:[%s472 + $0x2ec] sm:%s464] %v847
          %v849 = vld [vmem:[%s471 + $0x2f0] sm:%s464]
          %850 = vst [vmem:[%s472 + $0x2f0] sm:%s464] %v849
          %v851 = vld [vmem:[%s471 + $0x2f8] sm:%s464]
          %852 = vst [vmem:[%s472 + $0x2f4] sm:%s464] %v851
          %v853 = vld [vmem:[%s471 + $0x2f4] sm:%s464]
          %854 = vst [vmem:[%s472 + $0x2f8] sm:%s464] %v853
          %v855 = vld [vmem:[%s471 + $0x2fc] sm:%s464]
          %856 = vst [vmem:[%s472 + $0x2fc] sm:%s464] %v855
        $region64: #{netto_forward.1} parent=51 // loop_footer
          %s470 = sadd.s32 1, %s466
        $region65: #{netto_forward.1} parent=51 // loop_footer_branch
          %465 = sbr.rel target = $region61
        $region66: #{netto_forward.1} parent=51 // loop_exit
          _
      $region52: #{netto_forward.1} parent=36 // pred_fallthru
        _
    $region37: #{netto_forward.1} parent=1 // pred_fallthru
      _
    // Predicated region
    $region38: #{netto_forward.1} parent=1 // pred_check
      %p50 = pneg %p46
    $region39: #{netto_forward.1} parent=1 // pred_check_branch
      %52 = sbr.rel (%p50) target = $region41
    $region40: #{netto_forward.1} parent=1 // pred_region
      %s53 = sshllo.u32 0, 4
      loop: start=0, step=1, limit=1
      $region42: #{netto_forward.1} parent=40 // loop_pre_header
        _
      $region43: #{netto_forward.1} parent=40 // loop_header
        %s55 = sphi 0, %s59
        %p56 = scmp.ge.s32.totalorder %s55, 1
        %s60 = sphi %s7, %s7
        %s61 = sphi [#allocation2], [#allocation2]
      $region44: #{netto_forward.1} parent=40 // loop_header_branch
        %58 = sbr.rel (%p56) target = $region48
      $region45: #{netto_forward.1} parent=40 // loop_body
        %v62 = vld [vmem:[%s60] sm:%s53]
        %63 = vst [vmem:[%s61] sm:%s53] %v62
        %v64 = vld [vmem:[%s60 + $0x8] sm:%s53]
        %65 = vst [vmem:[%s61 + $0x4] sm:%s53] %v64
        %v66 = vld [vmem:[%s60 + $0x4] sm:%s53]
        %67 = vst [vmem:[%s61 + $0x8] sm:%s53] %v66
        %v68 = vld [vmem:[%s60 + $0xc] sm:%s53]
        %69 = vst [vmem:[%s61 + $0xc] sm:%s53] %v68
        %v70 = vld [vmem:[%s60 + $0x10] sm:%s53]
        %71 = vst [vmem:[%s61 + $0x10] sm:%s53] %v70
        %v72 = vld [vmem:[%s60 + $0x18] sm:%s53]
        %73 = vst [vmem:[%s61 + $0x14] sm:%s53] %v72
        %v74 = vld [vmem:[%s60 + $0x14] sm:%s53]
        %75 = vst [vmem:[%s61 + $0x18] sm:%s53] %v74
        %v76 = vld [vmem:[%s60 + $0x1c] sm:%s53]
        %77 = vst [vmem:[%s61 + $0x1c] sm:%s53] %v76
        %v78 = vld [vmem:[%s60 + $0x20] sm:%s53]
        %79 = vst [vmem:[%s61 + $0x20] sm:%s53] %v78
        %v80 = vld [vmem:[%s60 + $0x28] sm:%s53]
        %81 = vst [vmem:[%s61 + $0x24] sm:%s53] %v80
        %v82 = vld [vmem:[%s60 + $0x24] sm:%s53]
        %83 = vst [vmem:[%s61 + $0x28] sm:%s53] %v82
        %v84 = vld [vmem:[%s60 + $0x2c] sm:%s53]
        %85 = vst [vmem:[%s61 + $0x2c] sm:%s53] %v84
        %v86 = vld [vmem:[%s60 + $0x30] sm:%s53]
        %87 = vst [vmem:[%s61 + $0x30] sm:%s53] %v86
        %v88 = vld [vmem:[%s60 + $0x38] sm:%s53]
        %89 = vst [vmem:[%s61 + $0x34] sm:%s53] %v88
        %v90 = vld [vmem:[%s60 + $0x34] sm:%s53]
        %91 = vst [vmem:[%s61 + $0x38] sm:%s53] %v90
        %v92 = vld [vmem:[%s60 + $0x3c] sm:%s53]
        %93 = vst [vmem:[%s61 + $0x3c] sm:%s53] %v92
        %v94 = vld [vmem:[%s60 + $0x40] sm:%s53]
        %95 = vst [vmem:[%s61 + $0x40] sm:%s53] %v94
        %v96 = vld [vmem:[%s60 + $0x48] sm:%s53]
        %97 = vst [vmem:[%s61 + $0x44] sm:%s53] %v96
        %v98 = vld [vmem:[%s60 + $0x44] sm:%s53]
        %99 = vst [vmem:[%s61 + $0x48] sm:%s53] %v98
        %v100 = vld [vmem:[%s60 + $0x4c] sm:%s53]
        %101 = vst [vmem:[%s61 + $0x4c] sm:%s53] %v100
        %v102 = vld [vmem:[%s60 + $0x50] sm:%s53]
        %103 = vst [vmem:[%s61 + $0x50] sm:%s53] %v102
        %v104 = vld [vmem:[%s60 + $0x58] sm:%s53]
        %105 = vst [vmem:[%s61 + $0x54] sm:%s53] %v104
        %v106 = vld [vmem:[%s60 + $0x54] sm:%s53]
        %107 = vst [vmem:[%s61 + $0x58] sm:%s53] %v106
        %v108 = vld [vmem:[%s60 + $0x5c] sm:%s53]
        %109 = vst [vmem:[%s61 + $0x5c] sm:%s53] %v108
        %v110 = vld [vmem:[%s60 + $0x60] sm:%s53]
        %111 = vst [vmem:[%s61 + $0x60] sm:%s53] %v110
        %v112 = vld [vmem:[%s60 + $0x68] sm:%s53]
        %113 = vst [vmem:[%s61 + $0x64] sm:%s53] %v112
        %v114 = vld [vmem:[%s60 + $0x64] sm:%s53]
        %115 = vst [vmem:[%s61 + $0x68] sm:%s53] %v114
        %v116 = vld [vmem:[%s60 + $0x6c] sm:%s53]
        %117 = vst [vmem:[%s61 + $0x6c] sm:%s53] %v116
        %v118 = vld [vmem:[%s60 + $0x70] sm:%s53]
        %119 = vst [vmem:[%s61 + $0x70] sm:%s53] %v118
        %v120 = vld [vmem:[%s60 + $0x78] sm:%s53]
        %121 = vst [vmem:[%s61 + $0x74] sm:%s53] %v120
        %v122 = vld [vmem:[%s60 + $0x74] sm:%s53]
        %123 = vst [vmem:[%s61 + $0x78] sm:%s53] %v122
        %v124 = vld [vmem:[%s60 + $0x7c] sm:%s53]
        %125 = vst [vmem:[%s61 + $0x7c] sm:%s53] %v124
        %v126 = vld [vmem:[%s60 + $0x80] sm:%s53]
        %127 = vst [vmem:[%s61 + $0x80] sm:%s53] %v126
        %v128 = vld [vmem:[%s60 + $0x88] sm:%s53]
        %129 = vst [vmem:[%s61 + $0x84] sm:%s53] %v128
        %v130 = vld [vmem:[%s60 + $0x84] sm:%s53]
        %131 = vst [vmem:[%s61 + $0x88] sm:%s53] %v130
        %v132 = vld [vmem:[%s60 + $0x8c] sm:%s53]
        %133 = vst [vmem:[%s61 + $0x8c] sm:%s53] %v132
        %v134 = vld [vmem:[%s60 + $0x90] sm:%s53]
        %135 = vst [vmem:[%s61 + $0x90] sm:%s53] %v134
        %v136 = vld [vmem:[%s60 + $0x98] sm:%s53]
        %137 = vst [vmem:[%s61 + $0x94] sm:%s53] %v136
        %v138 = vld [vmem:[%s60 + $0x94] sm:%s53]
        %139 = vst [vmem:[%s61 + $0x98] sm:%s53] %v138
        %v140 = vld [vmem:[%s60 + $0x9c] sm:%s53]
        %141 = vst [vmem:[%s61 + $0x9c] sm:%s53] %v140
        %v142 = vld [vmem:[%s60 + $0xa0] sm:%s53]
        %143 = vst [vmem:[%s61 + $0xa0] sm:%s53] %v142
        %v144 = vld [vmem:[%s60 + $0xa8] sm:%s53]
        %145 = vst [vmem:[%s61 + $0xa4] sm:%s53] %v144
        %v146 = vld [vmem:[%s60 + $0xa4] sm:%s53]
        %147 = vst [vmem:[%s61 + $0xa8] sm:%s53] %v146
        %v148 = vld [vmem:[%s60 + $0xac] sm:%s53]
        %149 = vst [vmem:[%s61 + $0xac] sm:%s53] %v148
        %v150 = vld [vmem:[%s60 + $0xb0] sm:%s53]
        %151 = vst [vmem:[%s61 + $0xb0] sm:%s53] %v150
        %v152 = vld [vmem:[%s60 + $0xb8] sm:%s53]
        %153 = vst [vmem:[%s61 + $0xb4] sm:%s53] %v152
        %v154 = vld [vmem:[%s60 + $0xb4] sm:%s53]
        %155 = vst [vmem:[%s61 + $0xb8] sm:%s53] %v154
        %v156 = vld [vmem:[%s60 + $0xbc] sm:%s53]
        %157 = vst [vmem:[%s61 + $0xbc] sm:%s53] %v156
        %v158 = vld [vmem:[%s60 + $0xc0] sm:%s53]
        %159 = vst [vmem:[%s61 + $0xc0] sm:%s53] %v158
        %v160 = vld [vmem:[%s60 + $0xc8] sm:%s53]
        %161 = vst [vmem:[%s61 + $0xc4] sm:%s53] %v160
        %v162 = vld [vmem:[%s60 + $0xc4] sm:%s53]
        %163 = vst [vmem:[%s61 + $0xc8] sm:%s53] %v162
        %v164 = vld [vmem:[%s60 + $0xcc] sm:%s53]
        %165 = vst [vmem:[%s61 + $0xcc] sm:%s53] %v164
        %v166 = vld [vmem:[%s60 + $0xd0] sm:%s53]
        %167 = vst [vmem:[%s61 + $0xd0] sm:%s53] %v166
        %v168 = vld [vmem:[%s60 + $0xd8] sm:%s53]
        %169 = vst [vmem:[%s61 + $0xd4] sm:%s53] %v168
        %v170 = vld [vmem:[%s60 + $0xd4] sm:%s53]
        %171 = vst [vmem:[%s61 + $0xd8] sm:%s53] %v170
        %v172 = vld [vmem:[%s60 + $0xdc] sm:%s53]
        %173 = vst [vmem:[%s61 + $0xdc] sm:%s53] %v172
        %v174 = vld [vmem:[%s60 + $0xe0] sm:%s53]
        %175 = vst [vmem:[%s61 + $0xe0] sm:%s53] %v174
        %v176 = vld [vmem:[%s60 + $0xe8] sm:%s53]
        %177 = vst [vmem:[%s61 + $0xe4] sm:%s53] %v176
        %v178 = vld [vmem:[%s60 + $0xe4] sm:%s53]
        %179 = vst [vmem:[%s61 + $0xe8] sm:%s53] %v178
        %v180 = vld [vmem:[%s60 + $0xec] sm:%s53]
        %181 = vst [vmem:[%s61 + $0xec] sm:%s53] %v180
        %v182 = vld [vmem:[%s60 + $0xf0] sm:%s53]
        %183 = vst [vmem:[%s61 + $0xf0] sm:%s53] %v182
        %v184 = vld [vmem:[%s60 + $0xf8] sm:%s53]
        %185 = vst [vmem:[%s61 + $0xf4] sm:%s53] %v184
        %v186 = vld [vmem:[%s60 + $0xf4] sm:%s53]
        %187 = vst [vmem:[%s61 + $0xf8] sm:%s53] %v186
        %v188 = vld [vmem:[%s60 + $0xfc] sm:%s53]
        %189 = vst [vmem:[%s61 + $0xfc] sm:%s53] %v188
        %v190 = vld [vmem:[%s60 + $0x100] sm:%s53]
        %191 = vst [vmem:[%s61 + $0x100] sm:%s53] %v190
        %v192 = vld [vmem:[%s60 + $0x108] sm:%s53]
        %193 = vst [vmem:[%s61 + $0x104] sm:%s53] %v192
        %v194 = vld [vmem:[%s60 + $0x104] sm:%s53]
        %195 = vst [vmem:[%s61 + $0x108] sm:%s53] %v194
        %v196 = vld [vmem:[%s60 + $0x10c] sm:%s53]
        %197 = vst [vmem:[%s61 + $0x10c] sm:%s53] %v196
        %v198 = vld [vmem:[%s60 + $0x110] sm:%s53]
        %199 = vst [vmem:[%s61 + $0x110] sm:%s53] %v198
        %v200 = vld [vmem:[%s60 + $0x118] sm:%s53]
        %201 = vst [vmem:[%s61 + $0x114] sm:%s53] %v200
        %v202 = vld [vmem:[%s60 + $0x114] sm:%s53]
        %203 = vst [vmem:[%s61 + $0x118] sm:%s53] %v202
        %v204 = vld [vmem:[%s60 + $0x11c] sm:%s53]
        %205 = vst [vmem:[%s61 + $0x11c] sm:%s53] %v204
        %v206 = vld [vmem:[%s60 + $0x120] sm:%s53]
        %207 = vst [vmem:[%s61 + $0x120] sm:%s53] %v206
        %v208 = vld [vmem:[%s60 + $0x128] sm:%s53]
        %209 = vst [vmem:[%s61 + $0x124] sm:%s53] %v208
        %v210 = vld [vmem:[%s60 + $0x124] sm:%s53]
        %211 = vst [vmem:[%s61 + $0x128] sm:%s53] %v210
        %v212 = vld [vmem:[%s60 + $0x12c] sm:%s53]
        %213 = vst [vmem:[%s61 + $0x12c] sm:%s53] %v212
        %v214 = vld [vmem:[%s60 + $0x130] sm:%s53]
        %215 = vst [vmem:[%s61 + $0x130] sm:%s53] %v214
        %v216 = vld [vmem:[%s60 + $0x138] sm:%s53]
        %217 = vst [vmem:[%s61 + $0x134] sm:%s53] %v216
        %v218 = vld [vmem:[%s60 + $0x134] sm:%s53]
        %219 = vst [vmem:[%s61 + $0x138] sm:%s53] %v218
        %v220 = vld [vmem:[%s60 + $0x13c] sm:%s53]
        %221 = vst [vmem:[%s61 + $0x13c] sm:%s53] %v220
        %v222 = vld [vmem:[%s60 + $0x140] sm:%s53]
        %223 = vst [vmem:[%s61 + $0x140] sm:%s53] %v222
        %v224 = vld [vmem:[%s60 + $0x148] sm:%s53]
        %225 = vst [vmem:[%s61 + $0x144] sm:%s53] %v224
        %v226 = vld [vmem:[%s60 + $0x144] sm:%s53]
        %227 = vst [vmem:[%s61 + $0x148] sm:%s53] %v226
        %v228 = vld [vmem:[%s60 + $0x14c] sm:%s53]
        %229 = vst [vmem:[%s61 + $0x14c] sm:%s53] %v228
        %v230 = vld [vmem:[%s60 + $0x150] sm:%s53]
        %231 = vst [vmem:[%s61 + $0x150] sm:%s53] %v230
        %v232 = vld [vmem:[%s60 + $0x158] sm:%s53]
        %233 = vst [vmem:[%s61 + $0x154] sm:%s53] %v232
        %v234 = vld [vmem:[%s60 + $0x154] sm:%s53]
        %235 = vst [vmem:[%s61 + $0x158] sm:%s53] %v234
        %v236 = vld [vmem:[%s60 + $0x15c] sm:%s53]
        %237 = vst [vmem:[%s61 + $0x15c] sm:%s53] %v236
        %v238 = vld [vmem:[%s60 + $0x160] sm:%s53]
        %239 = vst [vmem:[%s61 + $0x160] sm:%s53] %v238
        %v240 = vld [vmem:[%s60 + $0x168] sm:%s53]
        %241 = vst [vmem:[%s61 + $0x164] sm:%s53] %v240
        %v242 = vld [vmem:[%s60 + $0x164] sm:%s53]
        %243 = vst [vmem:[%s61 + $0x168] sm:%s53] %v242
        %v244 = vld [vmem:[%s60 + $0x16c] sm:%s53]
        %245 = vst [vmem:[%s61 + $0x16c] sm:%s53] %v244
        %v246 = vld [vmem:[%s60 + $0x170] sm:%s53]
        %247 = vst [vmem:[%s61 + $0x170] sm:%s53] %v246
        %v248 = vld [vmem:[%s60 + $0x178] sm:%s53]
        %249 = vst [vmem:[%s61 + $0x174] sm:%s53] %v248
        %v250 = vld [vmem:[%s60 + $0x174] sm:%s53]
        %251 = vst [vmem:[%s61 + $0x178] sm:%s53] %v250
        %v252 = vld [vmem:[%s60 + $0x17c] sm:%s53]
        %253 = vst [vmem:[%s61 + $0x17c] sm:%s53] %v252
        %v254 = vld [vmem:[%s60 + $0x180] sm:%s53]
        %255 = vst [vmem:[%s61 + $0x180] sm:%s53] %v254
        %v256 = vld [vmem:[%s60 + $0x188] sm:%s53]
        %257 = vst [vmem:[%s61 + $0x184] sm:%s53] %v256
        %v258 = vld [vmem:[%s60 + $0x184] sm:%s53]
        %259 = vst [vmem:[%s61 + $0x188] sm:%s53] %v258
        %v260 = vld [vmem:[%s60 + $0x18c] sm:%s53]
        %261 = vst [vmem:[%s61 + $0x18c] sm:%s53] %v260
        %v262 = vld [vmem:[%s60 + $0x190] sm:%s53]
        %263 = vst [vmem:[%s61 + $0x190] sm:%s53] %v262
        %v264 = vld [vmem:[%s60 + $0x198] sm:%s53]
        %265 = vst [vmem:[%s61 + $0x194] sm:%s53] %v264
        %v266 = vld [vmem:[%s60 + $0x194] sm:%s53]
        %267 = vst [vmem:[%s61 + $0x198] sm:%s53] %v266
        %v268 = vld [vmem:[%s60 + $0x19c] sm:%s53]
        %269 = vst [vmem:[%s61 + $0x19c] sm:%s53] %v268
        %v270 = vld [vmem:[%s60 + $0x1a0] sm:%s53]
        %271 = vst [vmem:[%s61 + $0x1a0] sm:%s53] %v270
        %v272 = vld [vmem:[%s60 + $0x1a8] sm:%s53]
        %273 = vst [vmem:[%s61 + $0x1a4] sm:%s53] %v272
        %v274 = vld [vmem:[%s60 + $0x1a4] sm:%s53]
        %275 = vst [vmem:[%s61 + $0x1a8] sm:%s53] %v274
        %v276 = vld [vmem:[%s60 + $0x1ac] sm:%s53]
        %277 = vst [vmem:[%s61 + $0x1ac] sm:%s53] %v276
        %v278 = vld [vmem:[%s60 + $0x1b0] sm:%s53]
        %279 = vst [vmem:[%s61 + $0x1b0] sm:%s53] %v278
        %v280 = vld [vmem:[%s60 + $0x1b8] sm:%s53]
        %281 = vst [vmem:[%s61 + $0x1b4] sm:%s53] %v280
        %v282 = vld [vmem:[%s60 + $0x1b4] sm:%s53]
        %283 = vst [vmem:[%s61 + $0x1b8] sm:%s53] %v282
        %v284 = vld [vmem:[%s60 + $0x1bc] sm:%s53]
        %285 = vst [vmem:[%s61 + $0x1bc] sm:%s53] %v284
        %v286 = vld [vmem:[%s60 + $0x1c0] sm:%s53]
        %287 = vst [vmem:[%s61 + $0x1c0] sm:%s53] %v286
        %v288 = vld [vmem:[%s60 + $0x1c8] sm:%s53]
        %289 = vst [vmem:[%s61 + $0x1c4] sm:%s53] %v288
        %v290 = vld [vmem:[%s60 + $0x1c4] sm:%s53]
        %291 = vst [vmem:[%s61 + $0x1c8] sm:%s53] %v290
        %v292 = vld [vmem:[%s60 + $0x1cc] sm:%s53]
        %293 = vst [vmem:[%s61 + $0x1cc] sm:%s53] %v292
        %v294 = vld [vmem:[%s60 + $0x1d0] sm:%s53]
        %295 = vst [vmem:[%s61 + $0x1d0] sm:%s53] %v294
        %v296 = vld [vmem:[%s60 + $0x1d8] sm:%s53]
        %297 = vst [vmem:[%s61 + $0x1d4] sm:%s53] %v296
        %v298 = vld [vmem:[%s60 + $0x1d4] sm:%s53]
        %299 = vst [vmem:[%s61 + $0x1d8] sm:%s53] %v298
        %v300 = vld [vmem:[%s60 + $0x1dc] sm:%s53]
        %301 = vst [vmem:[%s61 + $0x1dc] sm:%s53] %v300
        %v302 = vld [vmem:[%s60 + $0x1e0] sm:%s53]
        %303 = vst [vmem:[%s61 + $0x1e0] sm:%s53] %v302
        %v304 = vld [vmem:[%s60 + $0x1e8] sm:%s53]
        %305 = vst [vmem:[%s61 + $0x1e4] sm:%s53] %v304
        %v306 = vld [vmem:[%s60 + $0x1e4] sm:%s53]
        %307 = vst [vmem:[%s61 + $0x1e8] sm:%s53] %v306
        %v308 = vld [vmem:[%s60 + $0x1ec] sm:%s53]
        %309 = vst [vmem:[%s61 + $0x1ec] sm:%s53] %v308
        %v310 = vld [vmem:[%s60 + $0x1f0] sm:%s53]
        %311 = vst [vmem:[%s61 + $0x1f0] sm:%s53] %v310
        %v312 = vld [vmem:[%s60 + $0x1f8] sm:%s53]
        %313 = vst [vmem:[%s61 + $0x1f4] sm:%s53] %v312
        %v314 = vld [vmem:[%s60 + $0x1f4] sm:%s53]
        %315 = vst [vmem:[%s61 + $0x1f8] sm:%s53] %v314
        %v316 = vld [vmem:[%s60 + $0x1fc] sm:%s53]
        %317 = vst [vmem:[%s61 + $0x1fc] sm:%s53] %v316
        %v318 = vld [vmem:[%s60 + $0x200] sm:%s53]
        %319 = vst [vmem:[%s61 + $0x200] sm:%s53] %v318
        %v320 = vld [vmem:[%s60 + $0x208] sm:%s53]
        %321 = vst [vmem:[%s61 + $0x204] sm:%s53] %v320
        %v322 = vld [vmem:[%s60 + $0x204] sm:%s53]
        %323 = vst [vmem:[%s61 + $0x208] sm:%s53] %v322
        %v324 = vld [vmem:[%s60 + $0x20c] sm:%s53]
        %325 = vst [vmem:[%s61 + $0x20c] sm:%s53] %v324
        %v326 = vld [vmem:[%s60 + $0x210] sm:%s53]
        %327 = vst [vmem:[%s61 + $0x210] sm:%s53] %v326
        %v328 = vld [vmem:[%s60 + $0x218] sm:%s53]
        %329 = vst [vmem:[%s61 + $0x214] sm:%s53] %v328
        %v330 = vld [vmem:[%s60 + $0x214] sm:%s53]
        %331 = vst [vmem:[%s61 + $0x218] sm:%s53] %v330
        %v332 = vld [vmem:[%s60 + $0x21c] sm:%s53]
        %333 = vst [vmem:[%s61 + $0x21c] sm:%s53] %v332
        %v334 = vld [vmem:[%s60 + $0x220] sm:%s53]
        %335 = vst [vmem:[%s61 + $0x220] sm:%s53] %v334
        %v336 = vld [vmem:[%s60 + $0x228] sm:%s53]
        %337 = vst [vmem:[%s61 + $0x224] sm:%s53] %v336
        %v338 = vld [vmem:[%s60 + $0x224] sm:%s53]
        %339 = vst [vmem:[%s61 + $0x228] sm:%s53] %v338
        %v340 = vld [vmem:[%s60 + $0x22c] sm:%s53]
        %341 = vst [vmem:[%s61 + $0x22c] sm:%s53] %v340
        %v342 = vld [vmem:[%s60 + $0x230] sm:%s53]
        %343 = vst [vmem:[%s61 + $0x230] sm:%s53] %v342
        %v344 = vld [vmem:[%s60 + $0x238] sm:%s53]
        %345 = vst [vmem:[%s61 + $0x234] sm:%s53] %v344
        %v346 = vld [vmem:[%s60 + $0x234] sm:%s53]
        %347 = vst [vmem:[%s61 + $0x238] sm:%s53] %v346
        %v348 = vld [vmem:[%s60 + $0x23c] sm:%s53]
        %349 = vst [vmem:[%s61 + $0x23c] sm:%s53] %v348
        %v350 = vld [vmem:[%s60 + $0x240] sm:%s53]
        %351 = vst [vmem:[%s61 + $0x240] sm:%s53] %v350
        %v352 = vld [vmem:[%s60 + $0x248] sm:%s53]
        %353 = vst [vmem:[%s61 + $0x244] sm:%s53] %v352
        %v354 = vld [vmem:[%s60 + $0x244] sm:%s53]
        %355 = vst [vmem:[%s61 + $0x248] sm:%s53] %v354
        %v356 = vld [vmem:[%s60 + $0x24c] sm:%s53]
        %357 = vst [vmem:[%s61 + $0x24c] sm:%s53] %v356
        %v358 = vld [vmem:[%s60 + $0x250] sm:%s53]
        %359 = vst [vmem:[%s61 + $0x250] sm:%s53] %v358
        %v360 = vld [vmem:[%s60 + $0x258] sm:%s53]
        %361 = vst [vmem:[%s61 + $0x254] sm:%s53] %v360
        %v362 = vld [vmem:[%s60 + $0x254] sm:%s53]
        %363 = vst [vmem:[%s61 + $0x258] sm:%s53] %v362
        %v364 = vld [vmem:[%s60 + $0x25c] sm:%s53]
        %365 = vst [vmem:[%s61 + $0x25c] sm:%s53] %v364
        %v366 = vld [vmem:[%s60 + $0x260] sm:%s53]
        %367 = vst [vmem:[%s61 + $0x260] sm:%s53] %v366
        %v368 = vld [vmem:[%s60 + $0x268] sm:%s53]
        %369 = vst [vmem:[%s61 + $0x264] sm:%s53] %v368
        %v370 = vld [vmem:[%s60 + $0x264] sm:%s53]
        %371 = vst [vmem:[%s61 + $0x268] sm:%s53] %v370
        %v372 = vld [vmem:[%s60 + $0x26c] sm:%s53]
        %373 = vst [vmem:[%s61 + $0x26c] sm:%s53] %v372
        %v374 = vld [vmem:[%s60 + $0x270] sm:%s53]
        %375 = vst [vmem:[%s61 + $0x270] sm:%s53] %v374
        %v376 = vld [vmem:[%s60 + $0x278] sm:%s53]
        %377 = vst [vmem:[%s61 + $0x274] sm:%s53] %v376
        %v378 = vld [vmem:[%s60 + $0x274] sm:%s53]
        %379 = vst [vmem:[%s61 + $0x278] sm:%s53] %v378
        %v380 = vld [vmem:[%s60 + $0x27c] sm:%s53]
        %381 = vst [vmem:[%s61 + $0x27c] sm:%s53] %v380
        %v382 = vld [vmem:[%s60 + $0x280] sm:%s53]
        %383 = vst [vmem:[%s61 + $0x280] sm:%s53] %v382
        %v384 = vld [vmem:[%s60 + $0x288] sm:%s53]
        %385 = vst [vmem:[%s61 + $0x284] sm:%s53] %v384
        %v386 = vld [vmem:[%s60 + $0x284] sm:%s53]
        %387 = vst [vmem:[%s61 + $0x288] sm:%s53] %v386
        %v388 = vld [vmem:[%s60 + $0x28c] sm:%s53]
        %389 = vst [vmem:[%s61 + $0x28c] sm:%s53] %v388
        %v390 = vld [vmem:[%s60 + $0x290] sm:%s53]
        %391 = vst [vmem:[%s61 + $0x290] sm:%s53] %v390
        %v392 = vld [vmem:[%s60 + $0x298] sm:%s53]
        %393 = vst [vmem:[%s61 + $0x294] sm:%s53] %v392
        %v394 = vld [vmem:[%s60 + $0x294] sm:%s53]
        %395 = vst [vmem:[%s61 + $0x298] sm:%s53] %v394
        %v396 = vld [vmem:[%s60 + $0x29c] sm:%s53]
        %397 = vst [vmem:[%s61 + $0x29c] sm:%s53] %v396
        %v398 = vld [vmem:[%s60 + $0x2a0] sm:%s53]
        %399 = vst [vmem:[%s61 + $0x2a0] sm:%s53] %v398
        %v400 = vld [vmem:[%s60 + $0x2a8] sm:%s53]
        %401 = vst [vmem:[%s61 + $0x2a4] sm:%s53] %v400
        %v402 = vld [vmem:[%s60 + $0x2a4] sm:%s53]
        %403 = vst [vmem:[%s61 + $0x2a8] sm:%s53] %v402
        %v404 = vld [vmem:[%s60 + $0x2ac] sm:%s53]
        %405 = vst [vmem:[%s61 + $0x2ac] sm:%s53] %v404
        %v406 = vld [vmem:[%s60 + $0x2b0] sm:%s53]
        %407 = vst [vmem:[%s61 + $0x2b0] sm:%s53] %v406
        %v408 = vld [vmem:[%s60 + $0x2b8] sm:%s53]
        %409 = vst [vmem:[%s61 + $0x2b4] sm:%s53] %v408
        %v410 = vld [vmem:[%s60 + $0x2b4] sm:%s53]
        %411 = vst [vmem:[%s61 + $0x2b8] sm:%s53] %v410
        %v412 = vld [vmem:[%s60 + $0x2bc] sm:%s53]
        %413 = vst [vmem:[%s61 + $0x2bc] sm:%s53] %v412
        %v414 = vld [vmem:[%s60 + $0x2c0] sm:%s53]
        %415 = vst [vmem:[%s61 + $0x2c0] sm:%s53] %v414
        %v416 = vld [vmem:[%s60 + $0x2c8] sm:%s53]
        %417 = vst [vmem:[%s61 + $0x2c4] sm:%s53] %v416
        %v418 = vld [vmem:[%s60 + $0x2c4] sm:%s53]
        %419 = vst [vmem:[%s61 + $0x2c8] sm:%s53] %v418
        %v420 = vld [vmem:[%s60 + $0x2cc] sm:%s53]
        %421 = vst [vmem:[%s61 + $0x2cc] sm:%s53] %v420
        %v422 = vld [vmem:[%s60 + $0x2d0] sm:%s53]
        %423 = vst [vmem:[%s61 + $0x2d0] sm:%s53] %v422
        %v424 = vld [vmem:[%s60 + $0x2d8] sm:%s53]
        %425 = vst [vmem:[%s61 + $0x2d4] sm:%s53] %v424
        %v426 = vld [vmem:[%s60 + $0x2d4] sm:%s53]
        %427 = vst [vmem:[%s61 + $0x2d8] sm:%s53] %v426
        %v428 = vld [vmem:[%s60 + $0x2dc] sm:%s53]
        %429 = vst [vmem:[%s61 + $0x2dc] sm:%s53] %v428
        %v430 = vld [vmem:[%s60 + $0x2e0] sm:%s53]
        %431 = vst [vmem:[%s61 + $0x2e0] sm:%s53] %v430
        %v432 = vld [vmem:[%s60 + $0x2e8] sm:%s53]
        %433 = vst [vmem:[%s61 + $0x2e4] sm:%s53] %v432
        %v434 = vld [vmem:[%s60 + $0x2e4] sm:%s53]
        %435 = vst [vmem:[%s61 + $0x2e8] sm:%s53] %v434
        %v436 = vld [vmem:[%s60 + $0x2ec] sm:%s53]
        %437 = vst [vmem:[%s61 + $0x2ec] sm:%s53] %v436
        %v438 = vld [vmem:[%s60 + $0x2f0] sm:%s53]
        %439 = vst [vmem:[%s61 + $0x2f0] sm:%s53] %v438
        %v440 = vld [vmem:[%s60 + $0x2f8] sm:%s53]
        %441 = vst [vmem:[%s61 + $0x2f4] sm:%s53] %v440
        %v442 = vld [vmem:[%s60 + $0x2f4] sm:%s53]
        %443 = vst [vmem:[%s61 + $0x2f8] sm:%s53] %v442
        %v444 = vld [vmem:[%s60 + $0x2fc] sm:%s53]
        %445 = vst [vmem:[%s61 + $0x2fc] sm:%s53] %v444
      $region46: #{netto_forward.1} parent=40 // loop_footer
        %s59 = sadd.s32 1, %s55
      $region47: #{netto_forward.1} parent=40 // loop_footer_branch
        %54 = sbr.rel target = $region43
      $region48: #{netto_forward.1} parent=40 // loop_exit
        _
    $region41: #{netto_forward.1} parent=1 // pred_fallthru
      _
    // Predicated region
    $region67: #{netto_forward.1} parent=1 // pred_check
      _
    $region68: #{netto_forward.1} parent=1 // pred_check_branch
      %859 = sbr.rel (0) target = $region70
    $region69: #{netto_forward.1} parent=1 // pred_region
      %860 = vsyncadd [#allocation6], 12288
    $region70: #{netto_forward.1} parent=1 // pred_fallthru
      _
    %s861 = scalar_lea.sflag [#allocation6], 1
    // Predicated region
    $region71: #{netto_forward.1} parent=1 // pred_check
      _
    $region72: #{netto_forward.1} parent=1 // pred_check_branch
      %863 = sbr.rel target = $region74
    $region73: #{netto_forward.1} parent=1 // pred_region
      %864 = sst [smem:[#allocation12]] [#allocation11]
      %865 = sst [smem:[#allocation13]] [#allocation10]
    $region74: #{netto_forward.1} parent=1 // pred_fallthru
      _
    %867 = shalt.err (0)
    %s869 = sshll.u32 [#allocation3], 4
    %s870 = int_to_ptr.vmem [resolvable:$true] %s869
    %872 = dma.hbm_to_vmem [thread:$0]  %s8, 2048, %s870, %s861
    %s873 = scalar_lea.sflag [#allocation6], 2
    %p875 = scmp.lt.u32.totalorder 64, 8
    %p876 = pneg %p875
    // Predicated region
    $region75: #{netto_forward.1} parent=1 // pred_check
      _
    $region76: #{netto_forward.1} parent=1 // pred_check_branch
      %878 = sbr.rel (%p875) target = $region78
    $region77: #{netto_forward.1} parent=1 // pred_region
      %s893 = sand.u32 64, 7
      %p894 = scmp.eq.s32.totalorder %s893, 0
      // Predicated region
      $region90: #{netto_forward.1} parent=77 // pred_check
        %p895 = pneg %p894
      $region91: #{netto_forward.1} parent=77 // pred_check_branch
        %897 = sbr.rel (%p895) target = $region93
      $region92: #{netto_forward.1} parent=77 // pred_region
        loop: start=0, step=1, limit=1
        $region94: #{netto_forward.1} parent=92 // loop_pre_header
          _
        $region95: #{netto_forward.1} parent=92 // loop_header
          %s899 = sphi 0, %s903
          %p900 = scmp.ge.s32.totalorder %s899, 1
          %s904 = sphi %s9, %s9
          %s905 = sphi [#allocation4], [#allocation4]
        $region96: #{netto_forward.1} parent=92 // loop_header_branch
          %902 = sbr.rel (%p900) target = $region100
        $region97: #{netto_forward.1} parent=92 // loop_body
          %v906 = vld [vmem:[%s904] sm:$0xff]
          %907 = vst [vmem:[%s905] sm:$0xff] %v906
          %v908 = vld [vmem:[%s904 + $0x8] sm:$0xff]
          %909 = vst [vmem:[%s905 + $0x8] sm:$0xff] %v908
          %v910 = vld [vmem:[%s904 + $0x10] sm:$0xff]
          %911 = vst [vmem:[%s905 + $0x10] sm:$0xff] %v910
          %v912 = vld [vmem:[%s904 + $0x18] sm:$0xff]
          %913 = vst [vmem:[%s905 + $0x18] sm:$0xff] %v912
          %v914 = vld [vmem:[%s904 + $0x20] sm:$0xff]
          %915 = vst [vmem:[%s905 + $0x20] sm:$0xff] %v914
          %v916 = vld [vmem:[%s904 + $0x28] sm:$0xff]
          %917 = vst [vmem:[%s905 + $0x28] sm:$0xff] %v916
          %v918 = vld [vmem:[%s904 + $0x30] sm:$0xff]
          %919 = vst [vmem:[%s905 + $0x30] sm:$0xff] %v918
          %v920 = vld [vmem:[%s904 + $0x38] sm:$0xff]
          %921 = vst [vmem:[%s905 + $0x38] sm:$0xff] %v920
        $region98: #{netto_forward.1} parent=92 // loop_footer
          %s903 = sadd.s32 1, %s899
        $region99: #{netto_forward.1} parent=92 // loop_footer_branch
          %898 = sbr.rel target = $region95
        $region100: #{netto_forward.1} parent=92 // loop_exit
          _
      $region93: #{netto_forward.1} parent=77 // pred_fallthru
        _
      %p922 = pneg %p894
      // Predicated region
      $region101: #{netto_forward.1} parent=77 // pred_check
        _
      $region102: #{netto_forward.1} parent=77 // pred_check_branch
        %924 = sbr.rel (%p894) target = $region104
      $region103: #{netto_forward.1} parent=77 // pred_region
        %s925 = sand.u32 64, 7
      $region104: #{netto_forward.1} parent=77 // pred_fallthru
        _
    $region78: #{netto_forward.1} parent=1 // pred_fallthru
      _
    // Predicated region
    $region79: #{netto_forward.1} parent=1 // pred_check
      %p879 = pneg %p875
    $region80: #{netto_forward.1} parent=1 // pred_check_branch
      %881 = sbr.rel (%p879) target = $region82
    $region81: #{netto_forward.1} parent=1 // pred_region
      %s882 = sshllo.u32 0, 64
      loop: start=0, step=1, limit=1
      $region83: #{netto_forward.1} parent=81 // loop_pre_header
        _
      $region84: #{netto_forward.1} parent=81 // loop_header
        %s884 = sphi 0, %s888
        %p885 = scmp.ge.s32.totalorder %s884, 1
        %s889 = sphi %s9, %s9
        %s890 = sphi [#allocation4], [#allocation4]
      $region85: #{netto_forward.1} parent=81 // loop_header_branch
        %887 = sbr.rel (%p885) target = $region89
      $region86: #{netto_forward.1} parent=81 // loop_body
        %v891 = vld [vmem:[%s889] sm:%s882]
        %892 = vst [vmem:[%s890] sm:%s882] %v891
      $region87: #{netto_forward.1} parent=81 // loop_footer
        %s888 = sadd.s32 1, %s884
      $region88: #{netto_forward.1} parent=81 // loop_footer_branch
        %883 = sbr.rel target = $region84
      $region89: #{netto_forward.1} parent=81 // loop_exit
        _
    $region82: #{netto_forward.1} parent=1 // pred_fallthru
      _
    // Predicated region
    $region105: #{netto_forward.1} parent=1 // pred_check
      _
    $region106: #{netto_forward.1} parent=1 // pred_check_branch
      %928 = sbr.rel (0) target = $region108
    $region107: #{netto_forward.1} parent=1 // pred_region
      %929 = vsyncadd %s873, 1024
    $region108: #{netto_forward.1} parent=1 // pred_fallthru
      _
    %s930 = scalar_lea.sflag [#allocation6], 3
    // Predicated region
    $region109: #{netto_forward.1} parent=1 // pred_check
      _
    $region110: #{netto_forward.1} parent=1 // pred_check_branch
      %932 = sbr.rel target = $region112
    $region111: #{netto_forward.1} parent=1 // pred_region
      %933 = sst [smem:[#allocation12]] [#allocation16]
      %934 = sst [smem:[#allocation13]] [#allocation15]
    $region112: #{netto_forward.1} parent=1 // pred_fallthru
      _
    %936 = shalt.err (0)
    %s938 = sshll.u32 [#allocation5], 4
    %s939 = int_to_ptr.vmem [resolvable:$true] %s938
    %941 = dma.hbm_to_vmem [thread:$0]  %s10, 1024, %s939, %s930
    %v942 = vld [vmem:[%s0] sm:$0xff]
    %v943 = vld [vmem:[%s0 + $0x8] sm:$0xff]
    %v944 = vld [vmem:[%s0 + $0x10] sm:$0xff]
    %v945 = vld [vmem:[%s0 + $0x18] sm:$0xff]
    %v946 = vld [vmem:[%s0 + $0x20] sm:$0xff]
    %v947 = vld [vmem:[%s0 + $0x28] sm:$0xff]
    %v948 = vld [vmem:[%s0 + $0x30] sm:$0xff]
    %v949 = vld [vmem:[%s0 + $0x38] sm:$0xff]
    %v950 = vld [vmem:[%s0 + $0x40] sm:$0xff]
    %v951 = vld [vmem:[%s0 + $0x48] sm:$0xff]
    %v952 = vld [vmem:[%s0 + $0x50] sm:$0xff]
    %v953 = vld [vmem:[%s0 + $0x58] sm:$0xff]
    %v954 = vld [vmem:[%s0 + $0x60] sm:$0xff]
    %v955 = vld [vmem:[%s0 + $0x68] sm:$0xff]
    %v956 = vld [vmem:[%s0 + $0x70] sm:$0xff]
    %v957 = vld [vmem:[%s0 + $0x78] sm:$0xff]
    %v958 = vld [vmem:[%s0 + $0x80] sm:$0xff]
    %v959 = vld [vmem:[%s0 + $0x88] sm:$0xff]
    %v960 = vld [vmem:[%s0 + $0x90] sm:$0xff]
    %v961 = vld [vmem:[%s0 + $0x98] sm:$0xff]
    %v962 = vld [vmem:[%s0 + $0xa0] sm:$0xff]
    %v963 = vld [vmem:[%s0 + $0xa8] sm:$0xff]
    %v964 = vld [vmem:[%s0 + $0xb0] sm:$0xff]
    %v965 = vld [vmem:[%s0 + $0xb8] sm:$0xff]
    %v966 = vld [vmem:[%s0 + $0xc0] sm:$0xff]
    %v967 = vld [vmem:[%s0 + $0xc8] sm:$0xff]
    %v968 = vld [vmem:[%s0 + $0xd0] sm:$0xff]
    %v969 = vld [vmem:[%s0 + $0xd8] sm:$0xff]
    %v970 = vpack.c.bf16 %v943, %v942
    %v971 = vpack.c.bf16 %v945, %v944
    %v972 = vpack.c.bf16 %v947, %v946
    %v973 = vpack.c.bf16 %v949, %v948
    %v974 = vpack.c.bf16 %v951, %v950
    %v975 = vpack.c.bf16 %v953, %v952
    %v976 = vpack.c.bf16 %v955, %v954
    %v977 = vpack.c.bf16 %v957, %v956
    %v978 = vpack.c.bf16 %v959, %v958
    %v979 = vpack.c.bf16 %v961, %v960
    %v980 = vpack.c.bf16 %v963, %v962
    %v981 = vpack.c.bf16 %v965, %v964
    %v982 = vld [vmem:[#allocation7] sm:$0xff]
    %v983 = vld [vmem:[#allocation7 + $0x8] sm:$0xff]
    %v984 = vld [vmem:[#allocation7 + $0x10] sm:$0xff]
    %v985 = vld [vmem:[#allocation7 + $0x18] sm:$0xff]
    %v986 = vpack.c.bf16 %v944, %v943
    %v987 = vpack.c.bf16 %v946, %v945
    %v988 = vpack.c.bf16 %v948, %v947
    %v989 = vpack.c.bf16 %v950, %v949
    %v990 = vpack.c.bf16 %v952, %v951
    %v991 = vpack.c.bf16 %v954, %v953
    %v992 = vpack.c.bf16 %v956, %v955
    %v993 = vpack.c.bf16 %v958, %v957
    %v994 = vpack.c.bf16 %v960, %v959
    %v995 = vpack.c.bf16 %v962, %v961
    %v996 = vpack.c.bf16 %v964, %v963
    %v997 = vpack.c.bf16 %v966, %v965
    %s998 = scalar_lea.vmem [#allocation7], 32
    %v999 = vld [vmem:[%s998] sm:$0xff]
    %v1000 = vld [vmem:[%s998 + $0x8] sm:$0xff]
    %v1001 = vld [vmem:[%s998 + $0x10] sm:$0xff]
    %v1002 = vld [vmem:[%s998 + $0x18] sm:$0xff]
    %v1007 = vunpack.c.l.b16 %v999
    %v1008 = vunpack.c.h.b16 %v999
    %v1009 = vunpack.c.l.b16 %v1000
    %v1010 = vunpack.c.h.b16 %v1000
    %v1011 = vunpack.c.l.b16 %v1001
    %v1012 = vunpack.c.h.b16 %v1001
    %v1013 = vunpack.c.l.b16 %v1002
    %v1014 = vunpack.c.h.b16 %v1002
    %v1015 = vpack.c.b16 %v1009, %v1007
    %v1016 = vpack.c.b16 %v1010, %v1008
    %v1017 = vpack.c.b16 %v1013, %v1011
    %v1018 = vpack.c.b16 %v1014, %v1012
    %vm1023 = vcmask 261120
    %v1025 = vsel %vm1023, %v986, 0
    %v1028 = vsel %vm1023, %v987, 0
    %v1031 = vsel %vm1023, %v988, 0
    %v1034 = vsel %vm1023, %v989, 0
    %v1037 = vsel %vm1023, %v990, 0
    %v1040 = vsel %vm1023, %v991, 0
    %v1043 = vsel %vm1023, %v992, 0
    %v1046 = vsel %vm1023, %v993, 0
    %v1049 = vsel %vm1023, %v994, 0
    %v1052 = vsel %vm1023, %v995, 0
    %v1055 = vsel %vm1023, %v996, 0
    %v1058 = vsel %vm1023, %v997, 0
    %1060 = vmatprep.subr.bf16.mxu0 %v1016
    %1061 = vmatpush1.bf16.msra.mxu0 %v1015
    %1062 = vmatprep.subr.bf16.mxu0 %v1018
    %1063 = vmatpush1.bf16.msra.mxu0 %v1017
    %1064 = vmatprep.subr.bf16.mxu0 0
    %1065 = vmatpush1.bf16.msra.mxu0 0
    %1066 = vmatprep.subr.bf16.mxu0 0
    %1067 = vmatpush1.bf16.msra.mxu0 0
    %1068 = vmatprep.subr.bf16.mxu0 0
    %1069 = vmatpush1.bf16.msra.mxu0 0
    %1070 = vmatprep.subr.bf16.mxu0 0
    %1071 = vmatpush1.bf16.msra.mxu0 0
    %1072 = vmatprep.subr.bf16.mxu0 0
    %1073 = vmatpush1.bf16.msra.mxu0 0
    %1074 = vmatprep.subr.bf16.mxu0 0
    %1075 = vmatpush1.bf16.msra.mxu0 0
    %1076 = vmatprep.subr.bf16.mxu0 0
    %1077 = vmatpush1.bf16.msra.mxu0 0
    %1078 = vmatprep.subr.bf16.mxu0 0
    %1079 = vmatpush1.bf16.msra.mxu0 0
    %1080 = vmatprep.subr.bf16.mxu0 0
    %1081 = vmatpush1.bf16.msra.mxu0 0
    %1082 = vmatprep.subr.bf16.mxu0 0
    %1083 = vmatpush1.bf16.msra.mxu0 0
    %1084 = vmatprep.subr.bf16.mxu0 0
    %1085 = vmatpush1.bf16.msra.mxu0 0
    %1086 = vmatprep.subr.bf16.mxu0 0
    %1087 = vmatpush1.bf16.msra.mxu0 0
    %1088 = vmatprep.subr.bf16.mxu0 0
    %1089 = vmatpush1.bf16.msra.mxu0 0
    %1090 = vmatprep.subr.bf16.mxu0 0
    %1091 = vmatpush1.bf16.msra.mxu0 0
    %1092 = vmatprep.mubr.bf16.mxu0 0
    %1093 = vmatmul.mubr.bf16.gmra.mrb[0].mxu0 %v1025
    %v1094 = vpop.f32.mrb[0].mxu0
    %v1095 = vadd.f32 0.0, %v1094
    %v1096 = vpop.f32.mrb[0].mxu0
    %v1097 = vadd.f32 0.0, %v1096
    %v1098 = vpop.f32.mrb[0].mxu0
    %v1099 = vadd.f32 0.0, %v1098
    %v1100 = vpop.f32.mrb[0].mxu0
    %v1101 = vadd.f32 0.0, %v1100
    %1102 = vmatprep.mubr.bf16.mxu0 0
    %1103 = vmatmul.mubr.bf16.gmra.mrb[0].mxu0 %v1028
    %v1104 = vpop.f32.mrb[0].mxu0
    %v1105 = vadd.f32 0.0, %v1104
    %v1106 = vpop.f32.mrb[0].mxu0
    %v1107 = vadd.f32 0.0, %v1106
    %v1108 = vpop.f32.mrb[0].mxu0
    %v1109 = vadd.f32 0.0, %v1108
    %v1110 = vpop.f32.mrb[0].mxu0
    %v1111 = vadd.f32 0.0, %v1110
    %1112 = vmatprep.mubr.bf16.mxu0 0
    %1113 = vmatmul.mubr.bf16.gmra.mrb[0].mxu0 %v1031
    %v1114 = vpop.f32.mrb[0].mxu0
    %v1115 = vadd.f32 0.0, %v1114
    %v1116 = vpop.f32.mrb[0].mxu0
    %v1117 = vadd.f32 0.0, %v1116
    %v1118 = vpop.f32.mrb[0].mxu0
    %v1119 = vadd.f32 0.0, %v1118
    %v1120 = vpop.f32.mrb[0].mxu0
    %v1121 = vadd.f32 0.0, %v1120
    %1122 = vmatprep.mubr.bf16.mxu0 0
    %1123 = vmatmul.mubr.bf16.gmra.mrb[0].mxu0 %v1034
    %v1124 = vpop.f32.mrb[0].mxu0
    %v1125 = vadd.f32 0.0, %v1124
    %v1126 = vpop.f32.mrb[0].mxu0
    %v1127 = vadd.f32 0.0, %v1126
    %v1128 = vpop.f32.mrb[0].mxu0
    %v1129 = vadd.f32 0.0, %v1128
    %v1130 = vpop.f32.mrb[0].mxu0
    %v1131 = vadd.f32 0.0, %v1130
    %1132 = vmatprep.mubr.bf16.mxu0 0
    %1133 = vmatmul.mubr.bf16.gmra.mrb[0].mxu0 %v1037
    %v1134 = vpop.f32.mrb[0].mxu0
    %v1135 = vadd.f32 0.0, %v1134
    %v1136 = vpop.f32.mrb[0].mxu0
    %v1137 = vadd.f32 0.0, %v1136
    %v1138 = vpop.f32.mrb[0].mxu0
    %v1139 = vadd.f32 0.0, %v1138
    %v1140 = vpop.f32.mrb[0].mxu0
    %v1141 = vadd.f32 0.0, %v1140
    %1142 = vmatprep.mubr.bf16.mxu0 0
    %1143 = vmatmul.mubr.bf16.gmra.mrb[0].mxu0 %v1040
    %v1144 = vpop.f32.mrb[0].mxu0
    %v1145 = vadd.f32 0.0, %v1144
    %v1146 = vpop.f32.mrb[0].mxu0
    %v1147 = vadd.f32 0.0, %v1146
    %v1148 = vpop.f32.mrb[0].mxu0
    %v1149 = vadd.f32 0.0, %v1148
    %v1150 = vpop.f32.mrb[0].mxu0
    %v1151 = vadd.f32 0.0, %v1150
    %1152 = vmatprep.mubr.bf16.mxu0 0
    %1153 = vmatmul.mubr.bf16.gmra.mrb[0].mxu0 %v1043
    %v1154 = vpop.f32.mrb[0].mxu0
    %v1155 = vadd.f32 0.0, %v1154
    %v1156 = vpop.f32.mrb[0].mxu0
    %v1157 = vadd.f32 0.0, %v1156
    %v1158 = vpop.f32.mrb[0].mxu0
    %v1159 = vadd.f32 0.0, %v1158
    %v1160 = vpop.f32.mrb[0].mxu0
    %v1161 = vadd.f32 0.0, %v1160
    %1162 = vmatprep.mubr.bf16.mxu0 0
    %1163 = vmatmul.mubr.bf16.gmra.mrb[0].mxu0 %v1046
    %v1164 = vpop.f32.mrb[0].mxu0
    %v1165 = vadd.f32 0.0, %v1164
    %v1166 = vpop.f32.mrb[0].mxu0
    %v1167 = vadd.f32 0.0, %v1166
    %v1168 = vpop.f32.mrb[0].mxu0
    %v1169 = vadd.f32 0.0, %v1168
    %v1170 = vpop.f32.mrb[0].mxu0
    %v1171 = vadd.f32 0.0, %v1170
    %1172 = vmatprep.mubr.bf16.mxu0 0
    %1173 = vmatmul.mubr.bf16.gmra.mrb[0].mxu0 %v1049
    %v1174 = vpop.f32.mrb[0].mxu0
    %v1175 = vadd.f32 0.0, %v1174
    %v1176 = vpop.f32.mrb[0].mxu0
    %v1177 = vadd.f32 0.0, %v1176
    %v1178 = vpop.f32.mrb[0].mxu0
    %v1179 = vadd.f32 0.0, %v1178
    %v1180 = vpop.f32.mrb[0].mxu0
    %v1181 = vadd.f32 0.0, %v1180
    %1182 = vmatprep.mubr.bf16.mxu0 0
    %1183 = vmatmul.mubr.bf16.gmra.mrb[0].mxu0 %v1052
    %v1184 = vpop.f32.mrb[0].mxu0
    %v1185 = vadd.f32 0.0, %v1184
    %v1186 = vpop.f32.mrb[0].mxu0
    %v1187 = vadd.f32 0.0, %v1186
    %v1188 = vpop.f32.mrb[0].mxu0
    %v1189 = vadd.f32 0.0, %v1188
    %v1190 = vpop.f32.mrb[0].mxu0
    %v1191 = vadd.f32 0.0, %v1190
    %1192 = vmatprep.mubr.bf16.mxu0 0
    %1193 = vmatmul.mubr.bf16.gmra.mrb[0].mxu0 %v1055
    %v1194 = vpop.f32.mrb[0].mxu0
    %v1195 = vadd.f32 0.0, %v1194
    %v1196 = vpop.f32.mrb[0].mxu0
    %v1197 = vadd.f32 0.0, %v1196
    %v1198 = vpop.f32.mrb[0].mxu0
    %v1199 = vadd.f32 0.0, %v1198
    %v1200 = vpop.f32.mrb[0].mxu0
    %v1201 = vadd.f32 0.0, %v1200
    %1202 = vmatprep.mubr.bf16.mxu0 0
    %1203 = vmatmul.mubr.bf16.gmra.mrb[0].mxu0 %v1058
    %v1204 = vpop.f32.mrb[0].mxu0
    %v1205 = vadd.f32 0.0, %v1204
    %v1206 = vpop.f32.mrb[0].mxu0
    %v1207 = vadd.f32 0.0, %v1206
    %v1208 = vpop.f32.mrb[0].mxu0
    %v1209 = vadd.f32 0.0, %v1208
    %v1210 = vpop.f32.mrb[0].mxu0
    %v1211 = vadd.f32 0.0, %v1210
    %1212 = vdwg.mxu0
    %v1217 = vunpack.c.l.b16 %v982
    %v1218 = vunpack.c.h.b16 %v982
    %v1219 = vunpack.c.l.b16 %v983
    %v1220 = vunpack.c.h.b16 %v983
    %v1221 = vunpack.c.l.b16 %v984
    %v1222 = vunpack.c.h.b16 %v984
    %v1223 = vunpack.c.l.b16 %v985
    %v1224 = vunpack.c.h.b16 %v985
    %v1225 = vpack.c.b16 %v1219, %v1217
    %v1226 = vpack.c.b16 %v1220, %v1218
    %v1227 = vpack.c.b16 %v1223, %v1221
    %v1228 = vpack.c.b16 %v1224, %v1222
    %v1234 = vsel %vm1023, %v970, 0
    %v1237 = vsel %vm1023, %v971, 0
    %v1240 = vsel %vm1023, %v972, 0
    %v1243 = vsel %vm1023, %v973, 0
    %v1246 = vsel %vm1023, %v974, 0
    %v1249 = vsel %vm1023, %v975, 0
    %v1252 = vsel %vm1023, %v976, 0
    %v1255 = vsel %vm1023, %v977, 0
    %v1258 = vsel %vm1023, %v978, 0
    %v1261 = vsel %vm1023, %v979, 0
    %v1264 = vsel %vm1023, %v980, 0
    %v1267 = vsel %vm1023, %v981, 0
    %1269 = vmatprep.subr.bf16.mxu0 %v1226
    %1270 = vmatpush1.bf16.msra.mxu0 %v1225
    %1271 = vmatprep.subr.bf16.mxu0 %v1228
    %1272 = vmatpush1.bf16.msra.mxu0 %v1227
    %1273 = vmatprep.subr.bf16.mxu0 0
    %1274 = vmatpush1.bf16.msra.mxu0 0
    %1275 = vmatprep.subr.bf16.mxu0 0
    %1276 = vmatpush1.bf16.msra.mxu0 0
    %1277 = vmatprep.subr.bf16.mxu0 0
    %1278 = vmatpush1.bf16.msra.mxu0 0
    %1279 = vmatprep.subr.bf16.mxu0 0
    %1280 = vmatpush1.bf16.msra.mxu0 0
    %1281 = vmatprep.subr.bf16.mxu0 0
    %1282 = vmatpush1.bf16.msra.mxu0 0
    %1283 = vmatprep.subr.bf16.mxu0 0
    %1284 = vmatpush1.bf16.msra.mxu0 0
    %1285 = vmatprep.subr.bf16.mxu0 0
    %1286 = vmatpush1.bf16.msra.mxu0 0
    %1287 = vmatprep.subr.bf16.mxu0 0
    %1288 = vmatpush1.bf16.msra.mxu0 0
    %1289 = vmatprep.subr.bf16.mxu0 0
    %1290 = vmatpush1.bf16.msra.mxu0 0
    %1291 = vmatprep.subr.bf16.mxu0 0
    %1292 = vmatpush1.bf16.msra.mxu0 0
    %1293 = vmatprep.subr.bf16.mxu0 0
    %1294 = vmatpush1.bf16.msra.mxu0 0
    %1295 = vmatprep.subr.bf16.mxu0 0
    %1296 = vmatpush1.bf16.msra.mxu0 0
    %1297 = vmatprep.subr.bf16.mxu0 0
    %1298 = vmatpush1.bf16.msra.mxu0 0
    %1299 = vmatprep.subr.bf16.mxu0 0
    %1300 = vmatpush1.bf16.msra.mxu0 0
    %1301 = vmatprep.mubr.bf16.mxu0 0
    %1302 = vmatmul.mubr.bf16.gmra.mrb[0].mxu0 %v1234
    %v1303 = vpop.f32.mrb[0].mxu0
    %v1304 = vadd.f32 %v1095, %v1303
    %v1305 = vpop.f32.mrb[0].mxu0
    %v1306 = vadd.f32 %v1097, %v1305
    %v1307 = vpop.f32.mrb[0].mxu0
    %v1308 = vadd.f32 %v1099, %v1307
    %v1309 = vpop.f32.mrb[0].mxu0
    %v1310 = vadd.f32 %v1101, %v1309
    %1311 = vmatprep.mubr.bf16.mxu0 0
    %1312 = vmatmul.mubr.bf16.gmra.mrb[0].mxu0 %v1237
    %v1313 = vpop.f32.mrb[0].mxu0
    %v1314 = vadd.f32 %v1105, %v1313
    %v1315 = vpop.f32.mrb[0].mxu0
    %v1316 = vadd.f32 %v1107, %v1315
    %v1317 = vpop.f32.mrb[0].mxu0
    %v1318 = vadd.f32 %v1109, %v1317
    %v1319 = vpop.f32.mrb[0].mxu0
    %v1320 = vadd.f32 %v1111, %v1319
    %1321 = vmatprep.mubr.bf16.mxu0 0
    %1322 = vmatmul.mubr.bf16.gmra.mrb[0].mxu0 %v1240
    %v1323 = vpop.f32.mrb[0].mxu0
    %v1324 = vadd.f32 %v1115, %v1323
    %v1325 = vpop.f32.mrb[0].mxu0
    %v1326 = vadd.f32 %v1117, %v1325
    %v1327 = vpop.f32.mrb[0].mxu0
    %v1328 = vadd.f32 %v1119, %v1327
    %v1329 = vpop.f32.mrb[0].mxu0
    %v1330 = vadd.f32 %v1121, %v1329
    %1331 = vmatprep.mubr.bf16.mxu0 0
    %1332 = vmatmul.mubr.bf16.gmra.mrb[0].mxu0 %v1243
    %v1333 = vpop.f32.mrb[0].mxu0
    %v1334 = vadd.f32 %v1125, %v1333
    %v1335 = vpop.f32.mrb[0].mxu0
    %v1336 = vadd.f32 %v1127, %v1335
    %v1337 = vpop.f32.mrb[0].mxu0
    %v1338 = vadd.f32 %v1129, %v1337
    %v1339 = vpop.f32.mrb[0].mxu0
    %v1340 = vadd.f32 %v1131, %v1339
    %1341 = vmatprep.mubr.bf16.mxu0 0
    %1342 = vmatmul.mubr.bf16.gmra.mrb[0].mxu0 %v1246
    %v1343 = vpop.f32.mrb[0].mxu0
    %v1344 = vadd.f32 %v1135, %v1343
    %v1345 = vpop.f32.mrb[0].mxu0
    %v1346 = vadd.f32 %v1137, %v1345
    %v1347 = vpop.f32.mrb[0].mxu0
    %v1348 = vadd.f32 %v1139, %v1347
    %v1349 = vpop.f32.mrb[0].mxu0
    %v1350 = vadd.f32 %v1141, %v1349
    %1351 = vmatprep.mubr.bf16.mxu0 0
    %1352 = vmatmul.mubr.bf16.gmra.mrb[0].mxu0 %v1249
    %v1353 = vpop.f32.mrb[0].mxu0
    %v1354 = vadd.f32 %v1145, %v1353
    %v1355 = vpop.f32.mrb[0].mxu0
    %v1356 = vadd.f32 %v1147, %v1355
    %v1357 = vpop.f32.mrb[0].mxu0
    %v1358 = vadd.f32 %v1149, %v1357
    %v1359 = vpop.f32.mrb[0].mxu0
    %v1360 = vadd.f32 %v1151, %v1359
    %1361 = vmatprep.mubr.bf16.mxu0 0
    %1362 = vmatmul.mubr.bf16.gmra.mrb[0].mxu0 %v1252
    %v1363 = vpop.f32.mrb[0].mxu0
    %v1364 = vadd.f32 %v1155, %v1363
    %v1365 = vpop.f32.mrb[0].mxu0
    %v1366 = vadd.f32 %v1157, %v1365
    %v1367 = vpop.f32.mrb[0].mxu0
    %v1368 = vadd.f32 %v1159, %v1367
    %v1369 = vpop.f32.mrb[0].mxu0
    %v1370 = vadd.f32 %v1161, %v1369
    %1371 = vmatprep.mubr.bf16.mxu0 0
    %1372 = vmatmul.mubr.bf16.gmra.mrb[0].mxu0 %v1255
    %v1373 = vpop.f32.mrb[0].mxu0
    %v1374 = vadd.f32 %v1165, %v1373
    %v1375 = vpop.f32.mrb[0].mxu0
    %v1376 = vadd.f32 %v1167, %v1375
    %v1377 = vpop.f32.mrb[0].mxu0
    %v1378 = vadd.f32 %v1169, %v1377
    %v1379 = vpop.f32.mrb[0].mxu0
    %v1380 = vadd.f32 %v1171, %v1379
    %1381 = vmatprep.mubr.bf16.mxu0 0
    %1382 = vmatmul.mubr.bf16.gmra.mrb[0].mxu0 %v1258
    %v1383 = vpop.f32.mrb[0].mxu0
    %v1384 = vadd.f32 %v1175, %v1383
    %v1385 = vpop.f32.mrb[0].mxu0
    %v1386 = vadd.f32 %v1177, %v1385
    %v1387 = vpop.f32.mrb[0].mxu0
    %v1388 = vadd.f32 %v1179, %v1387
    %v1389 = vpop.f32.mrb[0].mxu0
    %v1390 = vadd.f32 %v1181, %v1389
    %1391 = vmatprep.mubr.bf16.mxu0 0
    %1392 = vmatmul.mubr.bf16.gmra.mrb[0].mxu0 %v1261
    %v1393 = vpop.f32.mrb[0].mxu0
    %v1394 = vadd.f32 %v1185, %v1393
    %v1395 = vpop.f32.mrb[0].mxu0
    %v1396 = vadd.f32 %v1187, %v1395
    %v1397 = vpop.f32.mrb[0].mxu0
    %v1398 = vadd.f32 %v1189, %v1397
    %v1399 = vpop.f32.mrb[0].mxu0
    %v1400 = vadd.f32 %v1191, %v1399
    %1401 = vmatprep.mubr.bf16.mxu0 0
    %1402 = vmatmul.mubr.bf16.gmra.mrb[0].mxu0 %v1264
    %v1403 = vpop.f32.mrb[0].mxu0
    %v1404 = vadd.f32 %v1195, %v1403
    %v1405 = vpop.f32.mrb[0].mxu0
    %v1406 = vadd.f32 %v1197, %v1405
    %v1407 = vpop.f32.mrb[0].mxu0
    %v1408 = vadd.f32 %v1199, %v1407
    %v1409 = vpop.f32.mrb[0].mxu0
    %v1410 = vadd.f32 %v1201, %v1409
    %1411 = vmatprep.mubr.bf16.mxu0 0
    %1412 = vmatmul.mubr.bf16.gmra.mrb[0].mxu0 %v1267
    %v1413 = vpop.f32.mrb[0].mxu0
    %v1414 = vadd.f32 %v1205, %v1413
    %v1415 = vpop.f32.mrb[0].mxu0
    %v1416 = vadd.f32 %v1207, %v1415
    %v1417 = vpop.f32.mrb[0].mxu0
    %v1418 = vadd.f32 %v1209, %v1417
    %v1419 = vpop.f32.mrb[0].mxu0
    %v1420 = vadd.f32 %v1211, %v1419
    %1421 = vdwg.mxu0
    %v1422 = vpack.c.bf16 %v967, %v966
    %s1423 = scalar_lea.vmem [#allocation7], 64
    %v1424 = vld [vmem:[%s1423] sm:$0xff]
    %v1425 = vld [vmem:[%s1423 + $0x8] sm:$0xff]
    %v1426 = vld [vmem:[%s1423 + $0x10] sm:$0xff]
    %v1427 = vld [vmem:[%s1423 + $0x18] sm:$0xff]
    %v1432 = vunpack.c.l.b16 %v1424
    %v1433 = vunpack.c.h.b16 %v1424
    %v1434 = vunpack.c.l.b16 %v1425
    %v1435 = vunpack.c.h.b16 %v1425
    %v1436 = vunpack.c.l.b16 %v1426
    %v1437 = vunpack.c.h.b16 %v1426
    %v1438 = vunpack.c.l.b16 %v1427
    %v1439 = vunpack.c.h.b16 %v1427
    %v1440 = vpack.c.b16 %v1434, %v1432
    %v1441 = vpack.c.b16 %v1435, %v1433
    %v1442 = vpack.c.b16 %v1438, %v1436
    %v1443 = vpack.c.b16 %v1439, %v1437
    %v1449 = vsel %vm1023, %v1422, 0
    %1451 = vmatprep.subr.bf16.mxu0 %v1441
    %1452 = vmatpush1.bf16.msra.mxu0 %v1440
    %1453 = vmatprep.subr.bf16.mxu0 %v1443
    %1454 = vmatpush1.bf16.msra.mxu0 %v1442
    %1455 = vmatprep.subr.bf16.mxu0 0
    %1456 = vmatpush1.bf16.msra.mxu0 0
    %1457 = vmatprep.subr.bf16.mxu0 0
    %1458 = vmatpush1.bf16.msra.mxu0 0
    %1459 = vmatprep.subr.bf16.mxu0 0
    %1460 = vmatpush1.bf16.msra.mxu0 0
    %1461 = vmatprep.subr.bf16.mxu0 0
    %1462 = vmatpush1.bf16.msra.mxu0 0
    %1463 = vmatprep.subr.bf16.mxu0 0
    %1464 = vmatpush1.bf16.msra.mxu0 0
    %1465 = vmatprep.subr.bf16.mxu0 0
    %1466 = vmatpush1.bf16.msra.mxu0 0
    %1467 = vmatprep.subr.bf16.mxu0 0
    %1468 = vmatpush1.bf16.msra.mxu0 0
    %1469 = vmatprep.subr.bf16.mxu0 0
    %1470 = vmatpush1.bf16.msra.mxu0 0
    %1471 = vmatprep.subr.bf16.mxu0 0
    %1472 = vmatpush1.bf16.msra.mxu0 0
    %1473 = vmatprep.subr.bf16.mxu0 0
    %1474 = vmatpush1.bf16.msra.mxu0 0
    %1475 = vmatprep.subr.bf16.mxu0 0
    %1476 = vmatpush1.bf16.msra.mxu0 0
    %1477 = vmatprep.subr.bf16.mxu0 0
    %1478 = vmatpush1.bf16.msra.mxu0 0
    %1479 = vmatprep.subr.bf16.mxu0 0
    %1480 = vmatpush1.bf16.msra.mxu0 0
    %1481 = vmatprep.subr.bf16.mxu0 0
    %1482 = vmatpush1.bf16.msra.mxu0 0
    %1483 = vmatprep.mubr.bf16.mxu0 0
    %1484 = vmatmul.mubr.bf16.gmra.mrb[0].mxu0 %v1237
    %v1485 = vpop.f32.mrb[0].mxu0
    %v1486 = vadd.f32 0.0, %v1485
    %v1487 = vpop.f32.mrb[0].mxu0
    %v1488 = vadd.f32 0.0, %v1487
    %v1489 = vpop.f32.mrb[0].mxu0
    %v1490 = vadd.f32 0.0, %v1489
    %v1491 = vpop.f32.mrb[0].mxu0
    %v1492 = vadd.f32 0.0, %v1491
    %1493 = vmatprep.mubr.bf16.mxu0 0
    %1494 = vmatmul.mubr.bf16.gmra.mrb[0].mxu0 %v1240
    %v1495 = vpop.f32.mrb[0].mxu0
    %v1496 = vadd.f32 0.0, %v1495
    %v1497 = vpop.f32.mrb[0].mxu0
    %v1498 = vadd.f32 0.0, %v1497
    %v1499 = vpop.f32.mrb[0].mxu0
    %v1500 = vadd.f32 0.0, %v1499
    %v1501 = vpop.f32.mrb[0].mxu0
    %v1502 = vadd.f32 0.0, %v1501
    %1503 = vmatprep.mubr.bf16.mxu0 0
    %1504 = vmatmul.mubr.bf16.gmra.mrb[0].mxu0 %v1243
    %v1505 = vpop.f32.mrb[0].mxu0
    %v1506 = vadd.f32 0.0, %v1505
    %v1507 = vpop.f32.mrb[0].mxu0
    %v1508 = vadd.f32 0.0, %v1507
    %v1509 = vpop.f32.mrb[0].mxu0
    %v1510 = vadd.f32 0.0, %v1509
    %v1511 = vpop.f32.mrb[0].mxu0
    %v1512 = vadd.f32 0.0, %v1511
    %1513 = vmatprep.mubr.bf16.mxu0 0
    %1514 = vmatmul.mubr.bf16.gmra.mrb[0].mxu0 %v1246
    %v1515 = vpop.f32.mrb[0].mxu0
    %v1516 = vadd.f32 0.0, %v1515
    %v1517 = vpop.f32.mrb[0].mxu0
    %v1518 = vadd.f32 0.0, %v1517
    %v1519 = vpop.f32.mrb[0].mxu0
    %v1520 = vadd.f32 0.0, %v1519
    %v1521 = vpop.f32.mrb[0].mxu0
    %v1522 = vadd.f32 0.0, %v1521
    %1523 = vmatprep.mubr.bf16.mxu0 0
    %1524 = vmatmul.mubr.bf16.gmra.mrb[0].mxu0 %v1249
    %v1525 = vpop.f32.mrb[0].mxu0
    %v1526 = vadd.f32 0.0, %v1525
    %v1527 = vpop.f32.mrb[0].mxu0
    %v1528 = vadd.f32 0.0, %v1527
    %v1529 = vpop.f32.mrb[0].mxu0
    %v1530 = vadd.f32 0.0, %v1529
    %v1531 = vpop.f32.mrb[0].mxu0
    %v1532 = vadd.f32 0.0, %v1531
    %1533 = vmatprep.mubr.bf16.mxu0 0
    %1534 = vmatmul.mubr.bf16.gmra.mrb[0].mxu0 %v1252
    %v1535 = vpop.f32.mrb[0].mxu0
    %v1536 = vadd.f32 0.0, %v1535
    %v1537 = vpop.f32.mrb[0].mxu0
    %v1538 = vadd.f32 0.0, %v1537
    %v1539 = vpop.f32.mrb[0].mxu0
    %v1540 = vadd.f32 0.0, %v1539
    %v1541 = vpop.f32.mrb[0].mxu0
    %v1542 = vadd.f32 0.0, %v1541
    %1543 = vmatprep.mubr.bf16.mxu0 0
    %1544 = vmatmul.mubr.bf16.gmra.mrb[0].mxu0 %v1255
    %v1545 = vpop.f32.mrb[0].mxu0
    %v1546 = vadd.f32 0.0, %v1545
    %v1547 = vpop.f32.mrb[0].mxu0
    %v1548 = vadd.f32 0.0, %v1547
    %v1549 = vpop.f32.mrb[0].mxu0
    %v1550 = vadd.f32 0.0, %v1549
    %v1551 = vpop.f32.mrb[0].mxu0
    %v1552 = vadd.f32 0.0, %v1551
    %1553 = vmatprep.mubr.bf16.mxu0 0
    %1554 = vmatmul.mubr.bf16.gmra.mrb[0].mxu0 %v1258
    %v1555 = vpop.f32.mrb[0].mxu0
    %v1556 = vadd.f32 0.0, %v1555
    %v1557 = vpop.f32.mrb[0].mxu0
    %v1558 = vadd.f32 0.0, %v1557
    %v1559 = vpop.f32.mrb[0].mxu0
    %v1560 = vadd.f32 0.0, %v1559
    %v1561 = vpop.f32.mrb[0].mxu0
    %v1562 = vadd.f32 0.0, %v1561
    %1563 = vmatprep.mubr.bf16.mxu0 0
    %1564 = vmatmul.mubr.bf16.gmra.mrb[0].mxu0 %v1261
    %v1565 = vpop.f32.mrb[0].mxu0
    %v1566 = vadd.f32 0.0, %v1565
    %v1567 = vpop.f32.mrb[0].mxu0
    %v1568 = vadd.f32 0.0, %v1567
    %v1569 = vpop.f32.mrb[0].mxu0
    %v1570 = vadd.f32 0.0, %v1569
    %v1571 = vpop.f32.mrb[0].mxu0
    %v1572 = vadd.f32 0.0, %v1571
    %1573 = vmatprep.mubr.bf16.mxu0 0
    %1574 = vmatmul.mubr.bf16.gmra.mrb[0].mxu0 %v1264
    %v1575 = vpop.f32.mrb[0].mxu0
    %v1576 = vadd.f32 0.0, %v1575
    %v1577 = vpop.f32.mrb[0].mxu0
    %v1578 = vadd.f32 0.0, %v1577
    %v1579 = vpop.f32.mrb[0].mxu0
    %v1580 = vadd.f32 0.0, %v1579
    %v1581 = vpop.f32.mrb[0].mxu0
    %v1582 = vadd.f32 0.0, %v1581
    %1583 = vmatprep.mubr.bf16.mxu0 0
    %1584 = vmatmul.mubr.bf16.gmra.mrb[0].mxu0 %v1267
    %v1585 = vpop.f32.mrb[0].mxu0
    %v1586 = vadd.f32 0.0, %v1585
    %v1587 = vpop.f32.mrb[0].mxu0
    %v1588 = vadd.f32 0.0, %v1587
    %v1589 = vpop.f32.mrb[0].mxu0
    %v1590 = vadd.f32 0.0, %v1589
    %v1591 = vpop.f32.mrb[0].mxu0
    %v1592 = vadd.f32 0.0, %v1591
    %1593 = vmatprep.mubr.bf16.mxu0 0
    %1594 = vmatmul.mubr.bf16.gmra.mrb[0].mxu0 %v1449
    %v1595 = vpop.f32.mrb[0].mxu0
    %v1596 = vadd.f32 0.0, %v1595
    %v1597 = vpop.f32.mrb[0].mxu0
    %v1598 = vadd.f32 0.0, %v1597
    %v1599 = vpop.f32.mrb[0].mxu0
    %v1600 = vadd.f32 0.0, %v1599
    %v1601 = vpop.f32.mrb[0].mxu0
    %v1602 = vadd.f32 0.0, %v1601
    %1603 = vdwg.mxu0
    %v1604 = vadd.f32 %v1304, %v1486
    %v1605 = vadd.f32 %v1306, %v1488
    %v1606 = vadd.f32 %v1308, %v1490
    %v1607 = vadd.f32 %v1310, %v1492
    %v1608 = vadd.f32 %v1314, %v1496
    %v1609 = vadd.f32 %v1316, %v1498
    %v1610 = vadd.f32 %v1318, %v1500
    %v1611 = vadd.f32 %v1320, %v1502
    %v1612 = vadd.f32 %v1324, %v1506
    %v1613 = vadd.f32 %v1326, %v1508
    %v1614 = vadd.f32 %v1328, %v1510
    %v1615 = vadd.f32 %v1330, %v1512
    %v1616 = vadd.f32 %v1334, %v1516
    %v1617 = vadd.f32 %v1336, %v1518
    %v1618 = vadd.f32 %v1338, %v1520
    %v1619 = vadd.f32 %v1340, %v1522
    %v1620 = vadd.f32 %v1344, %v1526
    %v1621 = vadd.f32 %v1346, %v1528
    %v1622 = vadd.f32 %v1348, %v1530
    %v1623 = vadd.f32 %v1350, %v1532
    %v1624 = vadd.f32 %v1354, %v1536
    %v1625 = vadd.f32 %v1356, %v1538
    %v1626 = vadd.f32 %v1358, %v1540
    %v1627 = vadd.f32 %v1360, %v1542
    %v1628 = vadd.f32 %v1364, %v1546
    %v1629 = vadd.f32 %v1366, %v1548
    %v1630 = vadd.f32 %v1368, %v1550
    %v1631 = vadd.f32 %v1370, %v1552
    %v1632 = vadd.f32 %v1374, %v1556
    %v1633 = vadd.f32 %v1376, %v1558
    %v1634 = vadd.f32 %v1378, %v1560
    %v1635 = vadd.f32 %v1380, %v1562
    %v1636 = vadd.f32 %v1384, %v1566
    %v1637 = vadd.f32 %v1386, %v1568
    %v1638 = vadd.f32 %v1388, %v1570
    %v1639 = vadd.f32 %v1390, %v1572
    %v1640 = vadd.f32 %v1394, %v1576
    %v1641 = vadd.f32 %v1396, %v1578
    %v1642 = vadd.f32 %v1398, %v1580
    %v1643 = vadd.f32 %v1400, %v1582
    %v1644 = vadd.f32 %v1404, %v1586
    %v1645 = vadd.f32 %v1406, %v1588
    %v1646 = vadd.f32 %v1408, %v1590
    %v1647 = vadd.f32 %v1410, %v1592
    %v1648 = vadd.f32 %v1414, %v1596
    %v1649 = vadd.f32 %v1416, %v1598
    %v1650 = vadd.f32 %v1418, %v1600
    %v1651 = vadd.f32 %v1420, %v1602
    %v1652 = vpack.c.bf16 %v968, %v967
    %s1653 = scalar_lea.vmem [#allocation7], 96
    %v1654 = vld [vmem:[%s1653] sm:$0xff]
    %v1655 = vld [vmem:[%s1653 + $0x8] sm:$0xff]
    %v1656 = vld [vmem:[%s1653 + $0x10] sm:$0xff]
    %v1657 = vld [vmem:[%s1653 + $0x18] sm:$0xff]
    %v1662 = vunpack.c.l.b16 %v1654
    %v1663 = vunpack.c.h.b16 %v1654
    %v1664 = vunpack.c.l.b16 %v1655
    %v1665 = vunpack.c.h.b16 %v1655
    %v1666 = vunpack.c.l.b16 %v1656
    %v1667 = vunpack.c.h.b16 %v1656
    %v1668 = vunpack.c.l.b16 %v1657
    %v1669 = vunpack.c.h.b16 %v1657
    %v1670 = vpack.c.b16 %v1664, %v1662
    %v1671 = vpack.c.b16 %v1665, %v1663
    %v1672 = vpack.c.b16 %v1668, %v1666
    %v1673 = vpack.c.b16 %v1669, %v1667
    %v1679 = vsel %vm1023, %v1652, 0
    %1681 = vmatprep.subr.bf16.mxu0 %v1671
    %1682 = vmatpush1.bf16.msra.mxu0 %v1670
    %1683 = vmatprep.subr.bf16.mxu0 %v1673
    %1684 = vmatpush1.bf16.msra.mxu0 %v1672
    %1685 = vmatprep.subr.bf16.mxu0 0
    %1686 = vmatpush1.bf16.msra.mxu0 0
    %1687 = vmatprep.subr.bf16.mxu0 0
    %1688 = vmatpush1.bf16.msra.mxu0 0
    %1689 = vmatprep.subr.bf16.mxu0 0
    %1690 = vmatpush1.bf16.msra.mxu0 0
    %1691 = vmatprep.subr.bf16.mxu0 0
    %1692 = vmatpush1.bf16.msra.mxu0 0
    %1693 = vmatprep.subr.bf16.mxu0 0
    %1694 = vmatpush1.bf16.msra.mxu0 0
    %1695 = vmatprep.subr.bf16.mxu0 0
    %1696 = vmatpush1.bf16.msra.mxu0 0
    %1697 = vmatprep.subr.bf16.mxu0 0
    %1698 = vmatpush1.bf16.msra.mxu0 0
    %1699 = vmatprep.subr.bf16.mxu0 0
    %1700 = vmatpush1.bf16.msra.mxu0 0
    %1701 = vmatprep.subr.bf16.mxu0 0
    %1702 = vmatpush1.bf16.msra.mxu0 0
    %1703 = vmatprep.subr.bf16.mxu0 0
    %1704 = vmatpush1.bf16.msra.mxu0 0
    %1705 = vmatprep.subr.bf16.mxu0 0
    %1706 = vmatpush1.bf16.msra.mxu0 0
    %1707 = vmatprep.subr.bf16.mxu0 0
    %1708 = vmatpush1.bf16.msra.mxu0 0
    %1709 = vmatprep.subr.bf16.mxu0 0
    %1710 = vmatpush1.bf16.msra.mxu0 0
    %1711 = vmatprep.subr.bf16.mxu0 0
    %1712 = vmatpush1.bf16.msra.mxu0 0
    %1713 = vmatprep.mubr.bf16.mxu0 0
    %1714 = vmatmul.mubr.bf16.gmra.mrb[0].mxu0 %v1028
    %v1715 = vpop.f32.mrb[0].mxu0
    %v1716 = vadd.f32 0.0, %v1715
    %v1717 = vpop.f32.mrb[0].mxu0
    %v1718 = vadd.f32 0.0, %v1717
    %v1719 = vpop.f32.mrb[0].mxu0
    %v1720 = vadd.f32 0.0, %v1719
    %v1721 = vpop.f32.mrb[0].mxu0
    %v1722 = vadd.f32 0.0, %v1721
    %1723 = vmatprep.mubr.bf16.mxu0 0
    %1724 = vmatmul.mubr.bf16.gmra.mrb[0].mxu0 %v1031
    %v1725 = vpop.f32.mrb[0].mxu0
    %v1726 = vadd.f32 0.0, %v1725
    %v1727 = vpop.f32.mrb[0].mxu0
    %v1728 = vadd.f32 0.0, %v1727
    %v1729 = vpop.f32.mrb[0].mxu0
    %v1730 = vadd.f32 0.0, %v1729
    %v1731 = vpop.f32.mrb[0].mxu0
    %v1732 = vadd.f32 0.0, %v1731
    %1733 = vmatprep.mubr.bf16.mxu0 0
    %1734 = vmatmul.mubr.bf16.gmra.mrb[0].mxu0 %v1034
    %v1735 = vpop.f32.mrb[0].mxu0
    %v1736 = vadd.f32 0.0, %v1735
    %v1737 = vpop.f32.mrb[0].mxu0
    %v1738 = vadd.f32 0.0, %v1737
    %v1739 = vpop.f32.mrb[0].mxu0
    %v1740 = vadd.f32 0.0, %v1739
    %v1741 = vpop.f32.mrb[0].mxu0
    %v1742 = vadd.f32 0.0, %v1741
    %1743 = vmatprep.mubr.bf16.mxu0 0
    %1744 = vmatmul.mubr.bf16.gmra.mrb[0].mxu0 %v1037
    %v1745 = vpop.f32.mrb[0].mxu0
    %v1746 = vadd.f32 0.0, %v1745
    %v1747 = vpop.f32.mrb[0].mxu0
    %v1748 = vadd.f32 0.0, %v1747
    %v1749 = vpop.f32.mrb[0].mxu0
    %v1750 = vadd.f32 0.0, %v1749
    %v1751 = vpop.f32.mrb[0].mxu0
    %v1752 = vadd.f32 0.0, %v1751
    %1753 = vmatprep.mubr.bf16.mxu0 0
    %1754 = vmatmul.mubr.bf16.gmra.mrb[0].mxu0 %v1040
    %v1755 = vpop.f32.mrb[0].mxu0
    %v1756 = vadd.f32 0.0, %v1755
    %v1757 = vpop.f32.mrb[0].mxu0
    %v1758 = vadd.f32 0.0, %v1757
    %v1759 = vpop.f32.mrb[0].mxu0
    %v1760 = vadd.f32 0.0, %v1759
    %v1761 = vpop.f32.mrb[0].mxu0
    %v1762 = vadd.f32 0.0, %v1761
    %1763 = vmatprep.mubr.bf16.mxu0 0
    %1764 = vmatmul.mubr.bf16.gmra.mrb[0].mxu0 %v1043
    %v1765 = vpop.f32.mrb[0].mxu0
    %v1766 = vadd.f32 0.0, %v1765
    %v1767 = vpop.f32.mrb[0].mxu0
    %v1768 = vadd.f32 0.0, %v1767
    %v1769 = vpop.f32.mrb[0].mxu0
    %v1770 = vadd.f32 0.0, %v1769
    %v1771 = vpop.f32.mrb[0].mxu0
    %v1772 = vadd.f32 0.0, %v1771
    %1773 = vmatprep.mubr.bf16.mxu0 0
    %1774 = vmatmul.mubr.bf16.gmra.mrb[0].mxu0 %v1046
    %v1775 = vpop.f32.mrb[0].mxu0
    %v1776 = vadd.f32 0.0, %v1775
    %v1777 = vpop.f32.mrb[0].mxu0
    %v1778 = vadd.f32 0.0, %v1777
    %v1779 = vpop.f32.mrb[0].mxu0
    %v1780 = vadd.f32 0.0, %v1779
    %v1781 = vpop.f32.mrb[0].mxu0
    %v1782 = vadd.f32 0.0, %v1781
    %1783 = vmatprep.mubr.bf16.mxu0 0
    %1784 = vmatmul.mubr.bf16.gmra.mrb[0].mxu0 %v1049
    %v1785 = vpop.f32.mrb[0].mxu0
    %v1786 = vadd.f32 0.0, %v1785
    %v1787 = vpop.f32.mrb[0].mxu0
    %v1788 = vadd.f32 0.0, %v1787
    %v1789 = vpop.f32.mrb[0].mxu0
    %v1790 = vadd.f32 0.0, %v1789
    %v1791 = vpop.f32.mrb[0].mxu0
    %v1792 = vadd.f32 0.0, %v1791
    %1793 = vmatprep.mubr.bf16.mxu0 0
    %1794 = vmatmul.mubr.bf16.gmra.mrb[0].mxu0 %v1052
    %v1795 = vpop.f32.mrb[0].mxu0
    %v1796 = vadd.f32 0.0, %v1795
    %v1797 = vpop.f32.mrb[0].mxu0
    %v1798 = vadd.f32 0.0, %v1797
    %v1799 = vpop.f32.mrb[0].mxu0
    %v1800 = vadd.f32 0.0, %v1799
    %v1801 = vpop.f32.mrb[0].mxu0
    %v1802 = vadd.f32 0.0, %v1801
    %1803 = vmatprep.mubr.bf16.mxu0 0
    %1804 = vmatmul.mubr.bf16.gmra.mrb[0].mxu0 %v1055
    %v1805 = vpop.f32.mrb[0].mxu0
    %v1806 = vadd.f32 0.0, %v1805
    %v1807 = vpop.f32.mrb[0].mxu0
    %v1808 = vadd.f32 0.0, %v1807
    %v1809 = vpop.f32.mrb[0].mxu0
    %v1810 = vadd.f32 0.0, %v1809
    %v1811 = vpop.f32.mrb[0].mxu0
    %v1812 = vadd.f32 0.0, %v1811
    %1813 = vmatprep.mubr.bf16.mxu0 0
    %1814 = vmatmul.mubr.bf16.gmra.mrb[0].mxu0 %v1058
    %v1815 = vpop.f32.mrb[0].mxu0
    %v1816 = vadd.f32 0.0, %v1815
    %v1817 = vpop.f32.mrb[0].mxu0
    %v1818 = vadd.f32 0.0, %v1817
    %v1819 = vpop.f32.mrb[0].mxu0
    %v1820 = vadd.f32 0.0, %v1819
    %v1821 = vpop.f32.mrb[0].mxu0
    %v1822 = vadd.f32 0.0, %v1821
    %1823 = vmatprep.mubr.bf16.mxu0 0
    %1824 = vmatmul.mubr.bf16.gmra.mrb[0].mxu0 %v1679
    %v1825 = vpop.f32.mrb[0].mxu0
    %v1826 = vadd.f32 0.0, %v1825
    %v1827 = vpop.f32.mrb[0].mxu0
    %v1828 = vadd.f32 0.0, %v1827
    %v1829 = vpop.f32.mrb[0].mxu0
    %v1830 = vadd.f32 0.0, %v1829
    %v1831 = vpop.f32.mrb[0].mxu0
    %v1832 = vadd.f32 0.0, %v1831
    %1833 = vdwg.mxu0
    %v1834 = vadd.f32 %v1604, %v1716
    %v1835 = vadd.f32 %v1605, %v1718
    %v1836 = vadd.f32 %v1606, %v1720
    %v1837 = vadd.f32 %v1607, %v1722
    %v1838 = vadd.f32 %v1608, %v1726
    %v1839 = vadd.f32 %v1609, %v1728
    %v1840 = vadd.f32 %v1610, %v1730
    %v1841 = vadd.f32 %v1611, %v1732
    %v1842 = vadd.f32 %v1612, %v1736
    %v1843 = vadd.f32 %v1613, %v1738
    %v1844 = vadd.f32 %v1614, %v1740
    %v1845 = vadd.f32 %v1615, %v1742
    %v1846 = vadd.f32 %v1616, %v1746
    %v1847 = vadd.f32 %v1617, %v1748
    %v1848 = vadd.f32 %v1618, %v1750
    %v1849 = vadd.f32 %v1619, %v1752
    %v1850 = vadd.f32 %v1620, %v1756
    %v1851 = vadd.f32 %v1621, %v1758
    %v1852 = vadd.f32 %v1622, %v1760
    %v1853 = vadd.f32 %v1623, %v1762
    %v1854 = vadd.f32 %v1624, %v1766
    %v1855 = vadd.f32 %v1625, %v1768
    %v1856 = vadd.f32 %v1626, %v1770
    %v1857 = vadd.f32 %v1627, %v1772
    %v1858 = vadd.f32 %v1628, %v1776
    %v1859 = vadd.f32 %v1629, %v1778
    %v1860 = vadd.f32 %v1630, %v1780
    %v1861 = vadd.f32 %v1631, %v1782
    %v1862 = vadd.f32 %v1632, %v1786
    %v1863 = vadd.f32 %v1633, %v1788
    %v1864 = vadd.f32 %v1634, %v1790
    %v1865 = vadd.f32 %v1635, %v1792
    %v1866 = vadd.f32 %v1636, %v1796
    %v1867 = vadd.f32 %v1637, %v1798
    %v1868 = vadd.f32 %v1638, %v1800
    %v1869 = vadd.f32 %v1639, %v1802
    %v1870 = vadd.f32 %v1640, %v1806
    %v1871 = vadd.f32 %v1641, %v1808
    %v1872 = vadd.f32 %v1642, %v1810
    %v1873 = vadd.f32 %v1643, %v1812
    %v1874 = vadd.f32 %v1644, %v1816
    %v1875 = vadd.f32 %v1645, %v1818
    %v1876 = vadd.f32 %v1646, %v1820
    %v1877 = vadd.f32 %v1647, %v1822
    %v1878 = vadd.f32 %v1648, %v1826
    %v1879 = vadd.f32 %v1649, %v1828
    %v1880 = vadd.f32 %v1650, %v1830
    %v1881 = vadd.f32 %v1651, %v1832
    %v1882 = vpack.c.bf16 %v969, %v968
    %s1883 = scalar_lea.vmem [#allocation7], 128
    %v1884 = vld [vmem:[%s1883] sm:$0xff]
    %v1885 = vld [vmem:[%s1883 + $0x8] sm:$0xff]
    %v1886 = vld [vmem:[%s1883 + $0x10] sm:$0xff]
    %v1887 = vld [vmem:[%s1883 + $0x18] sm:$0xff]
    %v1892 = vunpack.c.l.b16 %v1884
    %v1893 = vunpack.c.h.b16 %v1884
    %v1894 = vunpack.c.l.b16 %v1885
    %v1895 = vunpack.c.h.b16 %v1885
    %v1896 = vunpack.c.l.b16 %v1886
    %v1897 = vunpack.c.h.b16 %v1886
    %v1898 = vunpack.c.l.b16 %v1887
    %v1899 = vunpack.c.h.b16 %v1887
    %v1900 = vpack.c.b16 %v1894, %v1892
    %v1901 = vpack.c.b16 %v1895, %v1893
    %v1902 = vpack.c.b16 %v1898, %v1896
    %v1903 = vpack.c.b16 %v1899, %v1897
    %v1909 = vsel %vm1023, %v1882, 0
    %1911 = vmatprep.subr.bf16.mxu0 %v1901
    %1912 = vmatpush1.bf16.msra.mxu0 %v1900
    %1913 = vmatprep.subr.bf16.mxu0 %v1903
    %1914 = vmatpush1.bf16.msra.mxu0 %v1902
    %1915 = vmatprep.subr.bf16.mxu0 0
    %1916 = vmatpush1.bf16.msra.mxu0 0
    %1917 = vmatprep.subr.bf16.mxu0 0
    %1918 = vmatpush1.bf16.msra.mxu0 0
    %1919 = vmatprep.subr.bf16.mxu0 0
    %1920 = vmatpush1.bf16.msra.mxu0 0
    %1921 = vmatprep.subr.bf16.mxu0 0
    %1922 = vmatpush1.bf16.msra.mxu0 0
    %1923 = vmatprep.subr.bf16.mxu0 0
    %1924 = vmatpush1.bf16.msra.mxu0 0
    %1925 = vmatprep.subr.bf16.mxu0 0
    %1926 = vmatpush1.bf16.msra.mxu0 0
    %1927 = vmatprep.subr.bf16.mxu0 0
    %1928 = vmatpush1.bf16.msra.mxu0 0
    %1929 = vmatprep.subr.bf16.mxu0 0
    %1930 = vmatpush1.bf16.msra.mxu0 0
    %1931 = vmatprep.subr.bf16.mxu0 0
    %1932 = vmatpush1.bf16.msra.mxu0 0
    %1933 = vmatprep.subr.bf16.mxu0 0
    %1934 = vmatpush1.bf16.msra.mxu0 0
    %1935 = vmatprep.subr.bf16.mxu0 0
    %1936 = vmatpush1.bf16.msra.mxu0 0
    %1937 = vmatprep.subr.bf16.mxu0 0
    %1938 = vmatpush1.bf16.msra.mxu0 0
    %1939 = vmatprep.subr.bf16.mxu0 0
    %1940 = vmatpush1.bf16.msra.mxu0 0
    %1941 = vmatprep.subr.bf16.mxu0 0
    %1942 = vmatpush1.bf16.msra.mxu0 0
    %1943 = vmatprep.mubr.bf16.mxu0 0
    %1944 = vmatmul.mubr.bf16.gmra.mrb[0].mxu0 %v1240
    %v1945 = vpop.f32.mrb[0].mxu0
    %v1946 = vadd.f32 0.0, %v1945
    %v1947 = vpop.f32.mrb[0].mxu0
    %v1948 = vadd.f32 0.0, %v1947
    %v1949 = vpop.f32.mrb[0].mxu0
    %v1950 = vadd.f32 0.0, %v1949
    %v1951 = vpop.f32.mrb[0].mxu0
    %v1952 = vadd.f32 0.0, %v1951
    %1953 = vmatprep.mubr.bf16.mxu0 0
    %1954 = vmatmul.mubr.bf16.gmra.mrb[0].mxu0 %v1243
    %v1955 = vpop.f32.mrb[0].mxu0
    %v1956 = vadd.f32 0.0, %v1955
    %v1957 = vpop.f32.mrb[0].mxu0
    %v1958 = vadd.f32 0.0, %v1957
    %v1959 = vpop.f32.mrb[0].mxu0
    %v1960 = vadd.f32 0.0, %v1959
    %v1961 = vpop.f32.mrb[0].mxu0
    %v1962 = vadd.f32 0.0, %v1961
    %1963 = vmatprep.mubr.bf16.mxu0 0
    %1964 = vmatmul.mubr.bf16.gmra.mrb[0].mxu0 %v1246
    %v1965 = vpop.f32.mrb[0].mxu0
    %v1966 = vadd.f32 0.0, %v1965
    %v1967 = vpop.f32.mrb[0].mxu0
    %v1968 = vadd.f32 0.0, %v1967
    %v1969 = vpop.f32.mrb[0].mxu0
    %v1970 = vadd.f32 0.0, %v1969
    %v1971 = vpop.f32.mrb[0].mxu0
    %v1972 = vadd.f32 0.0, %v1971
    %1973 = vmatprep.mubr.bf16.mxu0 0
    %1974 = vmatmul.mubr.bf16.gmra.mrb[0].mxu0 %v1249
    %v1975 = vpop.f32.mrb[0].mxu0
    %v1976 = vadd.f32 0.0, %v1975
    %v1977 = vpop.f32.mrb[0].mxu0
    %v1978 = vadd.f32 0.0, %v1977
    %v1979 = vpop.f32.mrb[0].mxu0
    %v1980 = vadd.f32 0.0, %v1979
    %v1981 = vpop.f32.mrb[0].mxu0
    %v1982 = vadd.f32 0.0, %v1981
    %1983 = vmatprep.mubr.bf16.mxu0 0
    %1984 = vmatmul.mubr.bf16.gmra.mrb[0].mxu0 %v1252
    %v1985 = vpop.f32.mrb[0].mxu0
    %v1986 = vadd.f32 0.0, %v1985
    %v1987 = vpop.f32.mrb[0].mxu0
    %v1988 = vadd.f32 0.0, %v1987
    %v1989 = vpop.f32.mrb[0].mxu0
    %v1990 = vadd.f32 0.0, %v1989
    %v1991 = vpop.f32.mrb[0].mxu0
    %v1992 = vadd.f32 0.0, %v1991
    %1993 = vmatprep.mubr.bf16.mxu0 0
    %1994 = vmatmul.mubr.bf16.gmra.mrb[0].mxu0 %v1255
    %v1995 = vpop.f32.mrb[0].mxu0
    %v1996 = vadd.f32 0.0, %v1995
    %v1997 = vpop.f32.mrb[0].mxu0
    %v1998 = vadd.f32 0.0, %v1997
    %v1999 = vpop.f32.mrb[0].mxu0
    %v2000 = vadd.f32 0.0, %v1999
    %v2001 = vpop.f32.mrb[0].mxu0
    %v2002 = vadd.f32 0.0, %v2001
    %2003 = vmatprep.mubr.bf16.mxu0 0
    %2004 = vmatmul.mubr.bf16.gmra.mrb[0].mxu0 %v1258
    %v2005 = vpop.f32.mrb[0].mxu0
    %v2006 = vadd.f32 0.0, %v2005
    %v2007 = vpop.f32.mrb[0].mxu0
    %v2008 = vadd.f32 0.0, %v2007
    %v2009 = vpop.f32.mrb[0].mxu0
    %v2010 = vadd.f32 0.0, %v2009
    %v2011 = vpop.f32.mrb[0].mxu0
    %v2012 = vadd.f32 0.0, %v2011
    %2013 = vmatprep.mubr.bf16.mxu0 0
    %2014 = vmatmul.mubr.bf16.gmra.mrb[0].mxu0 %v1261
    %v2015 = vpop.f32.mrb[0].mxu0
    %v2016 = vadd.f32 0.0, %v2015
    %v2017 = vpop.f32.mrb[0].mxu0
    %v2018 = vadd.f32 0.0, %v2017
    %v2019 = vpop.f32.mrb[0].mxu0
    %v2020 = vadd.f32 0.0, %v2019
    %v2021 = vpop.f32.mrb[0].mxu0
    %v2022 = vadd.f32 0.0, %v2021
    %2023 = vmatprep.mubr.bf16.mxu0 0
    %2024 = vmatmul.mubr.bf16.gmra.mrb[0].mxu0 %v1264
    %v2025 = vpop.f32.mrb[0].mxu0
    %v2026 = vadd.f32 0.0, %v2025
    %v2027 = vpop.f32.mrb[0].mxu0
    %v2028 = vadd.f32 0.0, %v2027
    %v2029 = vpop.f32.mrb[0].mxu0
    %v2030 = vadd.f32 0.0, %v2029
    %v2031 = vpop.f32.mrb[0].mxu0
    %v2032 = vadd.f32 0.0, %v2031
    %2033 = vmatprep.mubr.bf16.mxu0 0
    %2034 = vmatmul.mubr.bf16.gmra.mrb[0].mxu0 %v1267
    %v2035 = vpop.f32.mrb[0].mxu0
    %v2036 = vadd.f32 0.0, %v2035
    %v2037 = vpop.f32.mrb[0].mxu0
    %v2038 = vadd.f32 0.0, %v2037
    %v2039 = vpop.f32.mrb[0].mxu0
    %v2040 = vadd.f32 0.0, %v2039
    %v2041 = vpop.f32.mrb[0].mxu0
    %v2042 = vadd.f32 0.0, %v2041
    %2043 = vmatprep.mubr.bf16.mxu0 0
    %2044 = vmatmul.mubr.bf16.gmra.mrb[0].mxu0 %v1449
    %v2045 = vpop.f32.mrb[0].mxu0
    %v2046 = vadd.f32 0.0, %v2045
    %v2047 = vpop.f32.mrb[0].mxu0
    %v2048 = vadd.f32 0.0, %v2047
    %v2049 = vpop.f32.mrb[0].mxu0
    %v2050 = vadd.f32 0.0, %v2049
    %v2051 = vpop.f32.mrb[0].mxu0
    %v2052 = vadd.f32 0.0, %v2051
    %2053 = vmatprep.mubr.bf16.mxu0 0
    %2054 = vmatmul.mubr.bf16.gmra.mrb[0].mxu0 %v1909
    %v2055 = vpop.f32.mrb[0].mxu0
    %v2056 = vadd.f32 0.0, %v2055
    %v2057 = vpop.f32.mrb[0].mxu0
    %v2058 = vadd.f32 0.0, %v2057
    %v2059 = vpop.f32.mrb[0].mxu0
    %v2060 = vadd.f32 0.0, %v2059
    %v2061 = vpop.f32.mrb[0].mxu0
    %v2062 = vadd.f32 0.0, %v2061
    %2063 = vdwg.mxu0
    %v2064 = vadd.f32 %v1834, %v1946
    %v2065 = vadd.f32 %v1835, %v1948
    %v2066 = vadd.f32 %v1836, %v1950
    %v2067 = vadd.f32 %v1837, %v1952
    %v2068 = vadd.f32 %v1838, %v1956
    %v2069 = vadd.f32 %v1839, %v1958
    %v2070 = vadd.f32 %v1840, %v1960
    %v2071 = vadd.f32 %v1841, %v1962
    %v2072 = vadd.f32 %v1842, %v1966
    %v2073 = vadd.f32 %v1843, %v1968
    %v2074 = vadd.f32 %v1844, %v1970
    %v2075 = vadd.f32 %v1845, %v1972
    %v2076 = vadd.f32 %v1846, %v1976
    %v2077 = vadd.f32 %v1847, %v1978
    %v2078 = vadd.f32 %v1848, %v1980
    %v2079 = vadd.f32 %v1849, %v1982
    %v2080 = vadd.f32 %v1850, %v1986
    %v2081 = vadd.f32 %v1851, %v1988
    %v2082 = vadd.f32 %v1852, %v1990
    %v2083 = vadd.f32 %v1853, %v1992
    %v2084 = vadd.f32 %v1854, %v1996
    %v2085 = vadd.f32 %v1855, %v1998
    %v2086 = vadd.f32 %v1856, %v2000
    %v2087 = vadd.f32 %v1857, %v2002
    %v2088 = vadd.f32 %v1858, %v2006
    %v2089 = vadd.f32 %v1859, %v2008
    %v2090 = vadd.f32 %v1860, %v2010
    %v2091 = vadd.f32 %v1861, %v2012
    %v2092 = vadd.f32 %v1862, %v2016
    %v2093 = vadd.f32 %v1863, %v2018
    %v2094 = vadd.f32 %v1864, %v2020
    %v2095 = vadd.f32 %v1865, %v2022
    %v2096 = vadd.f32 %v1866, %v2026
    %v2097 = vadd.f32 %v1867, %v2028
    %v2098 = vadd.f32 %v1868, %v2030
    %v2099 = vadd.f32 %v1869, %v2032
    %v2100 = vadd.f32 %v1870, %v2036
    %v2101 = vadd.f32 %v1871, %v2038
    %v2102 = vadd.f32 %v1872, %v2040
    %v2103 = vadd.f32 %v1873, %v2042
    %v2104 = vadd.f32 %v1874, %v2046
    %v2105 = vadd.f32 %v1875, %v2048
    %v2106 = vadd.f32 %v1876, %v2050
    %v2107 = vadd.f32 %v1877, %v2052
    %v2108 = vadd.f32 %v1878, %v2056
    %v2109 = vadd.f32 %v1879, %v2058
    %v2110 = vadd.f32 %v1880, %v2060
    %v2111 = vadd.f32 %v1881, %v2062
    %v2112 = vld [vmem:[%s2] sm:$0x3]
    %v2114 = vlaneseq
    %v2115 = vshrl.u32 %v2114, 7
    %v2116 = vsub.s32 0, %v2115
    %v2117 = vrot.slane %v2112, %v2116
    %v2118 = vlaneseq
    %v2119 = vshrl.u32 %v2118, 7
    %v2120 = vsub.s32 1, %v2119
    %v2121 = vrot.slane %v2112, %v2120
    %v2124 = vadd.f32 %v2064, %v2117
    %v2125 = vadd.f32 %v2065, %v2121
    %v2126 = vadd.f32 %v2066, %v2117
    %v2127 = vadd.f32 %v2067, %v2121
    %v2128 = vadd.f32 %v2068, %v2117
    %v2129 = vadd.f32 %v2069, %v2121
    %v2130 = vadd.f32 %v2070, %v2117
    %v2131 = vadd.f32 %v2071, %v2121
    %v2132 = vadd.f32 %v2072, %v2117
    %v2133 = vadd.f32 %v2073, %v2121
    %v2134 = vadd.f32 %v2074, %v2117
    %v2135 = vadd.f32 %v2075, %v2121
    %v2136 = vadd.f32 %v2076, %v2117
    %v2137 = vadd.f32 %v2077, %v2121
    %v2138 = vadd.f32 %v2078, %v2117
    %v2139 = vadd.f32 %v2079, %v2121
    %v2140 = vadd.f32 %v2080, %v2117
    %v2141 = vadd.f32 %v2081, %v2121
    %v2142 = vadd.f32 %v2082, %v2117
    %v2143 = vadd.f32 %v2083, %v2121
    %v2144 = vadd.f32 %v2084, %v2117
    %v2145 = vadd.f32 %v2085, %v2121
    %v2146 = vadd.f32 %v2086, %v2117
    %v2147 = vadd.f32 %v2087, %v2121
    %v2148 = vadd.f32 %v2088, %v2117
    %v2149 = vadd.f32 %v2089, %v2121
    %v2150 = vadd.f32 %v2090, %v2117
    %v2151 = vadd.f32 %v2091, %v2121
    %v2152 = vadd.f32 %v2092, %v2117
    %v2153 = vadd.f32 %v2093, %v2121
    %v2154 = vadd.f32 %v2094, %v2117
    %v2155 = vadd.f32 %v2095, %v2121
    %v2156 = vadd.f32 %v2096, %v2117
    %v2157 = vadd.f32 %v2097, %v2121
    %v2158 = vadd.f32 %v2098, %v2117
    %v2159 = vadd.f32 %v2099, %v2121
    %v2160 = vadd.f32 %v2100, %v2117
    %v2161 = vadd.f32 %v2101, %v2121
    %v2162 = vadd.f32 %v2102, %v2117
    %v2163 = vadd.f32 %v2103, %v2121
    %v2164 = vadd.f32 %v2104, %v2117
    %v2165 = vadd.f32 %v2105, %v2121
    %v2166 = vadd.f32 %v2106, %v2117
    %v2167 = vadd.f32 %v2107, %v2121
    %v2168 = vadd.f32 %v2108, %v2117
    %v2169 = vadd.f32 %v2109, %v2121
    %v2170 = vadd.f32 %v2110, %v2117
    %v2171 = vadd.f32 %v2111, %v2121
    %v2172 = vmax.f32 %v2124, %v2126
    %v2173 = vmax.f32 %v2125, %v2127
    %v2174 = vmax.f32 %v2128, %v2130
    %v2175 = vmax.f32 %v2129, %v2131
    %v2176 = vmax.f32 %v2132, %v2134
    %v2177 = vmax.f32 %v2133, %v2135
    %v2178 = vmax.f32 %v2136, %v2138
    %v2179 = vmax.f32 %v2137, %v2139
    %v2180 = vmax.f32 %v2140, %v2142
    %v2181 = vmax.f32 %v2141, %v2143
    %v2182 = vmax.f32 %v2144, %v2146
    %v2183 = vmax.f32 %v2145, %v2147
    %v2184 = vmax.f32 %v2148, %v2150
    %v2185 = vmax.f32 %v2149, %v2151
    %v2186 = vmax.f32 %v2152, %v2154
    %v2187 = vmax.f32 %v2153, %v2155
    %v2188 = vmax.f32 %v2156, %v2158
    %v2189 = vmax.f32 %v2157, %v2159
    %v2190 = vmax.f32 %v2160, %v2162
    %v2191 = vmax.f32 %v2161, %v2163
    %v2192 = vmax.f32 %v2164, %v2166
    %v2193 = vmax.f32 %v2165, %v2167
    %v2194 = vmax.f32 %v2168, %v2170
    %v2195 = vmax.f32 %v2169, %v2171
    %v2196 = vmax.f32 %v2172, %v2173
    %v2197 = vmax.f32 %v2174, %v2175
    %v2198 = vmax.f32 %v2176, %v2177
    %v2199 = vmax.f32 %v2178, %v2179
    %v2200 = vmax.f32 %v2180, %v2181
    %v2201 = vmax.f32 %v2182, %v2183
    %v2202 = vmax.f32 %v2184, %v2185
    %v2203 = vmax.f32 %v2186, %v2187
    %v2204 = vmax.f32 %v2188, %v2189
    %v2205 = vmax.f32 %v2190, %v2191
    %v2206 = vmax.f32 %v2192, %v2193
    %v2207 = vmax.f32 %v2194, %v2195
    %v2208 = vmax.f32 %v2196, 0.0
    %v2209 = vmax.f32 %v2197, 0.0
    %v2210 = vmax.f32 %v2198, 0.0
    %v2211 = vmax.f32 %v2199, 0.0
    %v2212 = vmax.f32 %v2200, 0.0
    %v2213 = vmax.f32 %v2201, 0.0
    %v2214 = vmax.f32 %v2202, 0.0
    %v2215 = vmax.f32 %v2203, 0.0
    %v2216 = vmax.f32 %v2204, 0.0
    %v2217 = vmax.f32 %v2205, 0.0
    %v2218 = vmax.f32 %v2206, 0.0
    %v2219 = vmax.f32 %v2207, 0.0
    %s2220 = smul.u32 4, 6
    %s2221 = smul.u32 %s2220, 16
    %s2222 = smul.u32 %s2221, 2
    %s2223 = sshll.u32 %s2222, 4
    %2224 = dma.done [#allocation6], %s2223
    %v2225 = vpack.c.bf16 %v2210, %v2208
    %v2226 = vpack.c.bf16 %v2214, %v2212
    %v2227 = vld [vmem:[#allocation2] sm:$0xff]
    %v2228 = vld [vmem:[#allocation2 + $0x8] sm:$0xff]
    %v2229 = vld [vmem:[#allocation2 + $0x10] sm:$0xff]
    %v2230 = vld [vmem:[#allocation2 + $0x18] sm:$0xff]
    %v2231 = vld [vmem:[#allocation2 + $0x20] sm:$0xff]
    %v2232 = vld [vmem:[#allocation2 + $0x28] sm:$0xff]
    %v2233 = vld [vmem:[#allocation2 + $0x30] sm:$0xff]
    %v2234 = vld [vmem:[#allocation2 + $0x38] sm:$0xff]
    %v2235 = vld [vmem:[#allocation2 + $0x40] sm:$0xff]
    %v2236 = vld [vmem:[#allocation2 + $0x48] sm:$0xff]
    %v2237 = vld [vmem:[#allocation2 + $0x50] sm:$0xff]
    %v2238 = vld [vmem:[#allocation2 + $0x58] sm:$0xff]
    %v2239 = vld [vmem:[#allocation2 + $0x60] sm:$0xff]
    %v2240 = vld [vmem:[#allocation2 + $0x68] sm:$0xff]
    %v2241 = vld [vmem:[#allocation2 + $0x70] sm:$0xff]
    %v2242 = vld [vmem:[#allocation2 + $0x78] sm:$0xff]
    %v2243 = vpack.c.bf16 %v2211, %v2209
    %v2244 = vpack.c.bf16 %v2215, %v2213
    %s2245 = scalar_lea.vmem [#allocation2], 128
    %v2246 = vld [vmem:[%s2245] sm:$0xff]
    %v2247 = vld [vmem:[%s2245 + $0x8] sm:$0xff]
    %v2248 = vld [vmem:[%s2245 + $0x10] sm:$0xff]
    %v2249 = vld [vmem:[%s2245 + $0x18] sm:$0xff]
    %v2250 = vld [vmem:[%s2245 + $0x20] sm:$0xff]
    %v2251 = vld [vmem:[%s2245 + $0x28] sm:$0xff]
    %v2252 = vld [vmem:[%s2245 + $0x30] sm:$0xff]
    %v2253 = vld [vmem:[%s2245 + $0x38] sm:$0xff]
    %v2254 = vld [vmem:[%s2245 + $0x40] sm:$0xff]
    %v2255 = vld [vmem:[%s2245 + $0x48] sm:$0xff]
    %v2256 = vld [vmem:[%s2245 + $0x50] sm:$0xff]
    %v2257 = vld [vmem:[%s2245 + $0x58] sm:$0xff]
    %v2258 = vld [vmem:[%s2245 + $0x60] sm:$0xff]
    %v2259 = vld [vmem:[%s2245 + $0x68] sm:$0xff]
    %v2260 = vld [vmem:[%s2245 + $0x70] sm:$0xff]
    %v2261 = vld [vmem:[%s2245 + $0x78] sm:$0xff]
    %2262 = vmatprep.subr.bf16.mxu0 %v2247
    %2263 = vmatpush1.bf16.msra.mxu0 %v2246
    %2264 = vmatprep.subr.bf16.mxu0 %v2249
    %2265 = vmatpush1.bf16.msra.mxu0 %v2248
    %2266 = vmatprep.subr.bf16.mxu0 %v2251
    %2267 = vmatpush1.bf16.msra.mxu0 %v2250
    %2268 = vmatprep.subr.bf16.mxu0 %v2253
    %2269 = vmatpush1.bf16.msra.mxu0 %v2252
    %2270 = vmatprep.subr.bf16.mxu0 %v2255
    %2271 = vmatpush1.bf16.msra.mxu0 %v2254
    %2272 = vmatprep.subr.bf16.mxu0 %v2257
    %2273 = vmatpush1.bf16.msra.mxu0 %v2256
    %2274 = vmatprep.subr.bf16.mxu0 %v2259
    %2275 = vmatpush1.bf16.msra.mxu0 %v2258
    %2276 = vmatprep.subr.bf16.mxu0 %v2261
    %2277 = vmatpush1.bf16.msra.mxu0 %v2260
    %2278 = vmatprep.subr.bf16.mxu0 0
    %2279 = vmatpush1.bf16.msra.mxu0 0
    %2280 = vmatprep.subr.bf16.mxu0 0
    %2281 = vmatpush1.bf16.msra.mxu0 0
    %2282 = vmatprep.subr.bf16.mxu0 0
    %2283 = vmatpush1.bf16.msra.mxu0 0
    %2284 = vmatprep.subr.bf16.mxu0 0
    %2285 = vmatpush1.bf16.msra.mxu0 0
    %2286 = vmatprep.subr.bf16.mxu0 0
    %2287 = vmatpush1.bf16.msra.mxu0 0
    %2288 = vmatprep.subr.bf16.mxu0 0
    %2289 = vmatpush1.bf16.msra.mxu0 0
    %2290 = vmatprep.subr.bf16.mxu0 0
    %2291 = vmatpush1.bf16.msra.mxu0 0
    %2292 = vmatprep.subr.bf16.mxu0 0
    %2293 = vmatpush1.bf16.msra.mxu0 0
    %2294 = vmatprep.mubr.bf16.mxu0 0
    %2295 = vmatmul.mubr.bf16.gmra.mrb[0].mxu0 %v2243
    %v2296 = vpop.f32.mrb[0].mxu0
    %v2297 = vadd.f32 0.0, %v2296
    %v2298 = vpop.f32.mrb[0].mxu0
    %v2299 = vadd.f32 0.0, %v2298
    %v2300 = vpop.f32.mrb[0].mxu0
    %v2301 = vadd.f32 0.0, %v2300
    %v2302 = vpop.f32.mrb[0].mxu0
    %v2303 = vadd.f32 0.0, %v2302
    %2304 = vmatprep.mubr.bf16.mxu0 0
    %2305 = vmatmul.mubr.bf16.gmra.mrb[0].mxu0 %v2244
    %v2306 = vpop.f32.mrb[0].mxu0
    %v2307 = vadd.f32 0.0, %v2306
    %v2308 = vpop.f32.mrb[0].mxu0
    %v2309 = vadd.f32 0.0, %v2308
    %v2310 = vpop.f32.mrb[0].mxu0
    %v2311 = vadd.f32 0.0, %v2310
    %v2312 = vpop.f32.mrb[0].mxu0
    %v2313 = vadd.f32 0.0, %v2312
    %2314 = vdwg.mxu0
    %2315 = vmatprep.subr.bf16.mxu0 %v2228
    %2316 = vmatpush1.bf16.msra.mxu0 %v2227
    %2317 = vmatprep.subr.bf16.mxu0 %v2230
    %2318 = vmatpush1.bf16.msra.mxu0 %v2229
    %2319 = vmatprep.subr.bf16.mxu0 %v2232
    %2320 = vmatpush1.bf16.msra.mxu0 %v2231
    %2321 = vmatprep.subr.bf16.mxu0 %v2234
    %2322 = vmatpush1.bf16.msra.mxu0 %v2233
    %2323 = vmatprep.subr.bf16.mxu0 %v2236
    %2324 = vmatpush1.bf16.msra.mxu0 %v2235
    %2325 = vmatprep.subr.bf16.mxu0 %v2238
    %2326 = vmatpush1.bf16.msra.mxu0 %v2237
    %2327 = vmatprep.subr.bf16.mxu0 %v2240
    %2328 = vmatpush1.bf16.msra.mxu0 %v2239
    %2329 = vmatprep.subr.bf16.mxu0 %v2242
    %2330 = vmatpush1.bf16.msra.mxu0 %v2241
    %2331 = vmatprep.subr.bf16.mxu0 0
    %2332 = vmatpush1.bf16.msra.mxu0 0
    %2333 = vmatprep.subr.bf16.mxu0 0
    %2334 = vmatpush1.bf16.msra.mxu0 0
    %2335 = vmatprep.subr.bf16.mxu0 0
    %2336 = vmatpush1.bf16.msra.mxu0 0
    %2337 = vmatprep.subr.bf16.mxu0 0
    %2338 = vmatpush1.bf16.msra.mxu0 0
    %2339 = vmatprep.subr.bf16.mxu0 0
    %2340 = vmatpush1.bf16.msra.mxu0 0
    %2341 = vmatprep.subr.bf16.mxu0 0
    %2342 = vmatpush1.bf16.msra.mxu0 0
    %2343 = vmatprep.subr.bf16.mxu0 0
    %2344 = vmatpush1.bf16.msra.mxu0 0
    %2345 = vmatprep.subr.bf16.mxu0 0
    %2346 = vmatpush1.bf16.msra.mxu0 0
    %2347 = vmatprep.mubr.bf16.mxu0 0
    %2348 = vmatmul.mubr.bf16.gmra.mrb[0].mxu0 %v2225
    %v2349 = vpop.f32.mrb[0].mxu0
    %v2350 = vadd.f32 %v2297, %v2349
    %v2351 = vpop.f32.mrb[0].mxu0
    %v2352 = vadd.f32 %v2299, %v2351
    %v2353 = vpop.f32.mrb[0].mxu0
    %v2354 = vadd.f32 %v2301, %v2353
    %v2355 = vpop.f32.mrb[0].mxu0
    %v2356 = vadd.f32 %v2303, %v2355
    %2357 = vmatprep.mubr.bf16.mxu0 0
    %2358 = vmatmul.mubr.bf16.gmra.mrb[0].mxu0 %v2226
    %v2359 = vpop.f32.mrb[0].mxu0
    %v2360 = vadd.f32 %v2307, %v2359
    %v2361 = vpop.f32.mrb[0].mxu0
    %v2362 = vadd.f32 %v2309, %v2361
    %v2363 = vpop.f32.mrb[0].mxu0
    %v2364 = vadd.f32 %v2311, %v2363
    %v2365 = vpop.f32.mrb[0].mxu0
    %v2366 = vadd.f32 %v2313, %v2365
    %2367 = vdwg.mxu0
    %v2368 = vpack.c.bf16 %v2212, %v2210
    %v2369 = vpack.c.bf16 %v2216, %v2214
    %s2370 = scalar_lea.vmem [#allocation2], 256
    %v2371 = vld [vmem:[%s2370] sm:$0xff]
    %v2372 = vld [vmem:[%s2370 + $0x8] sm:$0xff]
    %v2373 = vld [vmem:[%s2370 + $0x10] sm:$0xff]
    %v2374 = vld [vmem:[%s2370 + $0x18] sm:$0xff]
    %v2375 = vld [vmem:[%s2370 + $0x20] sm:$0xff]
    %v2376 = vld [vmem:[%s2370 + $0x28] sm:$0xff]
    %v2377 = vld [vmem:[%s2370 + $0x30] sm:$0xff]
    %v2378 = vld [vmem:[%s2370 + $0x38] sm:$0xff]
    %v2379 = vld [vmem:[%s2370 + $0x40] sm:$0xff]
    %v2380 = vld [vmem:[%s2370 + $0x48] sm:$0xff]
    %v2381 = vld [vmem:[%s2370 + $0x50] sm:$0xff]
    %v2382 = vld [vmem:[%s2370 + $0x58] sm:$0xff]
    %v2383 = vld [vmem:[%s2370 + $0x60] sm:$0xff]
    %v2384 = vld [vmem:[%s2370 + $0x68] sm:$0xff]
    %v2385 = vld [vmem:[%s2370 + $0x70] sm:$0xff]
    %v2386 = vld [vmem:[%s2370 + $0x78] sm:$0xff]
    %2387 = vmatprep.subr.bf16.mxu0 %v2372
    %2388 = vmatpush1.bf16.msra.mxu0 %v2371
    %2389 = vmatprep.subr.bf16.mxu0 %v2374
    %2390 = vmatpush1.bf16.msra.mxu0 %v2373
    %2391 = vmatprep.subr.bf16.mxu0 %v2376
    %2392 = vmatpush1.bf16.msra.mxu0 %v2375
    %2393 = vmatprep.subr.bf16.mxu0 %v2378
    %2394 = vmatpush1.bf16.msra.mxu0 %v2377
    %2395 = vmatprep.subr.bf16.mxu0 %v2380
    %2396 = vmatpush1.bf16.msra.mxu0 %v2379
    %2397 = vmatprep.subr.bf16.mxu0 %v2382
    %2398 = vmatpush1.bf16.msra.mxu0 %v2381
    %2399 = vmatprep.subr.bf16.mxu0 %v2384
    %2400 = vmatpush1.bf16.msra.mxu0 %v2383
    %2401 = vmatprep.subr.bf16.mxu0 %v2386
    %2402 = vmatpush1.bf16.msra.mxu0 %v2385
    %2403 = vmatprep.subr.bf16.mxu0 0
    %2404 = vmatpush1.bf16.msra.mxu0 0
    %2405 = vmatprep.subr.bf16.mxu0 0
    %2406 = vmatpush1.bf16.msra.mxu0 0
    %2407 = vmatprep.subr.bf16.mxu0 0
    %2408 = vmatpush1.bf16.msra.mxu0 0
    %2409 = vmatprep.subr.bf16.mxu0 0
    %2410 = vmatpush1.bf16.msra.mxu0 0
    %2411 = vmatprep.subr.bf16.mxu0 0
    %2412 = vmatpush1.bf16.msra.mxu0 0
    %2413 = vmatprep.subr.bf16.mxu0 0
    %2414 = vmatpush1.bf16.msra.mxu0 0
    %2415 = vmatprep.subr.bf16.mxu0 0
    %2416 = vmatpush1.bf16.msra.mxu0 0
    %2417 = vmatprep.subr.bf16.mxu0 0
    %2418 = vmatpush1.bf16.msra.mxu0 0
    %2419 = vmatprep.mubr.bf16.mxu0 0
    %2420 = vmatmul.mubr.bf16.gmra.mrb[0].mxu0 %v2368
    %v2421 = vpop.f32.mrb[0].mxu0
    %v2422 = vadd.f32 0.0, %v2421
    %v2423 = vpop.f32.mrb[0].mxu0
    %v2424 = vadd.f32 0.0, %v2423
    %v2425 = vpop.f32.mrb[0].mxu0
    %v2426 = vadd.f32 0.0, %v2425
    %v2427 = vpop.f32.mrb[0].mxu0
    %v2428 = vadd.f32 0.0, %v2427
    %2429 = vmatprep.mubr.bf16.mxu0 0
    %2430 = vmatmul.mubr.bf16.gmra.mrb[0].mxu0 %v2369
    %v2431 = vpop.f32.mrb[0].mxu0
    %v2432 = vadd.f32 0.0, %v2431
    %v2433 = vpop.f32.mrb[0].mxu0
    %v2434 = vadd.f32 0.0, %v2433
    %v2435 = vpop.f32.mrb[0].mxu0
    %v2436 = vadd.f32 0.0, %v2435
    %v2437 = vpop.f32.mrb[0].mxu0
    %v2438 = vadd.f32 0.0, %v2437
    %2439 = vdwg.mxu0
    %v2440 = vadd.f32 %v2350, %v2422
    %v2441 = vadd.f32 %v2352, %v2424
    %v2442 = vadd.f32 %v2354, %v2426
    %v2443 = vadd.f32 %v2356, %v2428
    %v2444 = vadd.f32 %v2360, %v2432
    %v2445 = vadd.f32 %v2362, %v2434
    %v2446 = vadd.f32 %v2364, %v2436
    %v2447 = vadd.f32 %v2366, %v2438
    %v2448 = vpack.c.bf16 %v2213, %v2211
    %v2449 = vpack.c.bf16 %v2217, %v2215
    %s2450 = scalar_lea.vmem [#allocation2], 384
    %v2451 = vld [vmem:[%s2450] sm:$0xff]
    %v2452 = vld [vmem:[%s2450 + $0x8] sm:$0xff]
    %v2453 = vld [vmem:[%s2450 + $0x10] sm:$0xff]
    %v2454 = vld [vmem:[%s2450 + $0x18] sm:$0xff]
    %v2455 = vld [vmem:[%s2450 + $0x20] sm:$0xff]
    %v2456 = vld [vmem:[%s2450 + $0x28] sm:$0xff]
    %v2457 = vld [vmem:[%s2450 + $0x30] sm:$0xff]
    %v2458 = vld [vmem:[%s2450 + $0x38] sm:$0xff]
    %v2459 = vld [vmem:[%s2450 + $0x40] sm:$0xff]
    %v2460 = vld [vmem:[%s2450 + $0x48] sm:$0xff]
    %v2461 = vld [vmem:[%s2450 + $0x50] sm:$0xff]
    %v2462 = vld [vmem:[%s2450 + $0x58] sm:$0xff]
    %v2463 = vld [vmem:[%s2450 + $0x60] sm:$0xff]
    %v2464 = vld [vmem:[%s2450 + $0x68] sm:$0xff]
    %v2465 = vld [vmem:[%s2450 + $0x70] sm:$0xff]
    %v2466 = vld [vmem:[%s2450 + $0x78] sm:$0xff]
    %2467 = vmatprep.subr.bf16.mxu0 %v2452
    %2468 = vmatpush1.bf16.msra.mxu0 %v2451
    %2469 = vmatprep.subr.bf16.mxu0 %v2454
    %2470 = vmatpush1.bf16.msra.mxu0 %v2453
    %2471 = vmatprep.subr.bf16.mxu0 %v2456
    %2472 = vmatpush1.bf16.msra.mxu0 %v2455
    %2473 = vmatprep.subr.bf16.mxu0 %v2458
    %2474 = vmatpush1.bf16.msra.mxu0 %v2457
    %2475 = vmatprep.subr.bf16.mxu0 %v2460
    %2476 = vmatpush1.bf16.msra.mxu0 %v2459
    %2477 = vmatprep.subr.bf16.mxu0 %v2462
    %2478 = vmatpush1.bf16.msra.mxu0 %v2461
    %2479 = vmatprep.subr.bf16.mxu0 %v2464
    %2480 = vmatpush1.bf16.msra.mxu0 %v2463
    %2481 = vmatprep.subr.bf16.mxu0 %v2466
    %2482 = vmatpush1.bf16.msra.mxu0 %v2465
    %2483 = vmatprep.subr.bf16.mxu0 0
    %2484 = vmatpush1.bf16.msra.mxu0 0
    %2485 = vmatprep.subr.bf16.mxu0 0
    %2486 = vmatpush1.bf16.msra.mxu0 0
    %2487 = vmatprep.subr.bf16.mxu0 0
    %2488 = vmatpush1.bf16.msra.mxu0 0
    %2489 = vmatprep.subr.bf16.mxu0 0
    %2490 = vmatpush1.bf16.msra.mxu0 0
    %2491 = vmatprep.subr.bf16.mxu0 0
    %2492 = vmatpush1.bf16.msra.mxu0 0
    %2493 = vmatprep.subr.bf16.mxu0 0
    %2494 = vmatpush1.bf16.msra.mxu0 0
    %2495 = vmatprep.subr.bf16.mxu0 0
    %2496 = vmatpush1.bf16.msra.mxu0 0
    %2497 = vmatprep.subr.bf16.mxu0 0
    %2498 = vmatpush1.bf16.msra.mxu0 0
    %2499 = vmatprep.mubr.bf16.mxu0 0
    %2500 = vmatmul.mubr.bf16.gmra.mrb[0].mxu0 %v2448
    %v2501 = vpop.f32.mrb[0].mxu0
    %v2502 = vadd.f32 0.0, %v2501
    %v2503 = vpop.f32.mrb[0].mxu0
    %v2504 = vadd.f32 0.0, %v2503
    %v2505 = vpop.f32.mrb[0].mxu0
    %v2506 = vadd.f32 0.0, %v2505
    %v2507 = vpop.f32.mrb[0].mxu0
    %v2508 = vadd.f32 0.0, %v2507
    %2509 = vmatprep.mubr.bf16.mxu0 0
    %2510 = vmatmul.mubr.bf16.gmra.mrb[0].mxu0 %v2449
    %v2511 = vpop.f32.mrb[0].mxu0
    %v2512 = vadd.f32 0.0, %v2511
    %v2513 = vpop.f32.mrb[0].mxu0
    %v2514 = vadd.f32 0.0, %v2513
    %v2515 = vpop.f32.mrb[0].mxu0
    %v2516 = vadd.f32 0.0, %v2515
    %v2517 = vpop.f32.mrb[0].mxu0
    %v2518 = vadd.f32 0.0, %v2517
    %2519 = vdwg.mxu0
    %v2520 = vadd.f32 %v2440, %v2502
    %v2521 = vadd.f32 %v2441, %v2504
    %v2522 = vadd.f32 %v2442, %v2506
    %v2523 = vadd.f32 %v2443, %v2508
    %v2524 = vadd.f32 %v2444, %v2512
    %v2525 = vadd.f32 %v2445, %v2514
    %v2526 = vadd.f32 %v2446, %v2516
    %v2527 = vadd.f32 %v2447, %v2518
    %v2528 = vpack.c.bf16 %v2218, %v2216
    %s2529 = scalar_lea.vmem [#allocation2], 512
    %v2530 = vld [vmem:[%s2529] sm:$0xff]
    %v2531 = vld [vmem:[%s2529 + $0x8] sm:$0xff]
    %v2532 = vld [vmem:[%s2529 + $0x10] sm:$0xff]
    %v2533 = vld [vmem:[%s2529 + $0x18] sm:$0xff]
    %v2534 = vld [vmem:[%s2529 + $0x20] sm:$0xff]
    %v2535 = vld [vmem:[%s2529 + $0x28] sm:$0xff]
    %v2536 = vld [vmem:[%s2529 + $0x30] sm:$0xff]
    %v2537 = vld [vmem:[%s2529 + $0x38] sm:$0xff]
    %v2538 = vld [vmem:[%s2529 + $0x40] sm:$0xff]
    %v2539 = vld [vmem:[%s2529 + $0x48] sm:$0xff]
    %v2540 = vld [vmem:[%s2529 + $0x50] sm:$0xff]
    %v2541 = vld [vmem:[%s2529 + $0x58] sm:$0xff]
    %v2542 = vld [vmem:[%s2529 + $0x60] sm:$0xff]
    %v2543 = vld [vmem:[%s2529 + $0x68] sm:$0xff]
    %v2544 = vld [vmem:[%s2529 + $0x70] sm:$0xff]
    %v2545 = vld [vmem:[%s2529 + $0x78] sm:$0xff]
    %2546 = vmatprep.subr.bf16.mxu0 %v2531
    %2547 = vmatpush1.bf16.msra.mxu0 %v2530
    %2548 = vmatprep.subr.bf16.mxu0 %v2533
    %2549 = vmatpush1.bf16.msra.mxu0 %v2532
    %2550 = vmatprep.subr.bf16.mxu0 %v2535
    %2551 = vmatpush1.bf16.msra.mxu0 %v2534
    %2552 = vmatprep.subr.bf16.mxu0 %v2537
    %2553 = vmatpush1.bf16.msra.mxu0 %v2536
    %2554 = vmatprep.subr.bf16.mxu0 %v2539
    %2555 = vmatpush1.bf16.msra.mxu0 %v2538
    %2556 = vmatprep.subr.bf16.mxu0 %v2541
    %2557 = vmatpush1.bf16.msra.mxu0 %v2540
    %2558 = vmatprep.subr.bf16.mxu0 %v2543
    %2559 = vmatpush1.bf16.msra.mxu0 %v2542
    %2560 = vmatprep.subr.bf16.mxu0 %v2545
    %2561 = vmatpush1.bf16.msra.mxu0 %v2544
    %2562 = vmatprep.subr.bf16.mxu0 0
    %2563 = vmatpush1.bf16.msra.mxu0 0
    %2564 = vmatprep.subr.bf16.mxu0 0
    %2565 = vmatpush1.bf16.msra.mxu0 0
    %2566 = vmatprep.subr.bf16.mxu0 0
    %2567 = vmatpush1.bf16.msra.mxu0 0
    %2568 = vmatprep.subr.bf16.mxu0 0
    %2569 = vmatpush1.bf16.msra.mxu0 0
    %2570 = vmatprep.subr.bf16.mxu0 0
    %2571 = vmatpush1.bf16.msra.mxu0 0
    %2572 = vmatprep.subr.bf16.mxu0 0
    %2573 = vmatpush1.bf16.msra.mxu0 0
    %2574 = vmatprep.subr.bf16.mxu0 0
    %2575 = vmatpush1.bf16.msra.mxu0 0
    %2576 = vmatprep.subr.bf16.mxu0 0
    %2577 = vmatpush1.bf16.msra.mxu0 0
    %2578 = vmatprep.mubr.bf16.mxu0 0
    %2579 = vmatmul.mubr.bf16.gmra.mrb[0].mxu0 %v2226
    %v2580 = vpop.f32.mrb[0].mxu0
    %v2581 = vadd.f32 0.0, %v2580
    %v2582 = vpop.f32.mrb[0].mxu0
    %v2583 = vadd.f32 0.0, %v2582
    %v2584 = vpop.f32.mrb[0].mxu0
    %v2585 = vadd.f32 0.0, %v2584
    %v2586 = vpop.f32.mrb[0].mxu0
    %v2587 = vadd.f32 0.0, %v2586
    %2588 = vmatprep.mubr.bf16.mxu0 0
    %2589 = vmatmul.mubr.bf16.gmra.mrb[0].mxu0 %v2528
    %v2590 = vpop.f32.mrb[0].mxu0
    %v2591 = vadd.f32 0.0, %v2590
    %v2592 = vpop.f32.mrb[0].mxu0
    %v2593 = vadd.f32 0.0, %v2592
    %v2594 = vpop.f32.mrb[0].mxu0
    %v2595 = vadd.f32 0.0, %v2594
    %v2596 = vpop.f32.mrb[0].mxu0
    %v2597 = vadd.f32 0.0, %v2596
    %2598 = vdwg.mxu0
    %v2599 = vadd.f32 %v2520, %v2581
    %v2600 = vadd.f32 %v2521, %v2583
    %v2601 = vadd.f32 %v2522, %v2585
    %v2602 = vadd.f32 %v2523, %v2587
    %v2603 = vadd.f32 %v2524, %v2591
    %v2604 = vadd.f32 %v2525, %v2593
    %v2605 = vadd.f32 %v2526, %v2595
    %v2606 = vadd.f32 %v2527, %v2597
    %v2607 = vpack.c.bf16 %v2219, %v2217
    %s2608 = scalar_lea.vmem [#allocation2], 640
    %v2609 = vld [vmem:[%s2608] sm:$0xff]
    %v2610 = vld [vmem:[%s2608 + $0x8] sm:$0xff]
    %v2611 = vld [vmem:[%s2608 + $0x10] sm:$0xff]
    %v2612 = vld [vmem:[%s2608 + $0x18] sm:$0xff]
    %v2613 = vld [vmem:[%s2608 + $0x20] sm:$0xff]
    %v2614 = vld [vmem:[%s2608 + $0x28] sm:$0xff]
    %v2615 = vld [vmem:[%s2608 + $0x30] sm:$0xff]
    %v2616 = vld [vmem:[%s2608 + $0x38] sm:$0xff]
    %v2617 = vld [vmem:[%s2608 + $0x40] sm:$0xff]
    %v2618 = vld [vmem:[%s2608 + $0x48] sm:$0xff]
    %v2619 = vld [vmem:[%s2608 + $0x50] sm:$0xff]
    %v2620 = vld [vmem:[%s2608 + $0x58] sm:$0xff]
    %v2621 = vld [vmem:[%s2608 + $0x60] sm:$0xff]
    %v2622 = vld [vmem:[%s2608 + $0x68] sm:$0xff]
    %v2623 = vld [vmem:[%s2608 + $0x70] sm:$0xff]
    %v2624 = vld [vmem:[%s2608 + $0x78] sm:$0xff]
    %2625 = vmatprep.subr.bf16.mxu0 %v2610
    %2626 = vmatpush1.bf16.msra.mxu0 %v2609
    %2627 = vmatprep.subr.bf16.mxu0 %v2612
    %2628 = vmatpush1.bf16.msra.mxu0 %v2611
    %2629 = vmatprep.subr.bf16.mxu0 %v2614
    %2630 = vmatpush1.bf16.msra.mxu0 %v2613
    %2631 = vmatprep.subr.bf16.mxu0 %v2616
    %2632 = vmatpush1.bf16.msra.mxu0 %v2615
    %2633 = vmatprep.subr.bf16.mxu0 %v2618
    %2634 = vmatpush1.bf16.msra.mxu0 %v2617
    %2635 = vmatprep.subr.bf16.mxu0 %v2620
    %2636 = vmatpush1.bf16.msra.mxu0 %v2619
    %2637 = vmatprep.subr.bf16.mxu0 %v2622
    %2638 = vmatpush1.bf16.msra.mxu0 %v2621
    %2639 = vmatprep.subr.bf16.mxu0 %v2624
    %2640 = vmatpush1.bf16.msra.mxu0 %v2623
    %2641 = vmatprep.subr.bf16.mxu0 0
    %2642 = vmatpush1.bf16.msra.mxu0 0
    %2643 = vmatprep.subr.bf16.mxu0 0
    %2644 = vmatpush1.bf16.msra.mxu0 0
    %2645 = vmatprep.subr.bf16.mxu0 0
    %2646 = vmatpush1.bf16.msra.mxu0 0
    %2647 = vmatprep.subr.bf16.mxu0 0
    %2648 = vmatpush1.bf16.msra.mxu0 0
    %2649 = vmatprep.subr.bf16.mxu0 0
    %2650 = vmatpush1.bf16.msra.mxu0 0
    %2651 = vmatprep.subr.bf16.mxu0 0
    %2652 = vmatpush1.bf16.msra.mxu0 0
    %2653 = vmatprep.subr.bf16.mxu0 0
    %2654 = vmatpush1.bf16.msra.mxu0 0
    %2655 = vmatprep.subr.bf16.mxu0 0
    %2656 = vmatpush1.bf16.msra.mxu0 0
    %2657 = vmatprep.mubr.bf16.mxu0 0
    %2658 = vmatmul.mubr.bf16.gmra.mrb[0].mxu0 %v2244
    %v2659 = vpop.f32.mrb[0].mxu0
    %v2660 = vadd.f32 0.0, %v2659
    %v2661 = vpop.f32.mrb[0].mxu0
    %v2662 = vadd.f32 0.0, %v2661
    %v2663 = vpop.f32.mrb[0].mxu0
    %v2664 = vadd.f32 0.0, %v2663
    %v2665 = vpop.f32.mrb[0].mxu0
    %v2666 = vadd.f32 0.0, %v2665
    %2667 = vmatprep.mubr.bf16.mxu0 0
    %2668 = vmatmul.mubr.bf16.gmra.mrb[0].mxu0 %v2607
    %v2669 = vpop.f32.mrb[0].mxu0
    %v2670 = vadd.f32 0.0, %v2669
    %v2671 = vpop.f32.mrb[0].mxu0
    %v2672 = vadd.f32 0.0, %v2671
    %v2673 = vpop.f32.mrb[0].mxu0
    %v2674 = vadd.f32 0.0, %v2673
    %v2675 = vpop.f32.mrb[0].mxu0
    %v2676 = vadd.f32 0.0, %v2675
    %2677 = vdwg.mxu0
    %v2678 = vadd.f32 %v2599, %v2660
    %v2679 = vadd.f32 %v2600, %v2662
    %v2680 = vadd.f32 %v2601, %v2664
    %v2681 = vadd.f32 %v2602, %v2666
    %v2682 = vadd.f32 %v2603, %v2670
    %v2683 = vadd.f32 %v2604, %v2672
    %v2684 = vadd.f32 %v2605, %v2674
    %v2685 = vadd.f32 %v2606, %v2676
    %v2686 = vld [vmem:[%s3] sm:$0x3]
    %v2688 = vlaneseq
    %v2689 = vshrl.u32 %v2688, 7
    %v2690 = vsub.s32 0, %v2689
    %v2691 = vrot.slane %v2686, %v2690
    %v2692 = vlaneseq
    %v2693 = vshrl.u32 %v2692, 7
    %v2694 = vsub.s32 1, %v2693
    %v2695 = vrot.slane %v2686, %v2694
    %v2698 = vadd.f32 %v2678, %v2691
    %v2699 = vadd.f32 %v2679, %v2695
    %v2700 = vadd.f32 %v2680, %v2691
    %v2701 = vadd.f32 %v2681, %v2695
    %v2702 = vadd.f32 %v2682, %v2691
    %v2703 = vadd.f32 %v2683, %v2695
    %v2704 = vadd.f32 %v2684, %v2691
    %v2705 = vadd.f32 %v2685, %v2695
    %v2706 = vmax.f32 %v2698, %v2699
    %v2707 = vmax.f32 %v2700, %v2701
    %v2708 = vmax.f32 %v2702, %v2703
    %v2709 = vmax.f32 %v2704, %v2705
    %v2710 = vmax.f32 %v2706, 0.0
    %v2711 = vmax.f32 %v2707, 0.0
    %v2712 = vmax.f32 %v2708, 0.0
    %v2713 = vmax.f32 %v2709, 0.0
    %2718 = vrot.lane.b32.xlu0 %v2710, 64
    %v2719 = vpop.permute.xlu0 %2718
    %2720 = vrot.lane.b32.xlu0 %v2711, 64
    %v2721 = vpop.permute.xlu0 %2720
    %2722 = vrot.lane.b32.xlu0 %v2712, 64
    %v2723 = vpop.permute.xlu0 %2722
    %2724 = vrot.lane.b32.xlu0 %v2713, 64
    %v2725 = vpop.permute.xlu0 %2724
    %v2730 = vmax.f32 %v2710, %v2719
    %v2731 = vmax.f32 %v2711, %v2721
    %v2732 = vmax.f32 %v2712, %v2723
    %v2733 = vmax.f32 %v2713, %v2725
    %s2734 = smul.u32 4, 4
    %s2735 = smul.u32 %s2734, 8
    %s2736 = smul.u32 %s2735, 1
    %s2737 = sshll.u32 %s2736, 4
    %2738 = dma.done %s861, %s2737
    %v2739 = vpack.c.bf16 %v2730, %v2730
    %v2740 = vld [vmem:[#allocation3] sm:$0xff]
    %v2741 = vld [vmem:[#allocation3 + $0x8] sm:$0xff]
    %v2742 = vld [vmem:[#allocation3 + $0x10] sm:$0xff]
    %v2743 = vld [vmem:[#allocation3 + $0x18] sm:$0xff]
    %v2744 = vpack.c.bf16 %v2731, %v2731
    %s2745 = scalar_lea.vmem [#allocation3], 32
    %v2746 = vld [vmem:[%s2745] sm:$0xff]
    %v2747 = vld [vmem:[%s2745 + $0x8] sm:$0xff]
    %v2748 = vld [vmem:[%s2745 + $0x10] sm:$0xff]
    %v2749 = vld [vmem:[%s2745 + $0x18] sm:$0xff]
    %vm2750 = vcmask 523264
    %v2752 = vsel %vm2750, %v2744, 0
    %2754 = vmatprep.subr.bf16.mxu0 0
    %2755 = vmatpush1.bf16.msra.mxu0 %v2746
    %2756 = vmatprep.subr.bf16.mxu0 0
    %2757 = vmatpush1.bf16.msra.mxu0 %v2747
    %2758 = vmatprep.subr.bf16.mxu0 0
    %2759 = vmatpush1.bf16.msra.mxu0 %v2748
    %2760 = vmatprep.subr.bf16.mxu0 0
    %2761 = vmatpush1.bf16.msra.mxu0 %v2749
    %2762 = vmatprep.subr.bf16.mxu0 0
    %2763 = vmatpush1.bf16.msra.mxu0 0
    %2764 = vmatprep.subr.bf16.mxu0 0
    %2765 = vmatpush1.bf16.msra.mxu0 0
    %2766 = vmatprep.subr.bf16.mxu0 0
    %2767 = vmatpush1.bf16.msra.mxu0 0
    %2768 = vmatprep.subr.bf16.mxu0 0
    %2769 = vmatpush1.bf16.msra.mxu0 0
    %2770 = vmatprep.subr.bf16.mxu0 0
    %2771 = vmatpush1.bf16.msra.mxu0 0
    %2772 = vmatprep.subr.bf16.mxu0 0
    %2773 = vmatpush1.bf16.msra.mxu0 0
    %2774 = vmatprep.subr.bf16.mxu0 0
    %2775 = vmatpush1.bf16.msra.mxu0 0
    %2776 = vmatprep.subr.bf16.mxu0 0
    %2777 = vmatpush1.bf16.msra.mxu0 0
    %2778 = vmatprep.subr.bf16.mxu0 0
    %2779 = vmatpush1.bf16.msra.mxu0 0
    %2780 = vmatprep.subr.bf16.mxu0 0
    %2781 = vmatpush1.bf16.msra.mxu0 0
    %2782 = vmatprep.subr.bf16.mxu0 0
    %2783 = vmatpush1.bf16.msra.mxu0 0
    %2784 = vmatprep.subr.bf16.mxu0 0
    %2785 = vmatpush1.bf16.msra.mxu0 0
    %2786 = vmatprep.mubr.bf16.mxu0 0
    %2787 = vmatmul.mubr.bf16.gmra.mrb[0].mxu0 %v2752
    %v2788 = vpop.f32.mrb[0].mxu0
    %v2789 = vadd.f32 0.0, %v2788
    %v2790 = vpop.f32.mrb[0].mxu0
    %v2791 = vpop.f32.mrb[0].mxu0
    %v2792 = vpop.f32.mrb[0].mxu0
    %2793 = vdwg.mxu0
    %v2795 = vsel %vm2750, %v2739, 0
    %2797 = vmatprep.subr.bf16.mxu0 0
    %2798 = vmatpush1.bf16.msra.mxu0 %v2740
    %2799 = vmatprep.subr.bf16.mxu0 0
    %2800 = vmatpush1.bf16.msra.mxu0 %v2741
    %2801 = vmatprep.subr.bf16.mxu0 0
    %2802 = vmatpush1.bf16.msra.mxu0 %v2742
    %2803 = vmatprep.subr.bf16.mxu0 0
    %2804 = vmatpush1.bf16.msra.mxu0 %v2743
    %2805 = vmatprep.subr.bf16.mxu0 0
    %2806 = vmatpush1.bf16.msra.mxu0 0
    %2807 = vmatprep.subr.bf16.mxu0 0
    %2808 = vmatpush1.bf16.msra.mxu0 0
    %2809 = vmatprep.subr.bf16.mxu0 0
    %2810 = vmatpush1.bf16.msra.mxu0 0
    %2811 = vmatprep.subr.bf16.mxu0 0
    %2812 = vmatpush1.bf16.msra.mxu0 0
    %2813 = vmatprep.subr.bf16.mxu0 0
    %2814 = vmatpush1.bf16.msra.mxu0 0
    %2815 = vmatprep.subr.bf16.mxu0 0
    %2816 = vmatpush1.bf16.msra.mxu0 0
    %2817 = vmatprep.subr.bf16.mxu0 0
    %2818 = vmatpush1.bf16.msra.mxu0 0
    %2819 = vmatprep.subr.bf16.mxu0 0
    %2820 = vmatpush1.bf16.msra.mxu0 0
    %2821 = vmatprep.subr.bf16.mxu0 0
    %2822 = vmatpush1.bf16.msra.mxu0 0
    %2823 = vmatprep.subr.bf16.mxu0 0
    %2824 = vmatpush1.bf16.msra.mxu0 0
    %2825 = vmatprep.subr.bf16.mxu0 0
    %2826 = vmatpush1.bf16.msra.mxu0 0
    %2827 = vmatprep.subr.bf16.mxu0 0
    %2828 = vmatpush1.bf16.msra.mxu0 0
    %2829 = vmatprep.mubr.bf16.mxu0 0
    %2830 = vmatmul.mubr.bf16.gmra.mrb[0].mxu0 %v2795
    %v2831 = vpop.f32.mrb[0].mxu0
    %v2832 = vadd.f32 %v2789, %v2831
    %v2833 = vpop.f32.mrb[0].mxu0
    %v2834 = vpop.f32.mrb[0].mxu0
    %v2835 = vpop.f32.mrb[0].mxu0
    %2836 = vdwg.mxu0
    %v2837 = vpack.c.bf16 %v2732, %v2732
    %s2838 = scalar_lea.vmem [#allocation3], 64
    %v2839 = vld [vmem:[%s2838] sm:$0xff]
    %v2840 = vld [vmem:[%s2838 + $0x8] sm:$0xff]
    %v2841 = vld [vmem:[%s2838 + $0x10] sm:$0xff]
    %v2842 = vld [vmem:[%s2838 + $0x18] sm:$0xff]
    %v2844 = vsel %vm2750, %v2837, 0
    %2846 = vmatprep.subr.bf16.mxu0 0
    %2847 = vmatpush1.bf16.msra.mxu0 %v2839
    %2848 = vmatprep.subr.bf16.mxu0 0
    %2849 = vmatpush1.bf16.msra.mxu0 %v2840
    %2850 = vmatprep.subr.bf16.mxu0 0
    %2851 = vmatpush1.bf16.msra.mxu0 %v2841
    %2852 = vmatprep.subr.bf16.mxu0 0
    %2853 = vmatpush1.bf16.msra.mxu0 %v2842
    %2854 = vmatprep.subr.bf16.mxu0 0
    %2855 = vmatpush1.bf16.msra.mxu0 0
    %2856 = vmatprep.subr.bf16.mxu0 0
    %2857 = vmatpush1.bf16.msra.mxu0 0
    %2858 = vmatprep.subr.bf16.mxu0 0
    %2859 = vmatpush1.bf16.msra.mxu0 0
    %2860 = vmatprep.subr.bf16.mxu0 0
    %2861 = vmatpush1.bf16.msra.mxu0 0
    %2862 = vmatprep.subr.bf16.mxu0 0
    %2863 = vmatpush1.bf16.msra.mxu0 0
    %2864 = vmatprep.subr.bf16.mxu0 0
    %2865 = vmatpush1.bf16.msra.mxu0 0
    %2866 = vmatprep.subr.bf16.mxu0 0
    %2867 = vmatpush1.bf16.msra.mxu0 0
    %2868 = vmatprep.subr.bf16.mxu0 0
    %2869 = vmatpush1.bf16.msra.mxu0 0
    %2870 = vmatprep.subr.bf16.mxu0 0
    %2871 = vmatpush1.bf16.msra.mxu0 0
    %2872 = vmatprep.subr.bf16.mxu0 0
    %2873 = vmatpush1.bf16.msra.mxu0 0
    %2874 = vmatprep.subr.bf16.mxu0 0
    %2875 = vmatpush1.bf16.msra.mxu0 0
    %2876 = vmatprep.subr.bf16.mxu0 0
    %2877 = vmatpush1.bf16.msra.mxu0 0
    %2878 = vmatprep.mubr.bf16.mxu0 0
    %2879 = vmatmul.mubr.bf16.gmra.mrb[0].mxu0 %v2844
    %v2880 = vpop.f32.mrb[0].mxu0
    %v2881 = vadd.f32 0.0, %v2880
    %v2882 = vpop.f32.mrb[0].mxu0
    %v2883 = vpop.f32.mrb[0].mxu0
    %v2884 = vpop.f32.mrb[0].mxu0
    %2885 = vdwg.mxu0
    %v2886 = vadd.f32 %v2832, %v2881
    %v2887 = vpack.c.bf16 %v2733, %v2733
    %s2888 = scalar_lea.vmem [#allocation3], 96
    %v2889 = vld [vmem:[%s2888] sm:$0xff]
    %v2890 = vld [vmem:[%s2888 + $0x8] sm:$0xff]
    %v2891 = vld [vmem:[%s2888 + $0x10] sm:$0xff]
    %v2892 = vld [vmem:[%s2888 + $0x18] sm:$0xff]
    %v2894 = vsel %vm2750, %v2887, 0
    %2896 = vmatprep.subr.bf16.mxu0 0
    %2897 = vmatpush1.bf16.msra.mxu0 %v2889
    %2898 = vmatprep.subr.bf16.mxu0 0
    %2899 = vmatpush1.bf16.msra.mxu0 %v2890
    %2900 = vmatprep.subr.bf16.mxu0 0
    %2901 = vmatpush1.bf16.msra.mxu0 %v2891
    %2902 = vmatprep.subr.bf16.mxu0 0
    %2903 = vmatpush1.bf16.msra.mxu0 %v2892
    %2904 = vmatprep.subr.bf16.mxu0 0
    %2905 = vmatpush1.bf16.msra.mxu0 0
    %2906 = vmatprep.subr.bf16.mxu0 0
    %2907 = vmatpush1.bf16.msra.mxu0 0
    %2908 = vmatprep.subr.bf16.mxu0 0
    %2909 = vmatpush1.bf16.msra.mxu0 0
    %2910 = vmatprep.subr.bf16.mxu0 0
    %2911 = vmatpush1.bf16.msra.mxu0 0
    %2912 = vmatprep.subr.bf16.mxu0 0
    %2913 = vmatpush1.bf16.msra.mxu0 0
    %2914 = vmatprep.subr.bf16.mxu0 0
    %2915 = vmatpush1.bf16.msra.mxu0 0
    %2916 = vmatprep.subr.bf16.mxu0 0
    %2917 = vmatpush1.bf16.msra.mxu0 0
    %2918 = vmatprep.subr.bf16.mxu0 0
    %2919 = vmatpush1.bf16.msra.mxu0 0
    %2920 = vmatprep.subr.bf16.mxu0 0
    %2921 = vmatpush1.bf16.msra.mxu0 0
    %2922 = vmatprep.subr.bf16.mxu0 0
    %2923 = vmatpush1.bf16.msra.mxu0 0
    %2924 = vmatprep.subr.bf16.mxu0 0
    %2925 = vmatpush1.bf16.msra.mxu0 0
    %2926 = vmatprep.subr.bf16.mxu0 0
    %2927 = vmatpush1.bf16.msra.mxu0 0
    %2928 = vmatprep.mubr.bf16.mxu0 0
    %2929 = vmatmul.mubr.bf16.gmra.mrb[0].mxu0 %v2894
    %v2930 = vpop.f32.mrb[0].mxu0
    %v2931 = vadd.f32 0.0, %v2930
    %v2932 = vpop.f32.mrb[0].mxu0
    %v2933 = vpop.f32.mrb[0].mxu0
    %v2934 = vpop.f32.mrb[0].mxu0
    %2935 = vdwg.mxu0
    %v2936 = vadd.f32 %v2886, %v2931
    %v2937 = vld [vmem:[%s4] sm:$0x1]
    %v2939 = vlaneseq
    %v2940 = vshrl.u32 %v2939, 7
    %v2941 = vsub.s32 0, %v2940
    %v2942 = vrot.slane %v2937, %v2941
    %v2944 = vadd.f32 %v2936, %v2942
    %v2945 = vmax.f32 %v2944, 0.0
    %s2946 = smul.u32 4, 16
    %s2947 = smul.u32 %s2946, 1
    %s2948 = sshll.u32 %s2947, 4
    %2949 = dma.done %s873, %s2948
    %v2950 = vpack.c.bf16 %v2945, %v2945
    %v2951 = vld [vmem:[#allocation4] sm:$0xff]
    %v2952 = vld [vmem:[#allocation4 + $0x8] sm:$0xff]
    %v2953 = vld [vmem:[#allocation4 + $0x10] sm:$0xff]
    %v2954 = vld [vmem:[#allocation4 + $0x18] sm:$0xff]
    %v2955 = vld [vmem:[#allocation4 + $0x20] sm:$0xff]
    %v2956 = vld [vmem:[#allocation4 + $0x28] sm:$0xff]
    %v2957 = vld [vmem:[#allocation4 + $0x30] sm:$0xff]
    %v2958 = vld [vmem:[#allocation4 + $0x38] sm:$0xff]
    %v2959 = vld [vmem:[%s5] sm:$0x1]
    %v2961 = vlaneseq
    %v2962 = vshrl.u32 %v2961, 7
    %v2963 = vsub.s32 0, %v2962
    %v2964 = vrot.slane %v2959, %v2963
    %2966 = vmatprep.subr.bf16.mxu0 0
    %2967 = vmatpush1.bf16.msra.mxu0 %v2951
    %2968 = vmatprep.subr.bf16.mxu0 0
    %2969 = vmatpush1.bf16.msra.mxu0 %v2952
    %2970 = vmatprep.subr.bf16.mxu0 0
    %2971 = vmatpush1.bf16.msra.mxu0 %v2953
    %2972 = vmatprep.subr.bf16.mxu0 0
    %2973 = vmatpush1.bf16.msra.mxu0 %v2954
    %2974 = vmatprep.subr.bf16.mxu0 0
    %2975 = vmatpush1.bf16.msra.mxu0 %v2955
    %2976 = vmatprep.subr.bf16.mxu0 0
    %2977 = vmatpush1.bf16.msra.mxu0 %v2956
    %2978 = vmatprep.subr.bf16.mxu0 0
    %2979 = vmatpush1.bf16.msra.mxu0 %v2957
    %2980 = vmatprep.subr.bf16.mxu0 0
    %2981 = vmatpush1.bf16.msra.mxu0 %v2958
    %2982 = vmatprep.subr.bf16.mxu0 0
    %2983 = vmatpush1.bf16.msra.mxu0 0
    %2984 = vmatprep.subr.bf16.mxu0 0
    %2985 = vmatpush1.bf16.msra.mxu0 0
    %2986 = vmatprep.subr.bf16.mxu0 0
    %2987 = vmatpush1.bf16.msra.mxu0 0
    %2988 = vmatprep.subr.bf16.mxu0 0
    %2989 = vmatpush1.bf16.msra.mxu0 0
    %2990 = vmatprep.subr.bf16.mxu0 0
    %2991 = vmatpush1.bf16.msra.mxu0 0
    %2992 = vmatprep.subr.bf16.mxu0 0
    %2993 = vmatpush1.bf16.msra.mxu0 0
    %2994 = vmatprep.subr.bf16.mxu0 0
    %2995 = vmatpush1.bf16.msra.mxu0 0
    %2996 = vmatprep.subr.bf16.mxu0 0
    %2997 = vmatpush1.bf16.msra.mxu0 0
    %2998 = vmatprep.mubr.bf16.mxu0 0
    %2999 = vmatmul.mubr.bf16.gmra.mrb[0].mxu0 %v2950
    %v3000 = vpop.f32.mrb[0].mxu0
    %v3001 = vadd.f32 %v2964, %v3000
    %v3002 = vpop.f32.mrb[0].mxu0
    %v3003 = vpop.f32.mrb[0].mxu0
    %v3004 = vpop.f32.mrb[0].mxu0
    %3005 = vdwg.mxu0
    %v3006 = vmax.f32 %v3001, 0.0
    %s3007 = sshll.u32 %s2947, 4
    %3008 = dma.done %s930, %s3007
    %v3009 = vpack.c.bf16 %v3006, %v3006
    %v3010 = vld [vmem:[#allocation5] sm:$0xff]
    %v3011 = vld [vmem:[#allocation5 + $0x8] sm:$0xff]
    %v3012 = vld [vmem:[#allocation5 + $0x10] sm:$0xff]
    %v3013 = vld [vmem:[#allocation5 + $0x18] sm:$0xff]
    %v3014 = vld [vmem:[#allocation5 + $0x20] sm:$0xff]
    %v3015 = vld [vmem:[#allocation5 + $0x28] sm:$0xff]
    %v3016 = vld [vmem:[#allocation5 + $0x30] sm:$0xff]
    %v3017 = vld [vmem:[#allocation5 + $0x38] sm:$0xff]
    %v3018 = vld [vmem:[%s6] sm:$0x1]
    %v3020 = vlaneseq
    %v3021 = vshrl.u32 %v3020, 7
    %v3022 = vsub.s32 0, %v3021
    %v3023 = vrot.slane %v3018, %v3022
    %3025 = vmatprep.subr.bf16.mxu0 0
    %3026 = vmatpush1.bf16.msra.mxu0 %v3010
    %3027 = vmatprep.subr.bf16.mxu0 0
    %3028 = vmatpush1.bf16.msra.mxu0 %v3011
    %3029 = vmatprep.subr.bf16.mxu0 0
    %3030 = vmatpush1.bf16.msra.mxu0 %v3012
    %3031 = vmatprep.subr.bf16.mxu0 0
    %3032 = vmatpush1.bf16.msra.mxu0 %v3013
    %3033 = vmatprep.subr.bf16.mxu0 0
    %3034 = vmatpush1.bf16.msra.mxu0 %v3014
    %3035 = vmatprep.subr.bf16.mxu0 0
    %3036 = vmatpush1.bf16.msra.mxu0 %v3015
    %3037 = vmatprep.subr.bf16.mxu0 0
    %3038 = vmatpush1.bf16.msra.mxu0 %v3016
    %3039 = vmatprep.subr.bf16.mxu0 0
    %3040 = vmatpush1.bf16.msra.mxu0 %v3017
    %3041 = vmatprep.subr.bf16.mxu0 0
    %3042 = vmatpush1.bf16.msra.mxu0 0
    %3043 = vmatprep.subr.bf16.mxu0 0
    %3044 = vmatpush1.bf16.msra.mxu0 0
    %3045 = vmatprep.subr.bf16.mxu0 0
    %3046 = vmatpush1.bf16.msra.mxu0 0
    %3047 = vmatprep.subr.bf16.mxu0 0
    %3048 = vmatpush1.bf16.msra.mxu0 0
    %3049 = vmatprep.subr.bf16.mxu0 0
    %3050 = vmatpush1.bf16.msra.mxu0 0
    %3051 = vmatprep.subr.bf16.mxu0 0
    %3052 = vmatpush1.bf16.msra.mxu0 0
    %3053 = vmatprep.subr.bf16.mxu0 0
    %3054 = vmatpush1.bf16.msra.mxu0 0
    %3055 = vmatprep.subr.bf16.mxu0 0
    %3056 = vmatpush1.bf16.msra.mxu0 0
    %3057 = vmatprep.mubr.bf16.mxu0 0
    %3058 = vmatmul.mubr.bf16.gmra.mrb[0].mxu0 %v3009
    %v3059 = vpop.f32.mrb[0].mxu0
    %v3060 = vadd.f32 %v3023, %v3059
    %v3061 = vpop.f32.mrb[0].mxu0
    %v3062 = vpop.f32.mrb[0].mxu0
    %v3063 = vpop.f32.mrb[0].mxu0
    %3064 = vdwg.mxu0
    %3065 = vst [vmem:[%s11] sm:$0xff] %v3060
    // Predicated region
    $region113: #{netto_forward.1} parent=1 // pred_check
      _
    $region114: #{netto_forward.1} parent=1 // pred_check_branch
      %3067 = sbr.rel (0) target = $region116
    $region115: #{netto_forward.1} parent=1 // pred_region
      _
    $region116: #{netto_forward.1} parent=1 // pred_fallthru
      _
    // Predicated region
    $region117: #{netto_forward.1} parent=1 // pred_check
      _
    $region118: #{netto_forward.1} parent=1 // pred_check_branch
      %3069 = sbr.rel (0) target = $region120
    $region119: #{netto_forward.1} parent=1 // pred_region
      _
    $region120: #{netto_forward.1} parent=1 // pred_fallthru
      _
    %3070 = vsyncpa [#allocation8], 1
  %3071 = vsyncmov [#allocation6]
  %s3072 = vpop.sfrf %3071
  %p3073 = scmp.eq.s32.totalorder %s3072, 0
  %p3074 = pneg %p3073
  %3076 = shalt.err (%p3074)
  %s3077 = scalar_lea.sflag [#allocation6], 1
  %3078 = vsyncmov %s3077
  %s3079 = vpop.sfrf %3078
  %p3080 = scmp.eq.s32.totalorder %s3079, 0
  %p3081 = pneg %p3080
  %3083 = shalt.err (%p3081)
  %s3084 = scalar_lea.sflag [#allocation6], 2
  %3085 = vsyncmov %s3084
  %s3086 = vpop.sfrf %3085
  %p3087 = scmp.eq.s32.totalorder %s3086, 0
  %p3088 = pneg %p3087
  %3090 = shalt.err (%p3088)
  %s3091 = scalar_lea.sflag [#allocation6], 3
  %3092 = vsyncmov %s3091
  %s3093 = vpop.sfrf %3092
  %p3094 = scmp.eq.s32.totalorder %s3093, 0
  %p3095 = pneg %p3094
  %3097 = shalt.err (%p3095)

</llo_original>
